<compile_context>
chip_gen: v6e
topology: v6e:2x2x1
jax: 0.10.0
libtpu: 0.0.40
codegen_flags: <defaults>
</compile_context>

<pallas_src>
import functools

import jax
import jax.numpy as jnp
from jax import lax
from jax.experimental import pallas as pl
from jax.experimental.pallas import tpu as pltpu

SLOPE = 0.01          # leaky_relu negative slope
DROP = 0.2            # dropout probability (F.dropout training-mode semantics)
KEEP = 1.0 - DROP
INV_KEEP = 1.0 / KEEP
KEEP_THRESH_24 = int(round(KEEP * (1 << 24)))   # integer dropout threshold on 24 random bits
TILE_B = 256          # requested batch rows per grid step (256-wide MXU on v6e/v7x)
LANE = 128


def _round_up(n, m):
    return ((n + m - 1) // m) * m


def _i32(v):
    """Python int -> int32 constant with two's-complement wraparound."""
    v &= 0xFFFFFFFF
    return jnp.int32(v - (1 << 32) if v >= (1 << 31) else v)


def _stable_sigmoid(x):
    e = jnp.exp(-jnp.abs(x))            # EUP
    return jnp.where(x >= 0.0, 1.0 / (1.0 + e), e / (1.0 + e))


# --------------------------------------------------------------------------- kernel


def _discriminator_kernel(seed_ref, x_ref,
                          w1_ref, b1_ref, w2_ref, b2_ref, w3_ref, b3_ref,
                          w4_ref, b4_ref, w5_ref, b5_ref,
                          out_ref, *, training):
    """One batch tile; all (bf16, lane-padded) weights/biases VMEM-resident."""
    tile = pl.program_id(0)
    seed = seed_ref[0]

    def _keep_mask(shape, layer):
        # Counter-based PRNG on the VPU (platform-agnostic; deterministic per
        # (seed, tile, layer, row, col)).  Low 24 bits vs. integer threshold.
        rows = lax.broadcasted_iota(jnp.int32, shape, 0)
        cols = lax.broadcasted_iota(jnp.int32, shape, 1)
        h = seed ^ _i32(layer * 0x632BE59B) ^ (tile * _i32(0x1B873593))
        h = h + rows * _i32(0x2545F491) + cols * _i32(0x27D4EB2F)
        h = h ^ (h >> 16)
        h = h * _i32(0x2C1B3C6D)
        h = h ^ (h >> 13)
        h = h * _i32(0x297A2D39)
        h = h ^ (h >> 16)
        return (h & _i32(0x00FFFFFF)) < jnp.int32(KEEP_THRESH_24)

    def _hidden(h_bf16, w_ref, b_ref, layer):
        z = jnp.dot(h_bf16, w_ref[...], preferred_element_type=jnp.float32)  # MXU
        z = z + b_ref[...]                                                   # f32 bias (VPU)
        z = jnp.where(z >= 0.0, z, SLOPE * z)                                # leaky_relu
        if training:
            z = jnp.where(_keep_mask(z.shape, layer), z * INV_KEEP, 0.0)     # dropout
        return z.astype(jnp.bfloat16)                                        # bf16 only at MXU input

    h = x_ref[...].astype(jnp.bfloat16)          # f32 tile -> bf16 on the VPU
    h = _hidden(h, w1_ref, b1_ref, 1)
    h = _hidden(h, w2_ref, b2_ref, 2)
    h = _hidden(h, w3_ref, b3_ref, 3)
    h = _hidden(h, w4_ref, b4_ref, 4)

    # fc5: (TILE_B, 128) logits (only column 0 is real); pack column 0 into a
    # lane-dense (1, TILE_B) row via an XLU transpose so the HBM writeback is tiny.
    logits = jnp.dot(h, w5_ref[...], preferred_element_type=jnp.float32) + b5_ref[...]
    row = jnp.transpose(logits, (1, 0))[:1, :]           # (1, TILE_B)
    out_ref[...] = _stable_sigmoid(row).reshape(out_ref.shape)


# --------------------------------------------------------------------------- wrapper


def prepare_params(params):
    """One-time, hoisted weight prep: bf16 cast + zero-pad every hidden width to a
    multiple of 128 lanes.  Padded weights/biases are zero, so padded activations
    stay exactly 0 through leaky_relu/dropout and the math is unchanged."""
    prepared = []
    prev_pad = params[0][0].shape[0]                    # input dim (not padded)
    for w, b in params:
        din, dout = w.shape
        dout_pad = _round_up(dout, LANE)
        wp = jnp.zeros((prev_pad, dout_pad), jnp.float32).at[:din, :dout].set(w)
        bp = jnp.zeros((1, dout_pad), jnp.float32).at[:, :dout].set(b.reshape(1, -1))
        prepared += [wp.astype(jnp.bfloat16), bp]
        prev_pad = dout_pad
    return tuple(prepared)


def _vmem_capacity_bytes():
    try:
        cap = int(getattr(pltpu.get_tpu_info(), "vmem_capacity_bytes", 0))
        if cap > 0:
            return cap
    except Exception:
        pass
    return 64 * 1024 * 1024        # conservative: v7x per-TensorCore VMEM


def _vmem_limit_bytes(d_in, padded_dims, tile_b):
    wb = 0
    prev = d_in
    for p in padded_dims:
        wb += prev * p * 2 + p * 4                 # bf16 weights (single-buffered) + f32 bias
        prev = p
    xb = 2 * tile_b * d_in * 4                     # double-buffered f32 input tile
    ob = 2 * tile_b * 4                            # double-buffered output row
    act = 6 * tile_b * max(padded_dims) * 4        # activations / logits / mask headroom
    est = wb + xb + ob + act
    return max(16 * 1024 * 1024, min(int(0.85 * _vmem_capacity_bytes()), 2 * est))


def _resident_spec(shape):
    """Full-array block, constant index_map (DMA'd once, VMEM-resident), single buffer."""
    imap = lambda i, seed_ref: (0,) * len(shape)
    try:
        return pl.BlockSpec(shape, imap, pipeline_mode=pl.Buffered(1))
    except (TypeError, AttributeError):            # older jax without pipeline_mode/Buffered
        return pl.BlockSpec(shape, imap)


def discriminator_forward(x, prepared, *, seed=0, training=True, tile_b=TILE_B):
    """x: (batch, d_input_dim) f32.  prepared: output of prepare_params."""
    batch, d_in = x.shape
    assert prepared[0].shape[0] == d_in

    # Choose the batch tile: big enough to fill the 256-wide MXU, but keep >=2 tiles
    # (both v7x TensorCores busy) and never pad a tiny batch up to a huge tile.
    tb = min(tile_b, max(8, _round_up(batch, 8)))
    while tb > 128 and pl.cdiv(batch, tb) < 2:
        tb //= 2
    n_tiles = pl.cdiv(batch, tb)
    b_pad = n_tiles * tb

    x_p = x.astype(jnp.float32)
    if b_pad != batch:
        x_p = jnp.pad(x_p, ((0, b_pad - batch), (0, 0)))

    padded_dims = [prepared[2 * k].shape[1] for k in range(5)]
    vmem_limit = _vmem_limit_bytes(d_in, padded_dims, tb)

    seed_arr = jnp.asarray([seed], dtype=jnp.int32)

    in_specs = [pl.BlockSpec((tb, d_in), lambda i, seed_ref: (i, 0))]
    in_specs += [_resident_spec(a.shape) for a in prepared]
    out_spec = pl.BlockSpec((1, 1, tb), lambda i, seed_ref: (i, 0, 0))

    out = pl.pallas_call(
        functools.partial(_discriminator_kernel, training=training),
        out_shape=jax.ShapeDtypeStruct((n_tiles, 1, tb), jnp.float32),
        grid_spec=pltpu.PrefetchScalarGridSpec(
            num_scalar_prefetch=1,
            grid=(n_tiles,),
            in_specs=in_specs,
            out_specs=out_spec,
        ),
        compiler_params=pltpu.CompilerParams(
            dimension_semantics=("parallel",),      # batch tiles split across TCs on v7x
            vmem_limit_bytes=vmem_limit,
        ),
    )(seed_arr, x_p, *prepared)

    return out.reshape(b_pad, 1)[:batch]


# --------------------------------------------------------------------------- reference / test


def init_params(key, d_input_dim):
    """nn.Linear-style init: U[-1/sqrt(in), 1/sqrt(in)]; W stored as (in, out)."""
    dims = [
        (d_input_dim, d_input_dim * 4),
        (d_input_dim * 4, d_input_dim * 2),
        (d_input_dim * 2, d_input_dim),
        (d_input_dim, d_input_dim // 2),
        (d_input_dim // 2, 1),
    ]
    params = []
    for din, dout in dims:
        key, kw, kb = jax.random.split(key, 3)
        bound = 1.0 / float(din) ** 0.5
        w = jax.random.uniform(kw, (din, dout), jnp.float32, -bound, bound)
        b = jax.random.uniform(kb, (1, dout), jnp.float32, -bound, bound)
        params.append((w, b))
    return params


def reference_forward(x, params):
    """Pure-JAX reference (dropout disabled) with the same bf16/f32 mixed precision."""
    h = x.astype(jnp.bfloat16)
    for w, b in params[:-1]:
        z = jnp.dot(h, w.astype(jnp.bfloat16), preferred_element_type=jnp.float32) + b
        z = jnp.where(z >= 0.0, z, SLOPE * z)
        h = z.astype(jnp.bfloat16)
    w, b = params[-1]
    logits = jnp.dot(h, w.astype(jnp.bfloat16), preferred_element_type=jnp.float32) + b
    return _stable_sigmoid(logits)


if __name__ == "__main__":
    batch = 256          # small stand-in for n_data (2 batch tiles of 128)
    d_input_dim = 64     # small stand-in for `timesteps`

    key = jax.random.PRNGKey(0)
    kx, kp = jax.random.split(key)
    x = jax.random.normal(kx, (batch, d_input_dim), jnp.float32)
    params = init_params(kp, d_input_dim)
    prepared = prepare_params(params)    # hoisted one-time weight prep

    # Training-mode forward (matches the module: F.dropout is active by default).
    out = jax.block_until_ready(
        discriminator_forward(x, prepared, seed=1234, training=True))
    assert out.shape == (batch, 1)
    assert bool(jnp.all(jnp.isfinite(out)))
    assert bool(jnp.all((out >= 0.0) & (out <= 1.0)))

    # In-kernel dropout is deterministic for a fixed seed.
    out2 = jax.block_until_ready(
        discriminator_forward(x, prepared, seed=1234, training=True))
    assert bool(jnp.all(out == out2))

    # Numerics check with dropout disabled against the pure-JAX reference.
    out_eval = jax.block_until_ready(
        discriminator_forward(x, prepared, seed=0, training=False))
    ref_eval = reference_forward(x, params)
    max_err = float(jnp.max(jnp.abs(out_eval - ref_eval)))
    assert max_err < 2e-3, max_err

    print("KERNEL_OK")
</pallas_src>

<mosaic_0001>
module attributes {stable_mosaic.version = 11 : i64} {
  func.func @_discriminator_kernel(%arg0: i32, %arg1: memref<1xi32, #tpu.memory_space<smem>>, %arg2: memref<128x64xf32, #tpu.memory_space<vmem>>, %arg3: memref<64x256xbf16, #tpu.memory_space<vmem>>, %arg4: memref<1x256xf32, #tpu.memory_space<vmem>>, %arg5: memref<256x128xbf16, #tpu.memory_space<vmem>>, %arg6: memref<1x128xf32, #tpu.memory_space<vmem>>, %arg7: memref<128x128xbf16, #tpu.memory_space<vmem>>, %arg8: memref<1x128xf32, #tpu.memory_space<vmem>>, %arg9: memref<128x128xbf16, #tpu.memory_space<vmem>>, %arg10: memref<1x128xf32, #tpu.memory_space<vmem>>, %arg11: memref<128x128xbf16, #tpu.memory_space<vmem>>, %arg12: memref<1x128xf32, #tpu.memory_space<vmem>>, %arg13: memref<1x1x128xf32, #tpu.memory_space<vmem>>) attributes {dimension_semantics = [#tpu.dimension_semantics<parallel>], iteration_bounds = array<i64: 2>, scalar_prefetch = 1 : i64, scratch_operands = 0 : i64, tpu.core_type = #tpu.core_type<tc>, window_params = [{transform_indices = @transform_0, window_bounds = array<i64: 128, 64>}, {pipeline_mode = #tpu.pipeline_mode<synchronous>, transform_indices = @transform_1, window_bounds = array<i64: 64, 256>}, {pipeline_mode = #tpu.pipeline_mode<synchronous>, transform_indices = @transform_2, window_bounds = array<i64: 1, 256>}, {pipeline_mode = #tpu.pipeline_mode<synchronous>, transform_indices = @transform_3, window_bounds = array<i64: 256, 128>}, {pipeline_mode = #tpu.pipeline_mode<synchronous>, transform_indices = @transform_4, window_bounds = array<i64: 1, 128>}, {pipeline_mode = #tpu.pipeline_mode<synchronous>, transform_indices = @transform_5, window_bounds = array<i64: 128, 128>}, {pipeline_mode = #tpu.pipeline_mode<synchronous>, transform_indices = @transform_6, window_bounds = array<i64: 1, 128>}, {pipeline_mode = #tpu.pipeline_mode<synchronous>, transform_indices = @transform_7, window_bounds = array<i64: 128, 128>}, {pipeline_mode = #tpu.pipeline_mode<synchronous>, transform_indices = @transform_8, window_bounds = array<i64: 1, 128>}, {pipeline_mode = #tpu.pipeline_mode<synchronous>, transform_indices = @transform_9, window_bounds = array<i64: 128, 128>}, {pipeline_mode = #tpu.pipeline_mode<synchronous>, transform_indices = @transform_10, window_bounds = array<i64: 1, 128>}, {transform_indices = @transform_11, window_bounds = array<i64: 1, 1, 128>}]} {
    %c0 = arith.constant 0 : index
    %0 = memref.load %arg1[%c0] : memref<1xi32, #tpu.memory_space<smem>>
    %c0_0 = arith.constant 0 : index
    %c0_1 = arith.constant 0 : index
    %1 = vector.load %arg2[%c0_0, %c0_1] : memref<128x64xf32, #tpu.memory_space<vmem>>, vector<128x64xf32>
    %2 = arith.truncf %1 : vector<128x64xf32> to vector<128x64xbf16>
    %c0_2 = arith.constant 0 : index
    %c0_3 = arith.constant 0 : index
    %3 = vector.load %arg3[%c0_2, %c0_3] : memref<64x256xbf16, #tpu.memory_space<vmem>>, vector<64x256xbf16>
    %cst = arith.constant dense<0.000000e+00> : vector<128x256xf32>
    %4 = tpu.matmul %2, %3, %cst {dimension_numbers = #tpu.dot_dimension_numbers<[1], [0], [0], [1], [0, 0, 1, 1], [], []>} : vector<128x64xbf16>, vector<64x256xbf16>, vector<128x256xf32> -> vector<128x256xf32>
    %c0_4 = arith.constant 0 : index
    %c0_5 = arith.constant 0 : index
    %5 = vector.load %arg4[%c0_4, %c0_5] : memref<1x256xf32, #tpu.memory_space<vmem>>, vector<1x256xf32>
    %6 = vector.broadcast %5 : vector<1x256xf32> to vector<128x256xf32>
    %7 = arith.addf %4, %6 : vector<128x256xf32>
    %cst_6 = arith.constant 0.000000e+00 : f32
    %8 = vector.broadcast %cst_6 : f32 to vector<128x256xf32>
    %9 = arith.cmpf oge, %7, %8 : vector<128x256xf32>
    %cst_7 = arith.constant 0.00999999977 : f32
    %10 = vector.broadcast %cst_7 : f32 to vector<128x256xf32>
    %11 = arith.mulf %10, %7 : vector<128x256xf32>
    %12 = arith.select %9, %7, %11 : vector<128x256xi1>, vector<128x256xf32>
    %13 = tpu.iota {dimensions = array<i32: 0>} : vector<128x256xi32>
    %14 = tpu.iota {dimensions = array<i32: 1>} : vector<128x256xi32>
    %c1663821211_i32 = arith.constant 1663821211 : i32
    %15 = arith.xori %0, %c1663821211_i32 : i32
    %c461845907_i32 = arith.constant 461845907 : i32
    %16 = arith.muli %arg0, %c461845907_i32 : i32
    %17 = arith.xori %15, %16 : i32
    %c625341585_i32 = arith.constant 625341585 : i32
    %18 = vector.broadcast %c625341585_i32 : i32 to vector<128x256xi32>
    %19 = arith.muli %13, %18 : vector<128x256xi32>
    %20 = vector.broadcast %17 : i32 to vector<128x256xi32>
    %21 = arith.addi %20, %19 : vector<128x256xi32>
    %c668265263_i32 = arith.constant 668265263 : i32
    %22 = vector.broadcast %c668265263_i32 : i32 to vector<128x256xi32>
    %23 = arith.muli %14, %22 : vector<128x256xi32>
    %24 = arith.addi %21, %23 : vector<128x256xi32>
    %c16_i32 = arith.constant 16 : i32
    %25 = vector.broadcast %c16_i32 : i32 to vector<128x256xi32>
    %26 = arith.shrsi %24, %25 : vector<128x256xi32>
    %27 = arith.xori %24, %26 : vector<128x256xi32>
    %c739982445_i32 = arith.constant 739982445 : i32
    %28 = vector.broadcast %c739982445_i32 : i32 to vector<128x256xi32>
    %29 = arith.muli %27, %28 : vector<128x256xi32>
    %c13_i32 = arith.constant 13 : i32
    %30 = vector.broadcast %c13_i32 : i32 to vector<128x256xi32>
    %31 = arith.shrsi %29, %30 : vector<128x256xi32>
    %32 = arith.xori %29, %31 : vector<128x256xi32>
    %c695872825_i32 = arith.constant 695872825 : i32
    %33 = vector.broadcast %c695872825_i32 : i32 to vector<128x256xi32>
    %34 = arith.muli %32, %33 : vector<128x256xi32>
    %c16_i32_8 = arith.constant 16 : i32
    %35 = vector.broadcast %c16_i32_8 : i32 to vector<128x256xi32>
    %36 = arith.shrsi %34, %35 : vector<128x256xi32>
    %37 = arith.xori %34, %36 : vector<128x256xi32>
    %c16777215_i32 = arith.constant 16777215 : i32
    %38 = vector.broadcast %c16777215_i32 : i32 to vector<128x256xi32>
    %39 = arith.andi %37, %38 : vector<128x256xi32>
    %c13421773_i32 = arith.constant 13421773 : i32
    %40 = vector.broadcast %c13421773_i32 : i32 to vector<128x256xi32>
    %41 = arith.cmpi slt, %39, %40 : vector<128x256xi32>
    %cst_9 = arith.constant 1.250000e+00 : f32
    %42 = vector.broadcast %cst_9 : f32 to vector<128x256xf32>
    %43 = arith.mulf %12, %42 : vector<128x256xf32>
    %cst_10 = arith.constant 0.000000e+00 : f32
    %44 = vector.broadcast %cst_10 : f32 to vector<128x256xf32>
    %45 = arith.select %41, %43, %44 : vector<128x256xi1>, vector<128x256xf32>
    %46 = arith.truncf %45 : vector<128x256xf32> to vector<128x256xbf16>
    %c0_11 = arith.constant 0 : index
    %c0_12 = arith.constant 0 : index
    %47 = vector.load %arg5[%c0_11, %c0_12] : memref<256x128xbf16, #tpu.memory_space<vmem>>, vector<256x128xbf16>
    %cst_13 = arith.constant dense<0.000000e+00> : vector<128x128xf32>
    %48 = tpu.matmul %46, %47, %cst_13 {dimension_numbers = #tpu.dot_dimension_numbers<[1], [0], [0], [1], [0, 0, 1, 1], [], []>} : vector<128x256xbf16>, vector<256x128xbf16>, vector<128x128xf32> -> vector<128x128xf32>
    %c0_14 = arith.constant 0 : index
    %c0_15 = arith.constant 0 : index
    %49 = vector.load %arg6[%c0_14, %c0_15] : memref<1x128xf32, #tpu.memory_space<vmem>>, vector<1x128xf32>
    %50 = vector.broadcast %49 : vector<1x128xf32> to vector<128x128xf32>
    %51 = arith.addf %48, %50 : vector<128x128xf32>
    %cst_16 = arith.constant 0.000000e+00 : f32
    %52 = vector.broadcast %cst_16 : f32 to vector<128x128xf32>
    %53 = arith.cmpf oge, %51, %52 : vector<128x128xf32>
    %cst_17 = arith.constant 0.00999999977 : f32
    %54 = vector.broadcast %cst_17 : f32 to vector<128x128xf32>
    %55 = arith.mulf %54, %51 : vector<128x128xf32>
    %56 = arith.select %53, %51, %55 : vector<128x128xi1>, vector<128x128xf32>
    %57 = tpu.iota {dimensions = array<i32: 0>} : vector<128x128xi32>
    %58 = tpu.iota {dimensions = array<i32: 1>} : vector<128x128xi32>
    %c-967324874_i32 = arith.constant -967324874 : i32
    %59 = arith.xori %0, %c-967324874_i32 : i32
    %c461845907_i32_18 = arith.constant 461845907 : i32
    %60 = arith.muli %arg0, %c461845907_i32_18 : i32
    %61 = arith.xori %59, %60 : i32
    %c625341585_i32_19 = arith.constant 625341585 : i32
    %62 = vector.broadcast %c625341585_i32_19 : i32 to vector<128x128xi32>
    %63 = arith.muli %57, %62 : vector<128x128xi32>
    %64 = vector.broadcast %61 : i32 to vector<128x128xi32>
    %65 = arith.addi %64, %63 : vector<128x128xi32>
    %c668265263_i32_20 = arith.constant 668265263 : i32
    %66 = vector.broadcast %c668265263_i32_20 : i32 to vector<128x128xi32>
    %67 = arith.muli %58, %66 : vector<128x128xi32>
    %68 = arith.addi %65, %67 : vector<128x128xi32>
    %c16_i32_21 = arith.constant 16 : i32
    %69 = vector.broadcast %c16_i32_21 : i32 to vector<128x128xi32>
    %70 = arith.shrsi %68, %69 : vector<128x128xi32>
    %71 = arith.xori %68, %70 : vector<128x128xi32>
    %c739982445_i32_22 = arith.constant 739982445 : i32
    %72 = vector.broadcast %c739982445_i32_22 : i32 to vector<128x128xi32>
    %73 = arith.muli %71, %72 : vector<128x128xi32>
    %c13_i32_23 = arith.constant 13 : i32
    %74 = vector.broadcast %c13_i32_23 : i32 to vector<128x128xi32>
    %75 = arith.shrsi %73, %74 : vector<128x128xi32>
    %76 = arith.xori %73, %75 : vector<128x128xi32>
    %c695872825_i32_24 = arith.constant 695872825 : i32
    %77 = vector.broadcast %c695872825_i32_24 : i32 to vector<128x128xi32>
    %78 = arith.muli %76, %77 : vector<128x128xi32>
    %c16_i32_25 = arith.constant 16 : i32
    %79 = vector.broadcast %c16_i32_25 : i32 to vector<128x128xi32>
    %80 = arith.shrsi %78, %79 : vector<128x128xi32>
    %81 = arith.xori %78, %80 : vector<128x128xi32>
    %c16777215_i32_26 = arith.constant 16777215 : i32
    %82 = vector.broadcast %c16777215_i32_26 : i32 to vector<128x128xi32>
    %83 = arith.andi %81, %82 : vector<128x128xi32>
    %c13421773_i32_27 = arith.constant 13421773 : i32
    %84 = vector.broadcast %c13421773_i32_27 : i32 to vector<128x128xi32>
    %85 = arith.cmpi slt, %83, %84 : vector<128x128xi32>
    %cst_28 = arith.constant 1.250000e+00 : f32
    %86 = vector.broadcast %cst_28 : f32 to vector<128x128xf32>
    %87 = arith.mulf %56, %86 : vector<128x128xf32>
    %cst_29 = arith.constant 0.000000e+00 : f32
    %88 = vector.broadcast %cst_29 : f32 to vector<128x128xf32>
    %89 = arith.select %85, %87, %88 : vector<128x128xi1>, vector<128x128xf32>
    %90 = arith.truncf %89 : vector<128x128xf32> to vector<128x128xbf16>
    %c0_30 = arith.constant 0 : index
    %c0_31 = arith.constant 0 : index
    %91 = vector.load %arg7[%c0_30, %c0_31] : memref<128x128xbf16, #tpu.memory_space<vmem>>, vector<128x128xbf16>
    %cst_32 = arith.constant dense<0.000000e+00> : vector<128x128xf32>
    %92 = tpu.matmul %90, %91, %cst_32 {dimension_numbers = #tpu.dot_dimension_numbers<[1], [0], [0], [1], [0, 0, 1, 1], [], []>} : vector<128x128xbf16>, vector<128x128xbf16>, vector<128x128xf32> -> vector<128x128xf32>
    %c0_33 = arith.constant 0 : index
    %c0_34 = arith.constant 0 : index
    %93 = vector.load %arg8[%c0_33, %c0_34] : memref<1x128xf32, #tpu.memory_space<vmem>>, vector<1x128xf32>
    %94 = vector.broadcast %93 : vector<1x128xf32> to vector<128x128xf32>
    %95 = arith.addf %92, %94 : vector<128x128xf32>
    %cst_35 = arith.constant 0.000000e+00 : f32
    %96 = vector.broadcast %cst_35 : f32 to vector<128x128xf32>
    %97 = arith.cmpf oge, %95, %96 : vector<128x128xf32>
    %cst_36 = arith.constant 0.00999999977 : f32
    %98 = vector.broadcast %cst_36 : f32 to vector<128x128xf32>
    %99 = arith.mulf %98, %95 : vector<128x128xf32>
    %100 = arith.select %97, %95, %99 : vector<128x128xi1>, vector<128x128xf32>
    %101 = tpu.iota {dimensions = array<i32: 0>} : vector<128x128xi32>
    %102 = tpu.iota {dimensions = array<i32: 1>} : vector<128x128xi32>
    %c696496337_i32 = arith.constant 696496337 : i32
    %103 = arith.xori %0, %c696496337_i32 : i32
    %c461845907_i32_37 = arith.constant 461845907 : i32
    %104 = arith.muli %arg0, %c461845907_i32_37 : i32
    %105 = arith.xori %103, %104 : i32
    %c625341585_i32_38 = arith.constant 625341585 : i32
    %106 = vector.broadcast %c625341585_i32_38 : i32 to vector<128x128xi32>
    %107 = arith.muli %101, %106 : vector<128x128xi32>
    %108 = vector.broadcast %105 : i32 to vector<128x128xi32>
    %109 = arith.addi %108, %107 : vector<128x128xi32>
    %c668265263_i32_39 = arith.constant 668265263 : i32
    %110 = vector.broadcast %c668265263_i32_39 : i32 to vector<128x128xi32>
    %111 = arith.muli %102, %110 : vector<128x128xi32>
    %112 = arith.addi %109, %111 : vector<128x128xi32>
    %c16_i32_40 = arith.constant 16 : i32
    %113 = vector.broadcast %c16_i32_40 : i32 to vector<128x128xi32>
    %114 = arith.shrsi %112, %113 : vector<128x128xi32>
    %115 = arith.xori %112, %114 : vector<128x128xi32>
    %c739982445_i32_41 = arith.constant 739982445 : i32
    %116 = vector.broadcast %c739982445_i32_41 : i32 to vector<128x128xi32>
    %117 = arith.muli %115, %116 : vector<128x128xi32>
    %c13_i32_42 = arith.constant 13 : i32
    %118 = vector.broadcast %c13_i32_42 : i32 to vector<128x128xi32>
    %119 = arith.shrsi %117, %118 : vector<128x128xi32>
    %120 = arith.xori %117, %119 : vector<128x128xi32>
    %c695872825_i32_43 = arith.constant 695872825 : i32
    %121 = vector.broadcast %c695872825_i32_43 : i32 to vector<128x128xi32>
    %122 = arith.muli %120, %121 : vector<128x128xi32>
    %c16_i32_44 = arith.constant 16 : i32
    %123 = vector.broadcast %c16_i32_44 : i32 to vector<128x128xi32>
    %124 = arith.shrsi %122, %123 : vector<128x128xi32>
    %125 = arith.xori %122, %124 : vector<128x128xi32>
    %c16777215_i32_45 = arith.constant 16777215 : i32
    %126 = vector.broadcast %c16777215_i32_45 : i32 to vector<128x128xi32>
    %127 = arith.andi %125, %126 : vector<128x128xi32>
    %c13421773_i32_46 = arith.constant 13421773 : i32
    %128 = vector.broadcast %c13421773_i32_46 : i32 to vector<128x128xi32>
    %129 = arith.cmpi slt, %127, %128 : vector<128x128xi32>
    %cst_47 = arith.constant 1.250000e+00 : f32
    %130 = vector.broadcast %cst_47 : f32 to vector<128x128xf32>
    %131 = arith.mulf %100, %130 : vector<128x128xf32>
    %cst_48 = arith.constant 0.000000e+00 : f32
    %132 = vector.broadcast %cst_48 : f32 to vector<128x128xf32>
    %133 = arith.select %129, %131, %132 : vector<128x128xi1>, vector<128x128xf32>
    %134 = arith.truncf %133 : vector<128x128xf32> to vector<128x128xbf16>
    %c0_49 = arith.constant 0 : index
    %c0_50 = arith.constant 0 : index
    %135 = vector.load %arg9[%c0_49, %c0_50] : memref<128x128xbf16, #tpu.memory_space<vmem>>, vector<128x128xbf16>
    %cst_51 = arith.constant dense<0.000000e+00> : vector<128x128xf32>
    %136 = tpu.matmul %134, %135, %cst_51 {dimension_numbers = #tpu.dot_dimension_numbers<[1], [0], [0], [1], [0, 0, 1, 1], [], []>} : vector<128x128xbf16>, vector<128x128xbf16>, vector<128x128xf32> -> vector<128x128xf32>
    %c0_52 = arith.constant 0 : index
    %c0_53 = arith.constant 0 : index
    %137 = vector.load %arg10[%c0_52, %c0_53] : memref<1x128xf32, #tpu.memory_space<vmem>>, vector<1x128xf32>
    %138 = vector.broadcast %137 : vector<1x128xf32> to vector<128x128xf32>
    %139 = arith.addf %136, %138 : vector<128x128xf32>
    %cst_54 = arith.constant 0.000000e+00 : f32
    %140 = vector.broadcast %cst_54 : f32 to vector<128x128xf32>
    %141 = arith.cmpf oge, %139, %140 : vector<128x128xf32>
    %cst_55 = arith.constant 0.00999999977 : f32
    %142 = vector.broadcast %cst_55 : f32 to vector<128x128xf32>
    %143 = arith.mulf %142, %139 : vector<128x128xf32>
    %144 = arith.select %141, %139, %143 : vector<128x128xi1>, vector<128x128xf32>
    %145 = tpu.iota {dimensions = array<i32: 0>} : vector<128x128xi32>
    %146 = tpu.iota {dimensions = array<i32: 1>} : vector<128x128xi32>
    %c-1934649748_i32 = arith.constant -1934649748 : i32
    %147 = arith.xori %0, %c-1934649748_i32 : i32
    %c461845907_i32_56 = arith.constant 461845907 : i32
    %148 = arith.muli %arg0, %c461845907_i32_56 : i32
    %149 = arith.xori %147, %148 : i32
    %c625341585_i32_57 = arith.constant 625341585 : i32
    %150 = vector.broadcast %c625341585_i32_57 : i32 to vector<128x128xi32>
    %151 = arith.muli %145, %150 : vector<128x128xi32>
    %152 = vector.broadcast %149 : i32 to vector<128x128xi32>
    %153 = arith.addi %152, %151 : vector<128x128xi32>
    %c668265263_i32_58 = arith.constant 668265263 : i32
    %154 = vector.broadcast %c668265263_i32_58 : i32 to vector<128x128xi32>
    %155 = arith.muli %146, %154 : vector<128x128xi32>
    %156 = arith.addi %153, %155 : vector<128x128xi32>
    %c16_i32_59 = arith.constant 16 : i32
    %157 = vector.broadcast %c16_i32_59 : i32 to vector<128x128xi32>
    %158 = arith.shrsi %156, %157 : vector<128x128xi32>
    %159 = arith.xori %156, %158 : vector<128x128xi32>
    %c739982445_i32_60 = arith.constant 739982445 : i32
    %160 = vector.broadcast %c739982445_i32_60 : i32 to vector<128x128xi32>
    %161 = arith.muli %159, %160 : vector<128x128xi32>
    %c13_i32_61 = arith.constant 13 : i32
    %162 = vector.broadcast %c13_i32_61 : i32 to vector<128x128xi32>
    %163 = arith.shrsi %161, %162 : vector<128x128xi32>
    %164 = arith.xori %161, %163 : vector<128x128xi32>
    %c695872825_i32_62 = arith.constant 695872825 : i32
    %165 = vector.broadcast %c695872825_i32_62 : i32 to vector<128x128xi32>
    %166 = arith.muli %164, %165 : vector<128x128xi32>
    %c16_i32_63 = arith.constant 16 : i32
    %167 = vector.broadcast %c16_i32_63 : i32 to vector<128x128xi32>
    %168 = arith.shrsi %166, %167 : vector<128x128xi32>
    %169 = arith.xori %166, %168 : vector<128x128xi32>
    %c16777215_i32_64 = arith.constant 16777215 : i32
    %170 = vector.broadcast %c16777215_i32_64 : i32 to vector<128x128xi32>
    %171 = arith.andi %169, %170 : vector<128x128xi32>
    %c13421773_i32_65 = arith.constant 13421773 : i32
    %172 = vector.broadcast %c13421773_i32_65 : i32 to vector<128x128xi32>
    %173 = arith.cmpi slt, %171, %172 : vector<128x128xi32>
    %cst_66 = arith.constant 1.250000e+00 : f32
    %174 = vector.broadcast %cst_66 : f32 to vector<128x128xf32>
    %175 = arith.mulf %144, %174 : vector<128x128xf32>
    %cst_67 = arith.constant 0.000000e+00 : f32
    %176 = vector.broadcast %cst_67 : f32 to vector<128x128xf32>
    %177 = arith.select %173, %175, %176 : vector<128x128xi1>, vector<128x128xf32>
    %178 = arith.truncf %177 : vector<128x128xf32> to vector<128x128xbf16>
    %c0_68 = arith.constant 0 : index
    %c0_69 = arith.constant 0 : index
    %179 = vector.load %arg11[%c0_68, %c0_69] : memref<128x128xbf16, #tpu.memory_space<vmem>>, vector<128x128xbf16>
    %cst_70 = arith.constant dense<0.000000e+00> : vector<128x128xf32>
    %180 = tpu.matmul %178, %179, %cst_70 {dimension_numbers = #tpu.dot_dimension_numbers<[1], [0], [0], [1], [0, 0, 1, 1], [], []>} : vector<128x128xbf16>, vector<128x128xbf16>, vector<128x128xf32> -> vector<128x128xf32>
    %c0_71 = arith.constant 0 : index
    %c0_72 = arith.constant 0 : index
    %181 = vector.load %arg12[%c0_71, %c0_72] : memref<1x128xf32, #tpu.memory_space<vmem>>, vector<1x128xf32>
    %182 = vector.broadcast %181 : vector<1x128xf32> to vector<128x128xf32>
    %183 = arith.addf %180, %182 : vector<128x128xf32>
    %184 = tpu.transpose %183, [1, 0] : vector<128x128xf32> -> vector<128x128xf32>
    %185 = vector.extract_strided_slice %184 {offsets = [0, 0], sizes = [1, 128], strides = [1, 1]} : vector<128x128xf32> to vector<1x128xf32>
    %186 = math.absf %185 : vector<1x128xf32>
    %cst_73 = arith.constant 0.000000e+00 : f32
    %187 = vector.broadcast %cst_73 : f32 to vector<1x128xf32>
    %188 = arith.subf %187, %186 : vector<1x128xf32>
    %189 = math.exp %188 : vector<1x128xf32>
    %cst_74 = arith.constant 0.000000e+00 : f32
    %190 = vector.broadcast %cst_74 : f32 to vector<1x128xf32>
    %191 = arith.cmpf oge, %185, %190 : vector<1x128xf32>
    %cst_75 = arith.constant 1.000000e+00 : f32
    %192 = vector.broadcast %cst_75 : f32 to vector<1x128xf32>
    %193 = arith.addf %192, %189 : vector<1x128xf32>
    %cst_76 = arith.constant 1.000000e+00 : f32
    %194 = vector.broadcast %cst_76 : f32 to vector<1x128xf32>
    %195 = arith.divf %194, %193 : vector<1x128xf32>
    %cst_77 = arith.constant 1.000000e+00 : f32
    %196 = vector.broadcast %cst_77 : f32 to vector<1x128xf32>
    %197 = arith.addf %196, %189 : vector<1x128xf32>
    %198 = arith.divf %189, %197 : vector<1x128xf32>
    %199 = arith.select %191, %195, %198 : vector<1x128xi1>, vector<1x128xf32>
    %200 = vector.shape_cast %199 : vector<1x128xf32> to vector<1x1x128xf32>
    %c0_78 = arith.constant 0 : index
    %c0_79 = arith.constant 0 : index
    %c0_80 = arith.constant 0 : index
    %201 = vector.load %arg13[%c0_78, %c0_79, %c0_80] : memref<1x1x128xf32, #tpu.memory_space<vmem>>, vector<1x1x128xf32>
    tpu.vector_store %arg13[%c0_78, %c0_79, %c0_80], %200 {strides = array<i32>} : memref<1x1x128xf32, #tpu.memory_space<vmem>>, vector<1x1x128xf32>,
    return
  }
  func.func @transform_0(%arg0: i32, %arg1: memref<1xi32, #tpu.memory_space<smem>>) -> (i32, i32) {
    %c0_i32 = arith.constant 0 : i32
    %c0_i32_0 = arith.constant 0 : i32
    return %arg0, %c0_i32 : i32, i32
  }
  func.func @transform_1(%arg0: i32, %arg1: memref<1xi32, #tpu.memory_space<smem>>) -> (i32, i32) {
    %c0_i32 = arith.constant 0 : i32
    %c0_i32_0 = arith.constant 0 : i32
    %c0_i32_1 = arith.constant 0 : i32
    return %c0_i32, %c0_i32_0 : i32, i32
  }
  func.func @transform_2(%arg0: i32, %arg1: memref<1xi32, #tpu.memory_space<smem>>) -> (i32, i32) {
    %c0_i32 = arith.constant 0 : i32
    %c0_i32_0 = arith.constant 0 : i32
    %c0_i32_1 = arith.constant 0 : i32
    return %c0_i32, %c0_i32_0 : i32, i32
  }
  func.func @transform_3(%arg0: i32, %arg1: memref<1xi32, #tpu.memory_space<smem>>) -> (i32, i32) {
    %c0_i32 = arith.constant 0 : i32
    %c0_i32_0 = arith.constant 0 : i32
    %c0_i32_1 = arith.constant 0 : i32
    return %c0_i32, %c0_i32_0 : i32, i32
  }
  func.func @transform_4(%arg0: i32, %arg1: memref<1xi32, #tpu.memory_space<smem>>) -> (i32, i32) {
    %c0_i32 = arith.constant 0 : i32
    %c0_i32_0 = arith.constant 0 : i32
    %c0_i32_1 = arith.constant 0 : i32
    return %c0_i32, %c0_i32_0 : i32, i32
  }
  func.func @transform_5(%arg0: i32, %arg1: memref<1xi32, #tpu.memory_space<smem>>) -> (i32, i32) {
    %c0_i32 = arith.constant 0 : i32
    %c0_i32_0 = arith.constant 0 : i32
    %c0_i32_1 = arith.constant 0 : i32
    return %c0_i32, %c0_i32_0 : i32, i32
  }
  func.func @transform_6(%arg0: i32, %arg1: memref<1xi32, #tpu.memory_space<smem>>) -> (i32, i32) {
    %c0_i32 = arith.constant 0 : i32
    %c0_i32_0 = arith.constant 0 : i32
    %c0_i32_1 = arith.constant 0 : i32
    return %c0_i32, %c0_i32_0 : i32, i32
  }
  func.func @transform_7(%arg0: i32, %arg1: memref<1xi32, #tpu.memory_space<smem>>) -> (i32, i32) {
    %c0_i32 = arith.constant 0 : i32
    %c0_i32_0 = arith.constant 0 : i32
    %c0_i32_1 = arith.constant 0 : i32
    return %c0_i32, %c0_i32_0 : i32, i32
  }
  func.func @transform_8(%arg0: i32, %arg1: memref<1xi32, #tpu.memory_space<smem>>) -> (i32, i32) {
    %c0_i32 = arith.constant 0 : i32
    %c0_i32_0 = arith.constant 0 : i32
    %c0_i32_1 = arith.constant 0 : i32
    return %c0_i32, %c0_i32_0 : i32, i32
  }
  func.func @transform_9(%arg0: i32, %arg1: memref<1xi32, #tpu.memory_space<smem>>) -> (i32, i32) {
    %c0_i32 = arith.constant 0 : i32
    %c0_i32_0 = arith.constant 0 : i32
    %c0_i32_1 = arith.constant 0 : i32
    return %c0_i32, %c0_i32_0 : i32, i32
  }
  func.func @transform_10(%arg0: i32, %arg1: memref<1xi32, #tpu.memory_space<smem>>) -> (i32, i32) {
    %c0_i32 = arith.constant 0 : i32
    %c0_i32_0 = arith.constant 0 : i32
    %c0_i32_1 = arith.constant 0 : i32
    return %c0_i32, %c0_i32_0 : i32, i32
  }
  func.func @transform_11(%arg0: i32, %arg1: memref<1xi32, #tpu.memory_space<smem>>) -> (i32, i32, i32) {
    %c0_i32 = arith.constant 0 : i32
    %c0_i32_0 = arith.constant 0 : i32
    %c0_i32_1 = arith.constant 0 : i32
    return %arg0, %c0_i32, %c0_i32_0 : i32, i32, i32
  }
}

</mosaic_0001>

<llo_original>
// kernel: tpu_custom_call.1
$region0: #{tpu_custom_call.1}
  #allocation0 [shape = 'u32[]', space=smem, size = 0x4, offset = 0x4, fixed_abs, tag = 'smem constant byte address 0x4 - core index']
  #allocation1 [shape = 'u32[144,128]{1,0:T(1,128)}', space=vmem, size = 0x12000, scoped, tag = 'internal scratch']
  #allocation2 [shape = 's32[1]{0}', space=sflag, size = 0x4, scoped, tag = 'scoped memory for tpu_custom_call.1']
  #allocation3 [shape = 's32[1]{0:T(128)S(6)}', space=smem, size = 0x200, scoped, tag = 'prefetched SMEM operand 0']
  %s0 = inlined_call_operand.<no memory space> [shape: s32[1], index: 0, kind: input, shape index: {}]
  %s1 = inlined_call_operand.vmem [shape: f32[256,64], index: 1, kind: input, shape index: {}]
  %s2 = inlined_call_operand.vmem [shape: bf16[64,256], index: 2, kind: input, shape index: {}]
  %s3 = inlined_call_operand.vmem [shape: f32[1,256], index: 3, kind: input, shape index: {}]
  %s4 = inlined_call_operand.vmem [shape: bf16[256,128], index: 4, kind: input, shape index: {}]
  %s5 = inlined_call_operand.vmem [shape: f32[1,128], index: 5, kind: input, shape index: {}]
  %s6 = inlined_call_operand.vmem [shape: bf16[128,128], index: 6, kind: input, shape index: {}]
  %s7 = inlined_call_operand.vmem [shape: f32[1,128], index: 7, kind: input, shape index: {}]
  %s8 = inlined_call_operand.vmem [shape: bf16[128,128], index: 8, kind: input, shape index: {}]
  %s9 = inlined_call_operand.vmem [shape: f32[1,128], index: 9, kind: input, shape index: {}]
  %s10 = inlined_call_operand.vmem [shape: bf16[128,128], index: 10, kind: input, shape index: {}]
  %s11 = inlined_call_operand.vmem [shape: f32[1,128], index: 11, kind: input, shape index: {}]
  %s12 = inlined_call_operand.hbm [shape: f32[2,1,128], index: 12, kind: output, shape index: {}]
  %s13 = sld [smem:[#allocation0]]
  $region77: #{tpu_custom_call.1} parent=0
    _
  %s15 = ssub.s32 1, %s13
  %s16 = scalar_select 0, %s15, %s13
  %17 = sst [smem:[#allocation3]] %s0
  $region1: #{tpu_custom_call.1} parent=0
    #allocation4 [shape = 'u8[1024]{0}', space=vmem, size = 0x400, scoped, tag = 'output window, operand 0']
    #allocation5 [shape = 's32[2]{0}', space=sflag, size = 0x8, scoped, tag = 'scoped memory for tpu_custom_call.1']
    %18 = vsyncpa [#allocation5], 0
    %s19 = scalar_lea.sflag [#allocation5], 1
    %20 = vsyncpa %s19, 0
    loop: start=0, step=1, limit=4
    $region2: #{tpu_custom_call.1} parent=1 // loop_pre_header
      _
    $region3: #{tpu_custom_call.1} parent=1 // loop_header
      %s22 = sphi 0, %s26
      %p23 = scmp.ge.s32.totalorder %s22, 4
      %s32 = sphi 0, %s34
      %s35 = sphi 0, %s32
      %s36 = sphi 0, %s35
      %s52 = sphi 0, %s36
      %s56 = sphi 0, %s56
      %s58 = sphi 0, %s56
      %s59 = sphi 0, %s58
      %s73 = sphi 0, %s59
      %s77 = sphi 0, %s77
      %s79 = sphi 0, %s77
      %s80 = sphi 0, %s79
      %s94 = sphi 0, %s80
      %s98 = sphi 0, %s98
      %s100 = sphi 0, %s98
      %s101 = sphi 0, %s100
      %s115 = sphi 0, %s101
      %s119 = sphi 0, %s119
      %s121 = sphi 0, %s119
      %s122 = sphi 0, %s121
      %s136 = sphi 0, %s122
      %s140 = sphi 0, %s140
      %s142 = sphi 0, %s140
      %s143 = sphi 0, %s142
      %s157 = sphi 0, %s143
      %s161 = sphi 0, %s161
      %s163 = sphi 0, %s161
      %s164 = sphi 0, %s163
      %s178 = sphi 0, %s164
      %s182 = sphi 0, %s182
      %s184 = sphi 0, %s182
      %s185 = sphi 0, %s184
      %s199 = sphi 0, %s185
      %s203 = sphi 0, %s203
      %s205 = sphi 0, %s203
      %s206 = sphi 0, %s205
      %s220 = sphi 0, %s206
      %s224 = sphi 0, %s224
      %s226 = sphi 0, %s224
      %s227 = sphi 0, %s226
      %s241 = sphi 0, %s227
      %s245 = sphi 0, %s245
      %s247 = sphi 0, %s245
      %s248 = sphi 0, %s247
      %s262 = sphi 0, %s248
      %s268 = sphi 0, %s270
      %s271 = sphi 0, %s268
      %s272 = sphi 0, %s271
      %s288 = sphi 0, %s272
    $region4: #{tpu_custom_call.1} parent=1 // loop_header_branch
      %25 = sbr.rel (%p23) target = $region8
    $region5: #{tpu_custom_call.1} parent=1 // loop_body
      %s27 = ssub.s32 %s22, 1
      %s28 = ssub.s32 %s22, 2
      %s29 = sadd.s32 %s22, 1
      %s30 = ssub.s32 %s22, %s29
      %p31 = scmp.eq.s32.totalorder %s30, 0
      %s33 = sadd.s32 %s32, 1
      %s34 = scalar_select %p31, %s32, %s33
      %p37 = pneg %p31
      %p38 = scmp.eq.s32.totalorder %s22, 1
      %p39 = por %p37, %p38
      %p40 = scmp.ne.s32.totalorder %s32, %s35
      %p41 = scmp.eq.s32.totalorder %s22, 0
      %p42 = por %p40, %p41
      %p43 = scmp.ne.s32.totalorder %s32, %s35
      %p44 = scmp.eq.s32.totalorder %s27, 1
      %p45 = por %p43, %p44
      %p46 = scmp.ne.s32.totalorder %s35, %s36
      %p47 = scmp.eq.s32.totalorder %s27, 0
      %p48 = por %p46, %p47
      %p49 = scmp.ne.s32.totalorder %s35, %s36
      %p50 = scmp.eq.s32.totalorder %s28, 1
      %p51 = por %p49, %p50
      %p53 = scmp.ne.s32.totalorder %s36, %s52
      %p54 = scmp.eq.s32.totalorder %s28, 0
      %p55 = por %p53, %p54
      %s57 = sadd.s32 %s56, 1
      %p60 = scmp.eq.s32.totalorder %s22, 1
      %p61 = scmp.ne.s32.totalorder %s56, %s58
      %p62 = scmp.eq.s32.totalorder %s22, 0
      %p63 = por %p61, %p62
      %p64 = scmp.ne.s32.totalorder %s56, %s58
      %p65 = scmp.eq.s32.totalorder %s27, 1
      %p66 = por %p64, %p65
      %p67 = scmp.ne.s32.totalorder %s58, %s59
      %p68 = scmp.eq.s32.totalorder %s27, 0
      %p69 = por %p67, %p68
      %p70 = scmp.ne.s32.totalorder %s58, %s59
      %p71 = scmp.eq.s32.totalorder %s28, 1
      %p72 = por %p70, %p71
      %p74 = scmp.ne.s32.totalorder %s59, %s73
      %p75 = scmp.eq.s32.totalorder %s28, 0
      %p76 = por %p74, %p75
      %s78 = sadd.s32 %s77, 1
      %p81 = scmp.eq.s32.totalorder %s22, 1
      %p82 = scmp.ne.s32.totalorder %s77, %s79
      %p83 = scmp.eq.s32.totalorder %s22, 0
      %p84 = por %p82, %p83
      %p85 = scmp.ne.s32.totalorder %s77, %s79
      %p86 = scmp.eq.s32.totalorder %s27, 1
      %p87 = por %p85, %p86
      %p88 = scmp.ne.s32.totalorder %s79, %s80
      %p89 = scmp.eq.s32.totalorder %s27, 0
      %p90 = por %p88, %p89
      %p91 = scmp.ne.s32.totalorder %s79, %s80
      %p92 = scmp.eq.s32.totalorder %s28, 1
      %p93 = por %p91, %p92
      %p95 = scmp.ne.s32.totalorder %s80, %s94
      %p96 = scmp.eq.s32.totalorder %s28, 0
      %p97 = por %p95, %p96
      %s99 = sadd.s32 %s98, 1
      %p102 = scmp.eq.s32.totalorder %s22, 1
      %p103 = scmp.ne.s32.totalorder %s98, %s100
      %p104 = scmp.eq.s32.totalorder %s22, 0
      %p105 = por %p103, %p104
      %p106 = scmp.ne.s32.totalorder %s98, %s100
      %p107 = scmp.eq.s32.totalorder %s27, 1
      %p108 = por %p106, %p107
      %p109 = scmp.ne.s32.totalorder %s100, %s101
      %p110 = scmp.eq.s32.totalorder %s27, 0
      %p111 = por %p109, %p110
      %p112 = scmp.ne.s32.totalorder %s100, %s101
      %p113 = scmp.eq.s32.totalorder %s28, 1
      %p114 = por %p112, %p113
      %p116 = scmp.ne.s32.totalorder %s101, %s115
      %p117 = scmp.eq.s32.totalorder %s28, 0
      %p118 = por %p116, %p117
      %s120 = sadd.s32 %s119, 1
      %p123 = scmp.eq.s32.totalorder %s22, 1
      %p124 = scmp.ne.s32.totalorder %s119, %s121
      %p125 = scmp.eq.s32.totalorder %s22, 0
      %p126 = por %p124, %p125
      %p127 = scmp.ne.s32.totalorder %s119, %s121
      %p128 = scmp.eq.s32.totalorder %s27, 1
      %p129 = por %p127, %p128
      %p130 = scmp.ne.s32.totalorder %s121, %s122
      %p131 = scmp.eq.s32.totalorder %s27, 0
      %p132 = por %p130, %p131
      %p133 = scmp.ne.s32.totalorder %s121, %s122
      %p134 = scmp.eq.s32.totalorder %s28, 1
      %p135 = por %p133, %p134
      %p137 = scmp.ne.s32.totalorder %s122, %s136
      %p138 = scmp.eq.s32.totalorder %s28, 0
      %p139 = por %p137, %p138
      %s141 = sadd.s32 %s140, 1
      %p144 = scmp.eq.s32.totalorder %s22, 1
      %p145 = scmp.ne.s32.totalorder %s140, %s142
      %p146 = scmp.eq.s32.totalorder %s22, 0
      %p147 = por %p145, %p146
      %p148 = scmp.ne.s32.totalorder %s140, %s142
      %p149 = scmp.eq.s32.totalorder %s27, 1
      %p150 = por %p148, %p149
      %p151 = scmp.ne.s32.totalorder %s142, %s143
      %p152 = scmp.eq.s32.totalorder %s27, 0
      %p153 = por %p151, %p152
      %p154 = scmp.ne.s32.totalorder %s142, %s143
      %p155 = scmp.eq.s32.totalorder %s28, 1
      %p156 = por %p154, %p155
      %p158 = scmp.ne.s32.totalorder %s143, %s157
      %p159 = scmp.eq.s32.totalorder %s28, 0
      %p160 = por %p158, %p159
      %s162 = sadd.s32 %s161, 1
      %p165 = scmp.eq.s32.totalorder %s22, 1
      %p166 = scmp.ne.s32.totalorder %s161, %s163
      %p167 = scmp.eq.s32.totalorder %s22, 0
      %p168 = por %p166, %p167
      %p169 = scmp.ne.s32.totalorder %s161, %s163
      %p170 = scmp.eq.s32.totalorder %s27, 1
      %p171 = por %p169, %p170
      %p172 = scmp.ne.s32.totalorder %s163, %s164
      %p173 = scmp.eq.s32.totalorder %s27, 0
      %p174 = por %p172, %p173
      %p175 = scmp.ne.s32.totalorder %s163, %s164
      %p176 = scmp.eq.s32.totalorder %s28, 1
      %p177 = por %p175, %p176
      %p179 = scmp.ne.s32.totalorder %s164, %s178
      %p180 = scmp.eq.s32.totalorder %s28, 0
      %p181 = por %p179, %p180
      %s183 = sadd.s32 %s182, 1
      %p186 = scmp.eq.s32.totalorder %s22, 1
      %p187 = scmp.ne.s32.totalorder %s182, %s184
      %p188 = scmp.eq.s32.totalorder %s22, 0
      %p189 = por %p187, %p188
      %p190 = scmp.ne.s32.totalorder %s182, %s184
      %p191 = scmp.eq.s32.totalorder %s27, 1
      %p192 = por %p190, %p191
      %p193 = scmp.ne.s32.totalorder %s184, %s185
      %p194 = scmp.eq.s32.totalorder %s27, 0
      %p195 = por %p193, %p194
      %p196 = scmp.ne.s32.totalorder %s184, %s185
      %p197 = scmp.eq.s32.totalorder %s28, 1
      %p198 = por %p196, %p197
      %p200 = scmp.ne.s32.totalorder %s185, %s199
      %p201 = scmp.eq.s32.totalorder %s28, 0
      %p202 = por %p200, %p201
      %s204 = sadd.s32 %s203, 1
      %p207 = scmp.eq.s32.totalorder %s22, 1
      %p208 = scmp.ne.s32.totalorder %s203, %s205
      %p209 = scmp.eq.s32.totalorder %s22, 0
      %p210 = por %p208, %p209
      %p211 = scmp.ne.s32.totalorder %s203, %s205
      %p212 = scmp.eq.s32.totalorder %s27, 1
      %p213 = por %p211, %p212
      %p214 = scmp.ne.s32.totalorder %s205, %s206
      %p215 = scmp.eq.s32.totalorder %s27, 0
      %p216 = por %p214, %p215
      %p217 = scmp.ne.s32.totalorder %s205, %s206
      %p218 = scmp.eq.s32.totalorder %s28, 1
      %p219 = por %p217, %p218
      %p221 = scmp.ne.s32.totalorder %s206, %s220
      %p222 = scmp.eq.s32.totalorder %s28, 0
      %p223 = por %p221, %p222
      %s225 = sadd.s32 %s224, 1
      %p228 = scmp.eq.s32.totalorder %s22, 1
      %p229 = scmp.ne.s32.totalorder %s224, %s226
      %p230 = scmp.eq.s32.totalorder %s22, 0
      %p231 = por %p229, %p230
      %p232 = scmp.ne.s32.totalorder %s224, %s226
      %p233 = scmp.eq.s32.totalorder %s27, 1
      %p234 = por %p232, %p233
      %p235 = scmp.ne.s32.totalorder %s226, %s227
      %p236 = scmp.eq.s32.totalorder %s27, 0
      %p237 = por %p235, %p236
      %p238 = scmp.ne.s32.totalorder %s226, %s227
      %p239 = scmp.eq.s32.totalorder %s28, 1
      %p240 = por %p238, %p239
      %p242 = scmp.ne.s32.totalorder %s227, %s241
      %p243 = scmp.eq.s32.totalorder %s28, 0
      %p244 = por %p242, %p243
      %s246 = sadd.s32 %s245, 1
      %p249 = scmp.eq.s32.totalorder %s22, 1
      %p250 = scmp.ne.s32.totalorder %s245, %s247
      %p251 = scmp.eq.s32.totalorder %s22, 0
      %p252 = por %p250, %p251
      %p253 = scmp.ne.s32.totalorder %s245, %s247
      %p254 = scmp.eq.s32.totalorder %s27, 1
      %p255 = por %p253, %p254
      %p256 = scmp.ne.s32.totalorder %s247, %s248
      %p257 = scmp.eq.s32.totalorder %s27, 0
      %p258 = por %p256, %p257
      %p259 = scmp.ne.s32.totalorder %s247, %s248
      %p260 = scmp.eq.s32.totalorder %s28, 1
      %p261 = por %p259, %p260
      %p263 = scmp.ne.s32.totalorder %s248, %s262
      %p264 = scmp.eq.s32.totalorder %s28, 0
      %p265 = por %p263, %p264
      %s266 = ssub.s32 %s22, %s29
      %p267 = scmp.eq.s32.totalorder %s266, 0
      %s269 = sadd.s32 %s268, 1
      %s270 = scalar_select %p267, %s268, %s269
      %p273 = pneg %p267
      %p274 = scmp.eq.s32.totalorder %s22, 1
      %p275 = por %p273, %p274
      %p276 = scmp.ne.s32.totalorder %s268, %s271
      %p277 = scmp.eq.s32.totalorder %s22, 0
      %p278 = por %p276, %p277
      %p279 = scmp.ne.s32.totalorder %s268, %s271
      %p280 = scmp.eq.s32.totalorder %s27, 1
      %p281 = por %p279, %p280
      %p282 = scmp.ne.s32.totalorder %s271, %s272
      %p283 = scmp.eq.s32.totalorder %s27, 0
      %p284 = por %p282, %p283
      %p285 = scmp.ne.s32.totalorder %s271, %s272
      %p286 = scmp.eq.s32.totalorder %s28, 1
      %p287 = por %p285, %p286
      %p289 = scmp.ne.s32.totalorder %s272, %s288
      %p290 = scmp.eq.s32.totalorder %s28, 0
      %p291 = por %p289, %p290
      %p292 = scmp.le.s32.totalorder 1, %s22
      %p293 = scmp.lt.s32.totalorder %s22, 3
      %p294 = pnand %p292, %p293
      %p295 = pneg %p294
      // Predicated region
      $region9: #{tpu_custom_call.1} parent=5 // pred_check
        _
      $region10: #{tpu_custom_call.1} parent=5 // pred_check_branch
        %297 = sbr.rel (%p294) target = $region12
      $region11: #{tpu_custom_call.1} parent=5 // pred_region
        %s298 = ssub.s32 %s22, 1
        // Predicated region
        $region13: #{tpu_custom_call.1} parent=11 // pred_check
          %p299 = pneg %p69
        $region14: #{tpu_custom_call.1} parent=11 // pred_check_branch
          %301 = sbr.rel (%p299) target = $region16
        $region15: #{tpu_custom_call.1} parent=11 // pred_region
          _
        $region16: #{tpu_custom_call.1} parent=11 // pred_fallthru
          _
        // Predicated region
        $region17: #{tpu_custom_call.1} parent=11 // pred_check
          %p302 = pneg %p90
        $region18: #{tpu_custom_call.1} parent=11 // pred_check_branch
          %304 = sbr.rel (%p302) target = $region20
        $region19: #{tpu_custom_call.1} parent=11 // pred_region
          _
        $region20: #{tpu_custom_call.1} parent=11 // pred_fallthru
          _
        // Predicated region
        $region21: #{tpu_custom_call.1} parent=11 // pred_check
          %p305 = pneg %p111
        $region22: #{tpu_custom_call.1} parent=11 // pred_check_branch
          %307 = sbr.rel (%p305) target = $region24
        $region23: #{tpu_custom_call.1} parent=11 // pred_region
          _
        $region24: #{tpu_custom_call.1} parent=11 // pred_fallthru
          _
        // Predicated region
        $region25: #{tpu_custom_call.1} parent=11 // pred_check
          %p308 = pneg %p132
        $region26: #{tpu_custom_call.1} parent=11 // pred_check_branch
          %310 = sbr.rel (%p308) target = $region28
        $region27: #{tpu_custom_call.1} parent=11 // pred_region
          _
        $region28: #{tpu_custom_call.1} parent=11 // pred_fallthru
          _
        // Predicated region
        $region29: #{tpu_custom_call.1} parent=11 // pred_check
          %p311 = pneg %p153
        $region30: #{tpu_custom_call.1} parent=11 // pred_check_branch
          %313 = sbr.rel (%p311) target = $region32
        $region31: #{tpu_custom_call.1} parent=11 // pred_region
          _
        $region32: #{tpu_custom_call.1} parent=11 // pred_fallthru
          _
        // Predicated region
        $region33: #{tpu_custom_call.1} parent=11 // pred_check
          %p314 = pneg %p174
        $region34: #{tpu_custom_call.1} parent=11 // pred_check_branch
          %316 = sbr.rel (%p314) target = $region36
        $region35: #{tpu_custom_call.1} parent=11 // pred_region
          _
        $region36: #{tpu_custom_call.1} parent=11 // pred_fallthru
          _
        // Predicated region
        $region37: #{tpu_custom_call.1} parent=11 // pred_check
          %p317 = pneg %p195
        $region38: #{tpu_custom_call.1} parent=11 // pred_check_branch
          %319 = sbr.rel (%p317) target = $region40
        $region39: #{tpu_custom_call.1} parent=11 // pred_region
          _
        $region40: #{tpu_custom_call.1} parent=11 // pred_fallthru
          _
        // Predicated region
        $region41: #{tpu_custom_call.1} parent=11 // pred_check
          %p320 = pneg %p216
        $region42: #{tpu_custom_call.1} parent=11 // pred_check_branch
          %322 = sbr.rel (%p320) target = $region44
        $region43: #{tpu_custom_call.1} parent=11 // pred_region
          _
        $region44: #{tpu_custom_call.1} parent=11 // pred_fallthru
          _
        // Predicated region
        $region45: #{tpu_custom_call.1} parent=11 // pred_check
          %p323 = pneg %p237
        $region46: #{tpu_custom_call.1} parent=11 // pred_check_branch
          %325 = sbr.rel (%p323) target = $region48
        $region47: #{tpu_custom_call.1} parent=11 // pred_region
          _
        $region48: #{tpu_custom_call.1} parent=11 // pred_fallthru
          _
        // Predicated region
        $region49: #{tpu_custom_call.1} parent=11 // pred_check
          %p326 = pneg %p258
        $region50: #{tpu_custom_call.1} parent=11 // pred_check_branch
          %328 = sbr.rel (%p326) target = $region52
        $region51: #{tpu_custom_call.1} parent=11 // pred_region
          _
        $region52: #{tpu_custom_call.1} parent=11 // pred_fallthru
          _
      $region12: #{tpu_custom_call.1} parent=5 // pred_fallthru
        _
      %p329 = scmp.lt.s32.totalorder %s22, 2
      // Predicated region
      $region53: #{tpu_custom_call.1} parent=5 // pred_check
        %p330 = pneg %p329
      $region54: #{tpu_custom_call.1} parent=5 // pred_check_branch
        %332 = sbr.rel (%p330) target = $region56
      $region55: #{tpu_custom_call.1} parent=5 // pred_region
        // Predicated region
        $region57: #{tpu_custom_call.1} parent=55 // pred_check
          %p333 = pneg %p42
        $region58: #{tpu_custom_call.1} parent=55 // pred_check_branch
          %335 = sbr.rel (%p333) target = $region60
        $region59: #{tpu_custom_call.1} parent=55 // pred_region
          %s336 = smul.u32 16, %s22
          %p337 = scmp.lt.s32.totalorder %s336, 31
          %s338 = scalar_select %p337, %s336, 31
          %s339 = smul.addr %s338, 8
          %s340 = scalar_lea.vmem %s1, %s339
          %s341 = smul.u32 16, %s22
        $region60: #{tpu_custom_call.1} parent=55 // pred_fallthru
          _
      $region56: #{tpu_custom_call.1} parent=5 // pred_fallthru
        _
      %p342 = scmp.le.s32.totalorder 1, %s22
      %p343 = scmp.lt.s32.totalorder %s22, 3
      %p344 = pnand %p342, %p343
      %p345 = pneg %p344
      // Predicated region
      $region61: #{tpu_custom_call.1} parent=5 // pred_check
        _
      $region62: #{tpu_custom_call.1} parent=5 // pred_check_branch
        %347 = sbr.rel (%p344) target = $region64
      $region63: #{tpu_custom_call.1} parent=5 // pred_region
        %s348 = ssub.s32 %s22, 1
        %s349 = smul.u32 16, %s27
        %p350 = scmp.lt.s32.totalorder %s349, 31
        %s351 = scalar_select %p350, %s349, 31
        %s352 = smul.addr %s351, 8
        %s353 = scalar_lea.vmem %s1, %s352
        %p354 = pneg %p48
        %p355 = pneg %p45
        %p356 = pneg %p69
        %p357 = pneg %p66
        %p358 = pneg %p90
        %p359 = pneg %p87
        %p360 = pneg %p111
        %p361 = pneg %p108
        %p362 = pneg %p132
        %p363 = pneg %p129
        %p364 = pneg %p153
        %p365 = pneg %p150
        %p366 = pneg %p174
        %p367 = pneg %p171
        %p368 = pneg %p195
        %p369 = pneg %p192
        %p370 = pneg %p216
        %p371 = pneg %p213
        %p372 = pneg %p237
        %p373 = pneg %p234
        %p374 = pneg %p258
        %p375 = pneg %p255
        %p376 = pneg %p284
        %p377 = pneg %p281
        %s378 = sand.u32 %s271, 1
        %s379 = scalar_lea.sflag [#allocation5], %s378
        %s380 = sand.u32 %s271, 1
        %s381 = scalar_lea.vmem [#allocation4], %s380
        %s382 = smul.u32 16, %s27
        %p383 = scmp.lt.s32.totalorder %s382, 31
        %s384 = scalar_select %p383, %s382, 31
        %s385 = smul.addr %s384, 8
        %s386 = scalar_lea.vmem %s1, %s385
        %s387 = smul.u32 16, %s27
        %s389 = sld [smem:[#allocation3]]
        %v390 = vld [vmem:[%s386] sm:$0xff]
        %v391 = vld [vmem:[%s386 + $0x8] sm:$0xff]
        %v392 = vld [vmem:[%s386 + $0x10] sm:$0xff]
        %v393 = vld [vmem:[%s386 + $0x18] sm:$0xff]
        %v394 = vld [vmem:[%s386 + $0x20] sm:$0xff]
        %v395 = vld [vmem:[%s386 + $0x28] sm:$0xff]
        %v396 = vld [vmem:[%s386 + $0x30] sm:$0xff]
        %v397 = vld [vmem:[%s386 + $0x38] sm:$0xff]
        %v398 = vld [vmem:[%s386 + $0x40] sm:$0xff]
        %v399 = vld [vmem:[%s386 + $0x48] sm:$0xff]
        %v400 = vld [vmem:[%s386 + $0x50] sm:$0xff]
        %v401 = vld [vmem:[%s386 + $0x58] sm:$0xff]
        %v402 = vld [vmem:[%s386 + $0x60] sm:$0xff]
        %v403 = vld [vmem:[%s386 + $0x68] sm:$0xff]
        %v404 = vld [vmem:[%s386 + $0x70] sm:$0xff]
        %v405 = vld [vmem:[%s386 + $0x78] sm:$0xff]
        %v406 = vpack.c.bf16 %v391, %v390
        %v407 = vpack.c.bf16 %v393, %v392
        %v408 = vpack.c.bf16 %v395, %v394
        %v409 = vpack.c.bf16 %v397, %v396
        %v410 = vpack.c.bf16 %v399, %v398
        %v411 = vpack.c.bf16 %v401, %v400
        %v412 = vpack.c.bf16 %v403, %v402
        %v413 = vpack.c.bf16 %v405, %v404
        %v414 = vld [vmem:[%s2] sm:$0xff]
        %v415 = vld [vmem:[%s2 + $0x8] sm:$0xff]
        %v416 = vld [vmem:[%s2 + $0x10] sm:$0xff]
        %v417 = vld [vmem:[%s2 + $0x18] sm:$0xff]
        %v418 = vld [vmem:[%s2 + $0x20] sm:$0xff]
        %v419 = vld [vmem:[%s2 + $0x28] sm:$0xff]
        %v420 = vld [vmem:[%s2 + $0x30] sm:$0xff]
        %v421 = vld [vmem:[%s2 + $0x38] sm:$0xff]
        %v422 = vld [vmem:[%s3] sm:$0x3]
        %v424 = vlaneseq
        %v425 = vshrl.u32 %v424, 7
        %v426 = vsub.s32 0, %v425
        %v427 = vrot.slane %v422, %v426
        %v428 = vlaneseq
        %v429 = vshrl.u32 %v428, 7
        %v430 = vsub.s32 1, %v429
        %v431 = vrot.slane %v422, %v430
        %v442 = vunpack.c.l.b16 %v414
        %v443 = vunpack.c.h.b16 %v414
        %v444 = vunpack.c.l.b16 %v415
        %v445 = vunpack.c.h.b16 %v415
        %v446 = vunpack.c.l.b16 %v416
        %v447 = vunpack.c.h.b16 %v416
        %v448 = vunpack.c.l.b16 %v417
        %v449 = vunpack.c.h.b16 %v417
        %v450 = vunpack.c.l.b16 %v418
        %v451 = vunpack.c.h.b16 %v418
        %v452 = vunpack.c.l.b16 %v419
        %v453 = vunpack.c.h.b16 %v419
        %v454 = vunpack.c.l.b16 %v420
        %v455 = vunpack.c.h.b16 %v420
        %v456 = vunpack.c.l.b16 %v421
        %v457 = vunpack.c.h.b16 %v421
        %v458 = vpack.c.b16 %v444, %v442
        %v459 = vpack.c.b16 %v445, %v443
        %v460 = vpack.c.b16 %v448, %v446
        %v461 = vpack.c.b16 %v449, %v447
        %v462 = vpack.c.b16 %v452, %v450
        %v463 = vpack.c.b16 %v453, %v451
        %v464 = vpack.c.b16 %v456, %v454
        %v465 = vpack.c.b16 %v457, %v455
        %vm474 = vcmask 523264
        %v476 = vsel %vm474, %v406, 0
        %v479 = vsel %vm474, %v407, 0
        %v482 = vsel %vm474, %v408, 0
        %v485 = vsel %vm474, %v409, 0
        %v488 = vsel %vm474, %v410, 0
        %v491 = vsel %vm474, %v411, 0
        %v494 = vsel %vm474, %v412, 0
        %v497 = vsel %vm474, %v413, 0
        %499 = vmatprep.subr.bf16.mxu0 0
        %500 = vmatpush1.bf16.msra.mxu0 0
        %501 = vmatprep.subr.bf16.mxu0 0
        %502 = vmatpush1.bf16.msra.mxu0 0
        %503 = vmatprep.subr.bf16.mxu0 0
        %504 = vmatpush1.bf16.msra.mxu0 0
        %505 = vmatprep.subr.bf16.mxu0 0
        %506 = vmatpush1.bf16.msra.mxu0 0
        %507 = vmatprep.subr.bf16.mxu0 %v465
        %508 = vmatpush1.bf16.msra.mxu0 %v464
        %509 = vmatprep.subr.bf16.mxu0 %v463
        %510 = vmatpush1.bf16.msra.mxu0 %v462
        %511 = vmatprep.subr.bf16.mxu0 %v461
        %512 = vmatpush1.bf16.msra.mxu0 %v460
        %513 = vmatprep.subr.bf16.mxu0 %v459
        %514 = vmatpush1.bf16.msra.mxu0 %v458
        %515 = vmatprep.subr.bf16.mxu0 0
        %516 = vmatpush2.bf16.msra.mxu0 0
        %517 = vmatprep.subr.bf16.mxu0 0
        %518 = vmatpush2.bf16.msra.mxu0 0
        %519 = vmatprep.subr.bf16.mxu0 0
        %520 = vmatpush2.bf16.msra.mxu0 0
        %521 = vmatprep.subr.bf16.mxu0 0
        %522 = vmatpush2.bf16.msra.mxu0 0
        %523 = vmatprep.subr.bf16.mxu0 0
        %524 = vmatpush2.bf16.msra.mxu0 0
        %525 = vmatprep.subr.bf16.mxu0 0
        %526 = vmatpush2.bf16.msra.mxu0 0
        %527 = vmatprep.subr.bf16.mxu0 0
        %528 = vmatpush2.bf16.msra.mxu0 0
        %529 = vmatprep.subr.bf16.mxu0 0
        %530 = vmatpush2.bf16.msra.mxu0 0
        %531 = vmatprep.mubr.bf16.mxu0 0
        %532 = vmatmul.mubr.bf16.gmra.mxu0 %v476
        %v533 = vpop.f32.mrf.mxu0
        %v534 = vadd.f32 %v427, %v533
        %v535 = vpop.f32.mrf.mxu0
        %v536 = vadd.f32 %v431, %v535
        %v537 = vpop.f32.mrf.mxu0
        %v538 = vadd.f32 %v427, %v537
        %v539 = vpop.f32.mrf.mxu0
        %v540 = vadd.f32 %v431, %v539
        %541 = vmatprep.mubr.bf16.mxu0 0
        %542 = vmatmul.mubr.bf16.gmra.mxu0 %v479
        %v543 = vpop.f32.mrf.mxu0
        %v544 = vadd.f32 %v427, %v543
        %v545 = vpop.f32.mrf.mxu0
        %v546 = vadd.f32 %v431, %v545
        %v547 = vpop.f32.mrf.mxu0
        %v548 = vadd.f32 %v427, %v547
        %v549 = vpop.f32.mrf.mxu0
        %v550 = vadd.f32 %v431, %v549
        %551 = vmatprep.mubr.bf16.mxu0 0
        %552 = vmatmul.mubr.bf16.gmra.mxu0 %v482
        %v553 = vpop.f32.mrf.mxu0
        %v554 = vadd.f32 %v427, %v553
        %v555 = vpop.f32.mrf.mxu0
        %v556 = vadd.f32 %v431, %v555
        %v557 = vpop.f32.mrf.mxu0
        %v558 = vadd.f32 %v427, %v557
        %v559 = vpop.f32.mrf.mxu0
        %v560 = vadd.f32 %v431, %v559
        %561 = vmatprep.mubr.bf16.mxu0 0
        %562 = vmatmul.mubr.bf16.gmra.mxu0 %v485
        %v563 = vpop.f32.mrf.mxu0
        %v564 = vadd.f32 %v427, %v563
        %v565 = vpop.f32.mrf.mxu0
        %v566 = vadd.f32 %v431, %v565
        %v567 = vpop.f32.mrf.mxu0
        %v568 = vadd.f32 %v427, %v567
        %v569 = vpop.f32.mrf.mxu0
        %v570 = vadd.f32 %v431, %v569
        %571 = vmatprep.mubr.bf16.mxu0 0
        %572 = vmatmul.mubr.bf16.gmra.mxu0 %v488
        %v573 = vpop.f32.mrf.mxu0
        %v574 = vadd.f32 %v427, %v573
        %v575 = vpop.f32.mrf.mxu0
        %v576 = vadd.f32 %v431, %v575
        %v577 = vpop.f32.mrf.mxu0
        %v578 = vadd.f32 %v427, %v577
        %v579 = vpop.f32.mrf.mxu0
        %v580 = vadd.f32 %v431, %v579
        %581 = vmatprep.mubr.bf16.mxu0 0
        %582 = vmatmul.mubr.bf16.gmra.mxu0 %v491
        %v583 = vpop.f32.mrf.mxu0
        %v584 = vadd.f32 %v427, %v583
        %v585 = vpop.f32.mrf.mxu0
        %v586 = vadd.f32 %v431, %v585
        %v587 = vpop.f32.mrf.mxu0
        %v588 = vadd.f32 %v427, %v587
        %v589 = vpop.f32.mrf.mxu0
        %v590 = vadd.f32 %v431, %v589
        %591 = vmatprep.mubr.bf16.mxu0 0
        %592 = vmatmul.mubr.bf16.gmra.mxu0 %v494
        %v593 = vpop.f32.mrf.mxu0
        %v594 = vadd.f32 %v427, %v593
        %v595 = vpop.f32.mrf.mxu0
        %v596 = vadd.f32 %v431, %v595
        %v597 = vpop.f32.mrf.mxu0
        %v598 = vadd.f32 %v427, %v597
        %v599 = vpop.f32.mrf.mxu0
        %v600 = vadd.f32 %v431, %v599
        %601 = vmatprep.mubr.bf16.mxu0 0
        %602 = vmatmul.mubr.bf16.gmra.mxu0 %v497
        %v603 = vpop.f32.mrf.mxu0
        %v604 = vadd.f32 %v427, %v603
        %v605 = vpop.f32.mrf.mxu0
        %v606 = vadd.f32 %v431, %v605
        %v607 = vpop.f32.mrf.mxu0
        %v608 = vadd.f32 %v427, %v607
        %v609 = vpop.f32.mrf.mxu0
        %v610 = vadd.f32 %v431, %v609
        %611 = vdwg.mxu0
        %vm612 = vcmp.ge.f32.partialorder %v534, 0.0
        %vm613 = vcmp.ge.f32.partialorder %v536, 0.0
        %vm614 = vcmp.ge.f32.partialorder %v538, 0.0
        %vm615 = vcmp.ge.f32.partialorder %v540, 0.0
        %vm616 = vcmp.ge.f32.partialorder %v544, 0.0
        %vm617 = vcmp.ge.f32.partialorder %v546, 0.0
        %vm618 = vcmp.ge.f32.partialorder %v548, 0.0
        %vm619 = vcmp.ge.f32.partialorder %v550, 0.0
        %vm620 = vcmp.ge.f32.partialorder %v554, 0.0
        %vm621 = vcmp.ge.f32.partialorder %v556, 0.0
        %vm622 = vcmp.ge.f32.partialorder %v558, 0.0
        %vm623 = vcmp.ge.f32.partialorder %v560, 0.0
        %vm624 = vcmp.ge.f32.partialorder %v564, 0.0
        %vm625 = vcmp.ge.f32.partialorder %v566, 0.0
        %vm626 = vcmp.ge.f32.partialorder %v568, 0.0
        %vm627 = vcmp.ge.f32.partialorder %v570, 0.0
        %vm628 = vcmp.ge.f32.partialorder %v574, 0.0
        %vm629 = vcmp.ge.f32.partialorder %v576, 0.0
        %vm630 = vcmp.ge.f32.partialorder %v578, 0.0
        %vm631 = vcmp.ge.f32.partialorder %v580, 0.0
        %vm632 = vcmp.ge.f32.partialorder %v584, 0.0
        %vm633 = vcmp.ge.f32.partialorder %v586, 0.0
        %vm634 = vcmp.ge.f32.partialorder %v588, 0.0
        %vm635 = vcmp.ge.f32.partialorder %v590, 0.0
        %vm636 = vcmp.ge.f32.partialorder %v594, 0.0
        %vm637 = vcmp.ge.f32.partialorder %v596, 0.0
        %vm638 = vcmp.ge.f32.partialorder %v598, 0.0
        %vm639 = vcmp.ge.f32.partialorder %v600, 0.0
        %vm640 = vcmp.ge.f32.partialorder %v604, 0.0
        %vm641 = vcmp.ge.f32.partialorder %v606, 0.0
        %vm642 = vcmp.ge.f32.partialorder %v608, 0.0
        %vm643 = vcmp.ge.f32.partialorder %v610, 0.0
        %v644 = vmul.f32 %v534, 0.01
        %v645 = vmul.f32 %v536, 0.01
        %v646 = vmul.f32 %v538, 0.01
        %v647 = vmul.f32 %v540, 0.01
        %v648 = vmul.f32 %v544, 0.01
        %v649 = vmul.f32 %v546, 0.01
        %v650 = vmul.f32 %v548, 0.01
        %v651 = vmul.f32 %v550, 0.01
        %v652 = vmul.f32 %v554, 0.01
        %v653 = vmul.f32 %v556, 0.01
        %v654 = vmul.f32 %v558, 0.01
        %v655 = vmul.f32 %v560, 0.01
        %v656 = vmul.f32 %v564, 0.01
        %v657 = vmul.f32 %v566, 0.01
        %v658 = vmul.f32 %v568, 0.01
        %v659 = vmul.f32 %v570, 0.01
        %v660 = vmul.f32 %v574, 0.01
        %v661 = vmul.f32 %v576, 0.01
        %v662 = vmul.f32 %v578, 0.01
        %v663 = vmul.f32 %v580, 0.01
        %v664 = vmul.f32 %v584, 0.01
        %v665 = vmul.f32 %v586, 0.01
        %v666 = vmul.f32 %v588, 0.01
        %v667 = vmul.f32 %v590, 0.01
        %v668 = vmul.f32 %v594, 0.01
        %v669 = vmul.f32 %v596, 0.01
        %v670 = vmul.f32 %v598, 0.01
        %v671 = vmul.f32 %v600, 0.01
        %v672 = vmul.f32 %v604, 0.01
        %v673 = vmul.f32 %v606, 0.01
        %v674 = vmul.f32 %v608, 0.01
        %v675 = vmul.f32 %v610, 0.01
        %v676 = vsel %vm612, %v534, %v644
        %v677 = vsel %vm613, %v536, %v645
        %v678 = vsel %vm614, %v538, %v646
        %v679 = vsel %vm615, %v540, %v647
        %v680 = vsel %vm616, %v544, %v648
        %v681 = vsel %vm617, %v546, %v649
        %v682 = vsel %vm618, %v548, %v650
        %v683 = vsel %vm619, %v550, %v651
        %v684 = vsel %vm620, %v554, %v652
        %v685 = vsel %vm621, %v556, %v653
        %v686 = vsel %vm622, %v558, %v654
        %v687 = vsel %vm623, %v560, %v655
        %v688 = vsel %vm624, %v564, %v656
        %v689 = vsel %vm625, %v566, %v657
        %v690 = vsel %vm626, %v568, %v658
        %v691 = vsel %vm627, %v570, %v659
        %v692 = vsel %vm628, %v574, %v660
        %v693 = vsel %vm629, %v576, %v661
        %v694 = vsel %vm630, %v578, %v662
        %v695 = vsel %vm631, %v580, %v663
        %v696 = vsel %vm632, %v584, %v664
        %v697 = vsel %vm633, %v586, %v665
        %v698 = vsel %vm634, %v588, %v666
        %v699 = vsel %vm635, %v590, %v667
        %v700 = vsel %vm636, %v594, %v668
        %v701 = vsel %vm637, %v596, %v669
        %v702 = vsel %vm638, %v598, %v670
        %v703 = vsel %vm639, %v600, %v671
        %v704 = vsel %vm640, %v604, %v672
        %v705 = vsel %vm641, %v606, %v673
        %v706 = vsel %vm642, %v608, %v674
        %v707 = vsel %vm643, %v610, %v675
        %v708 = vlaneseq
        %v709 = vshrl.u32 %v708, 7
        %v710 = vadd.s32 %v709, 8
        %v711 = vadd.s32 %v709, 16
        %v712 = vadd.s32 %v709, 24
        %v713 = vadd.s32 %v709, 32
        %v714 = vadd.s32 %v709, 40
        %v715 = vadd.s32 %v709, 48
        %v716 = vadd.s32 %v709, 56
        %v717 = vadd.s32 %v709, 64
        %v718 = vadd.s32 %v709, 72
        %v719 = vadd.s32 %v709, 80
        %v720 = vadd.s32 %v709, 88
        %v721 = vadd.s32 %v709, 96
        %v722 = vadd.s32 %v709, 104
        %v723 = vadd.s32 %v709, 112
        %v724 = vadd.s32 %v709, 120
        %v725 = vlaneseq
        %v726 = vand.u32 %v725, 127
        %v727 = vadd.s32 %v726, 128
        %s728 = sxor.u32 %s389, 1663821211
        %s729 = smul.u32 %s27, 461845907
        %s730 = sxor.u32 %s728, %s729
        %v731 = vmul.u32 %v709, 625341585
        %v732 = vmul.u32 %v710, 625341585
        %v733 = vmul.u32 %v711, 625341585
        %v734 = vmul.u32 %v712, 625341585
        %v735 = vmul.u32 %v713, 625341585
        %v736 = vmul.u32 %v714, 625341585
        %v737 = vmul.u32 %v715, 625341585
        %v738 = vmul.u32 %v716, 625341585
        %v739 = vmul.u32 %v717, 625341585
        %v740 = vmul.u32 %v718, 625341585
        %v741 = vmul.u32 %v719, 625341585
        %v742 = vmul.u32 %v720, 625341585
        %v743 = vmul.u32 %v721, 625341585
        %v744 = vmul.u32 %v722, 625341585
        %v745 = vmul.u32 %v723, 625341585
        %v746 = vmul.u32 %v724, 625341585
        %v747 = vstv %s730
        %v748 = vadd.s32 %v747, %v731
        %v749 = vadd.s32 %v747, %v732
        %v750 = vadd.s32 %v747, %v733
        %v751 = vadd.s32 %v747, %v734
        %v752 = vadd.s32 %v747, %v735
        %v753 = vadd.s32 %v747, %v736
        %v754 = vadd.s32 %v747, %v737
        %v755 = vadd.s32 %v747, %v738
        %v756 = vadd.s32 %v747, %v739
        %v757 = vadd.s32 %v747, %v740
        %v758 = vadd.s32 %v747, %v741
        %v759 = vadd.s32 %v747, %v742
        %v760 = vadd.s32 %v747, %v743
        %v761 = vadd.s32 %v747, %v744
        %v762 = vadd.s32 %v747, %v745
        %v763 = vadd.s32 %v747, %v746
        %v764 = vmul.u32 %v726, 668265263
        %v765 = vmul.u32 %v727, 668265263
        %v766 = vadd.s32 %v748, %v764
        %v767 = vadd.s32 %v748, %v765
        %v768 = vadd.s32 %v749, %v764
        %v769 = vadd.s32 %v749, %v765
        %v770 = vadd.s32 %v750, %v764
        %v771 = vadd.s32 %v750, %v765
        %v772 = vadd.s32 %v751, %v764
        %v773 = vadd.s32 %v751, %v765
        %v774 = vadd.s32 %v752, %v764
        %v775 = vadd.s32 %v752, %v765
        %v776 = vadd.s32 %v753, %v764
        %v777 = vadd.s32 %v753, %v765
        %v778 = vadd.s32 %v754, %v764
        %v779 = vadd.s32 %v754, %v765
        %v780 = vadd.s32 %v755, %v764
        %v781 = vadd.s32 %v755, %v765
        %v782 = vadd.s32 %v756, %v764
        %v783 = vadd.s32 %v756, %v765
        %v784 = vadd.s32 %v757, %v764
        %v785 = vadd.s32 %v757, %v765
        %v786 = vadd.s32 %v758, %v764
        %v787 = vadd.s32 %v758, %v765
        %v788 = vadd.s32 %v759, %v764
        %v789 = vadd.s32 %v759, %v765
        %v790 = vadd.s32 %v760, %v764
        %v791 = vadd.s32 %v760, %v765
        %v792 = vadd.s32 %v761, %v764
        %v793 = vadd.s32 %v761, %v765
        %v794 = vadd.s32 %v762, %v764
        %v795 = vadd.s32 %v762, %v765
        %v796 = vadd.s32 %v763, %v764
        %v797 = vadd.s32 %v763, %v765
        %v798 = vshra.s32 %v766, 16
        %v799 = vshra.s32 %v767, 16
        %v800 = vshra.s32 %v768, 16
        %v801 = vshra.s32 %v769, 16
        %v802 = vshra.s32 %v770, 16
        %v803 = vshra.s32 %v771, 16
        %v804 = vshra.s32 %v772, 16
        %v805 = vshra.s32 %v773, 16
        %v806 = vshra.s32 %v774, 16
        %v807 = vshra.s32 %v775, 16
        %v808 = vshra.s32 %v776, 16
        %v809 = vshra.s32 %v777, 16
        %v810 = vshra.s32 %v778, 16
        %v811 = vshra.s32 %v779, 16
        %v812 = vshra.s32 %v780, 16
        %v813 = vshra.s32 %v781, 16
        %v814 = vshra.s32 %v782, 16
        %v815 = vshra.s32 %v783, 16
        %v816 = vshra.s32 %v784, 16
        %v817 = vshra.s32 %v785, 16
        %v818 = vshra.s32 %v786, 16
        %v819 = vshra.s32 %v787, 16
        %v820 = vshra.s32 %v788, 16
        %v821 = vshra.s32 %v789, 16
        %v822 = vshra.s32 %v790, 16
        %v823 = vshra.s32 %v791, 16
        %v824 = vshra.s32 %v792, 16
        %v825 = vshra.s32 %v793, 16
        %v826 = vshra.s32 %v794, 16
        %v827 = vshra.s32 %v795, 16
        %v828 = vshra.s32 %v796, 16
        %v829 = vshra.s32 %v797, 16
        %v830 = vxor.u32 %v766, %v798
        %v831 = vxor.u32 %v767, %v799
        %v832 = vxor.u32 %v768, %v800
        %v833 = vxor.u32 %v769, %v801
        %v834 = vxor.u32 %v770, %v802
        %v835 = vxor.u32 %v771, %v803
        %v836 = vxor.u32 %v772, %v804
        %v837 = vxor.u32 %v773, %v805
        %v838 = vxor.u32 %v774, %v806
        %v839 = vxor.u32 %v775, %v807
        %v840 = vxor.u32 %v776, %v808
        %v841 = vxor.u32 %v777, %v809
        %v842 = vxor.u32 %v778, %v810
        %v843 = vxor.u32 %v779, %v811
        %v844 = vxor.u32 %v780, %v812
        %v845 = vxor.u32 %v781, %v813
        %v846 = vxor.u32 %v782, %v814
        %v847 = vxor.u32 %v783, %v815
        %v848 = vxor.u32 %v784, %v816
        %v849 = vxor.u32 %v785, %v817
        %v850 = vxor.u32 %v786, %v818
        %v851 = vxor.u32 %v787, %v819
        %v852 = vxor.u32 %v788, %v820
        %v853 = vxor.u32 %v789, %v821
        %v854 = vxor.u32 %v790, %v822
        %v855 = vxor.u32 %v791, %v823
        %v856 = vxor.u32 %v792, %v824
        %v857 = vxor.u32 %v793, %v825
        %v858 = vxor.u32 %v794, %v826
        %v859 = vxor.u32 %v795, %v827
        %v860 = vxor.u32 %v796, %v828
        %v861 = vxor.u32 %v797, %v829
        %v862 = vmul.u32 %v830, 739982445
        %v863 = vmul.u32 %v831, 739982445
        %v864 = vmul.u32 %v832, 739982445
        %v865 = vmul.u32 %v833, 739982445
        %v866 = vmul.u32 %v834, 739982445
        %v867 = vmul.u32 %v835, 739982445
        %v868 = vmul.u32 %v836, 739982445
        %v869 = vmul.u32 %v837, 739982445
        %v870 = vmul.u32 %v838, 739982445
        %v871 = vmul.u32 %v839, 739982445
        %v872 = vmul.u32 %v840, 739982445
        %v873 = vmul.u32 %v841, 739982445
        %v874 = vmul.u32 %v842, 739982445
        %v875 = vmul.u32 %v843, 739982445
        %v876 = vmul.u32 %v844, 739982445
        %v877 = vmul.u32 %v845, 739982445
        %v878 = vmul.u32 %v846, 739982445
        %v879 = vmul.u32 %v847, 739982445
        %v880 = vmul.u32 %v848, 739982445
        %v881 = vmul.u32 %v849, 739982445
        %v882 = vmul.u32 %v850, 739982445
        %v883 = vmul.u32 %v851, 739982445
        %v884 = vmul.u32 %v852, 739982445
        %v885 = vmul.u32 %v853, 739982445
        %v886 = vmul.u32 %v854, 739982445
        %v887 = vmul.u32 %v855, 739982445
        %v888 = vmul.u32 %v856, 739982445
        %v889 = vmul.u32 %v857, 739982445
        %v890 = vmul.u32 %v858, 739982445
        %v891 = vmul.u32 %v859, 739982445
        %v892 = vmul.u32 %v860, 739982445
        %v893 = vmul.u32 %v861, 739982445
        %v894 = vshra.s32 %v862, 13
        %v895 = vshra.s32 %v863, 13
        %v896 = vshra.s32 %v864, 13
        %v897 = vshra.s32 %v865, 13
        %v898 = vshra.s32 %v866, 13
        %v899 = vshra.s32 %v867, 13
        %v900 = vshra.s32 %v868, 13
        %v901 = vshra.s32 %v869, 13
        %v902 = vshra.s32 %v870, 13
        %v903 = vshra.s32 %v871, 13
        %v904 = vshra.s32 %v872, 13
        %v905 = vshra.s32 %v873, 13
        %v906 = vshra.s32 %v874, 13
        %v907 = vshra.s32 %v875, 13
        %v908 = vshra.s32 %v876, 13
        %v909 = vshra.s32 %v877, 13
        %v910 = vshra.s32 %v878, 13
        %v911 = vshra.s32 %v879, 13
        %v912 = vshra.s32 %v880, 13
        %v913 = vshra.s32 %v881, 13
        %v914 = vshra.s32 %v882, 13
        %v915 = vshra.s32 %v883, 13
        %v916 = vshra.s32 %v884, 13
        %v917 = vshra.s32 %v885, 13
        %v918 = vshra.s32 %v886, 13
        %v919 = vshra.s32 %v887, 13
        %v920 = vshra.s32 %v888, 13
        %v921 = vshra.s32 %v889, 13
        %v922 = vshra.s32 %v890, 13
        %v923 = vshra.s32 %v891, 13
        %v924 = vshra.s32 %v892, 13
        %v925 = vshra.s32 %v893, 13
        %v926 = vxor.u32 %v862, %v894
        %v927 = vxor.u32 %v863, %v895
        %v928 = vxor.u32 %v864, %v896
        %v929 = vxor.u32 %v865, %v897
        %v930 = vxor.u32 %v866, %v898
        %v931 = vxor.u32 %v867, %v899
        %v932 = vxor.u32 %v868, %v900
        %v933 = vxor.u32 %v869, %v901
        %v934 = vxor.u32 %v870, %v902
        %v935 = vxor.u32 %v871, %v903
        %v936 = vxor.u32 %v872, %v904
        %v937 = vxor.u32 %v873, %v905
        %v938 = vxor.u32 %v874, %v906
        %v939 = vxor.u32 %v875, %v907
        %v940 = vxor.u32 %v876, %v908
        %v941 = vxor.u32 %v877, %v909
        %v942 = vxor.u32 %v878, %v910
        %v943 = vxor.u32 %v879, %v911
        %v944 = vxor.u32 %v880, %v912
        %v945 = vxor.u32 %v881, %v913
        %v946 = vxor.u32 %v882, %v914
        %v947 = vxor.u32 %v883, %v915
        %v948 = vxor.u32 %v884, %v916
        %v949 = vxor.u32 %v885, %v917
        %v950 = vxor.u32 %v886, %v918
        %v951 = vxor.u32 %v887, %v919
        %v952 = vxor.u32 %v888, %v920
        %v953 = vxor.u32 %v889, %v921
        %v954 = vxor.u32 %v890, %v922
        %v955 = vxor.u32 %v891, %v923
        %v956 = vxor.u32 %v892, %v924
        %v957 = vxor.u32 %v893, %v925
        %v958 = vmul.u32 %v926, 695872825
        %v959 = vmul.u32 %v927, 695872825
        %v960 = vmul.u32 %v928, 695872825
        %v961 = vmul.u32 %v929, 695872825
        %v962 = vmul.u32 %v930, 695872825
        %v963 = vmul.u32 %v931, 695872825
        %v964 = vmul.u32 %v932, 695872825
        %v965 = vmul.u32 %v933, 695872825
        %v966 = vmul.u32 %v934, 695872825
        %v967 = vmul.u32 %v935, 695872825
        %v968 = vmul.u32 %v936, 695872825
        %v969 = vmul.u32 %v937, 695872825
        %v970 = vmul.u32 %v938, 695872825
        %v971 = vmul.u32 %v939, 695872825
        %v972 = vmul.u32 %v940, 695872825
        %v973 = vmul.u32 %v941, 695872825
        %v974 = vmul.u32 %v942, 695872825
        %v975 = vmul.u32 %v943, 695872825
        %v976 = vmul.u32 %v944, 695872825
        %v977 = vmul.u32 %v945, 695872825
        %v978 = vmul.u32 %v946, 695872825
        %v979 = vmul.u32 %v947, 695872825
        %v980 = vmul.u32 %v948, 695872825
        %v981 = vmul.u32 %v949, 695872825
        %v982 = vmul.u32 %v950, 695872825
        %v983 = vmul.u32 %v951, 695872825
        %v984 = vmul.u32 %v952, 695872825
        %v985 = vmul.u32 %v953, 695872825
        %v986 = vmul.u32 %v954, 695872825
        %v987 = vmul.u32 %v955, 695872825
        %v988 = vmul.u32 %v956, 695872825
        %v989 = vmul.u32 %v957, 695872825
        %v990 = vshra.s32 %v958, 16
        %v991 = vshra.s32 %v959, 16
        %v992 = vshra.s32 %v960, 16
        %v993 = vshra.s32 %v961, 16
        %v994 = vshra.s32 %v962, 16
        %v995 = vshra.s32 %v963, 16
        %v996 = vshra.s32 %v964, 16
        %v997 = vshra.s32 %v965, 16
        %v998 = vshra.s32 %v966, 16
        %v999 = vshra.s32 %v967, 16
        %v1000 = vshra.s32 %v968, 16
        %v1001 = vshra.s32 %v969, 16
        %v1002 = vshra.s32 %v970, 16
        %v1003 = vshra.s32 %v971, 16
        %v1004 = vshra.s32 %v972, 16
        %v1005 = vshra.s32 %v973, 16
        %v1006 = vshra.s32 %v974, 16
        %v1007 = vshra.s32 %v975, 16
        %v1008 = vshra.s32 %v976, 16
        %v1009 = vshra.s32 %v977, 16
        %v1010 = vshra.s32 %v978, 16
        %v1011 = vshra.s32 %v979, 16
        %v1012 = vshra.s32 %v980, 16
        %v1013 = vshra.s32 %v981, 16
        %v1014 = vshra.s32 %v982, 16
        %v1015 = vshra.s32 %v983, 16
        %v1016 = vshra.s32 %v984, 16
        %v1017 = vshra.s32 %v985, 16
        %v1018 = vshra.s32 %v986, 16
        %v1019 = vshra.s32 %v987, 16
        %v1020 = vshra.s32 %v988, 16
        %v1021 = vshra.s32 %v989, 16
        %v1022 = vxor.u32 %v958, %v990
        %v1023 = vxor.u32 %v959, %v991
        %v1024 = vxor.u32 %v960, %v992
        %v1025 = vxor.u32 %v961, %v993
        %v1026 = vxor.u32 %v962, %v994
        %v1027 = vxor.u32 %v963, %v995
        %v1028 = vxor.u32 %v964, %v996
        %v1029 = vxor.u32 %v965, %v997
        %v1030 = vxor.u32 %v966, %v998
        %v1031 = vxor.u32 %v967, %v999
        %v1032 = vxor.u32 %v968, %v1000
        %v1033 = vxor.u32 %v969, %v1001
        %v1034 = vxor.u32 %v970, %v1002
        %v1035 = vxor.u32 %v971, %v1003
        %v1036 = vxor.u32 %v972, %v1004
        %v1037 = vxor.u32 %v973, %v1005
        %v1038 = vxor.u32 %v974, %v1006
        %v1039 = vxor.u32 %v975, %v1007
        %v1040 = vxor.u32 %v976, %v1008
        %v1041 = vxor.u32 %v977, %v1009
        %v1042 = vxor.u32 %v978, %v1010
        %v1043 = vxor.u32 %v979, %v1011
        %v1044 = vxor.u32 %v980, %v1012
        %v1045 = vxor.u32 %v981, %v1013
        %v1046 = vxor.u32 %v982, %v1014
        %v1047 = vxor.u32 %v983, %v1015
        %v1048 = vxor.u32 %v984, %v1016
        %v1049 = vxor.u32 %v985, %v1017
        %v1050 = vxor.u32 %v986, %v1018
        %v1051 = vxor.u32 %v987, %v1019
        %v1052 = vxor.u32 %v988, %v1020
        %v1053 = vxor.u32 %v989, %v1021
        %v1054 = vand.u32 %v1022, 16777215
        %v1055 = vand.u32 %v1023, 16777215
        %v1056 = vand.u32 %v1024, 16777215
        %v1057 = vand.u32 %v1025, 16777215
        %v1058 = vand.u32 %v1026, 16777215
        %v1059 = vand.u32 %v1027, 16777215
        %v1060 = vand.u32 %v1028, 16777215
        %v1061 = vand.u32 %v1029, 16777215
        %v1062 = vand.u32 %v1030, 16777215
        %v1063 = vand.u32 %v1031, 16777215
        %v1064 = vand.u32 %v1032, 16777215
        %v1065 = vand.u32 %v1033, 16777215
        %v1066 = vand.u32 %v1034, 16777215
        %v1067 = vand.u32 %v1035, 16777215
        %v1068 = vand.u32 %v1036, 16777215
        %v1069 = vand.u32 %v1037, 16777215
        %v1070 = vand.u32 %v1038, 16777215
        %v1071 = vand.u32 %v1039, 16777215
        %v1072 = vand.u32 %v1040, 16777215
        %v1073 = vand.u32 %v1041, 16777215
        %v1074 = vand.u32 %v1042, 16777215
        %v1075 = vand.u32 %v1043, 16777215
        %v1076 = vand.u32 %v1044, 16777215
        %v1077 = vand.u32 %v1045, 16777215
        %v1078 = vand.u32 %v1046, 16777215
        %v1079 = vand.u32 %v1047, 16777215
        %v1080 = vand.u32 %v1048, 16777215
        %v1081 = vand.u32 %v1049, 16777215
        %v1082 = vand.u32 %v1050, 16777215
        %v1083 = vand.u32 %v1051, 16777215
        %v1084 = vand.u32 %v1052, 16777215
        %v1085 = vand.u32 %v1053, 16777215
        %vm1086 = vcmp.lt.s32.totalorder %v1054, 13421773
        %vm1087 = vcmp.lt.s32.totalorder %v1055, 13421773
        %vm1088 = vcmp.lt.s32.totalorder %v1056, 13421773
        %vm1089 = vcmp.lt.s32.totalorder %v1057, 13421773
        %vm1090 = vcmp.lt.s32.totalorder %v1058, 13421773
        %vm1091 = vcmp.lt.s32.totalorder %v1059, 13421773
        %vm1092 = vcmp.lt.s32.totalorder %v1060, 13421773
        %vm1093 = vcmp.lt.s32.totalorder %v1061, 13421773
        %vm1094 = vcmp.lt.s32.totalorder %v1062, 13421773
        %vm1095 = vcmp.lt.s32.totalorder %v1063, 13421773
        %vm1096 = vcmp.lt.s32.totalorder %v1064, 13421773
        %vm1097 = vcmp.lt.s32.totalorder %v1065, 13421773
        %vm1098 = vcmp.lt.s32.totalorder %v1066, 13421773
        %vm1099 = vcmp.lt.s32.totalorder %v1067, 13421773
        %vm1100 = vcmp.lt.s32.totalorder %v1068, 13421773
        %vm1101 = vcmp.lt.s32.totalorder %v1069, 13421773
        %vm1102 = vcmp.lt.s32.totalorder %v1070, 13421773
        %vm1103 = vcmp.lt.s32.totalorder %v1071, 13421773
        %vm1104 = vcmp.lt.s32.totalorder %v1072, 13421773
        %vm1105 = vcmp.lt.s32.totalorder %v1073, 13421773
        %vm1106 = vcmp.lt.s32.totalorder %v1074, 13421773
        %vm1107 = vcmp.lt.s32.totalorder %v1075, 13421773
        %vm1108 = vcmp.lt.s32.totalorder %v1076, 13421773
        %vm1109 = vcmp.lt.s32.totalorder %v1077, 13421773
        %vm1110 = vcmp.lt.s32.totalorder %v1078, 13421773
        %vm1111 = vcmp.lt.s32.totalorder %v1079, 13421773
        %vm1112 = vcmp.lt.s32.totalorder %v1080, 13421773
        %vm1113 = vcmp.lt.s32.totalorder %v1081, 13421773
        %vm1114 = vcmp.lt.s32.totalorder %v1082, 13421773
        %vm1115 = vcmp.lt.s32.totalorder %v1083, 13421773
        %vm1116 = vcmp.lt.s32.totalorder %v1084, 13421773
        %vm1117 = vcmp.lt.s32.totalorder %v1085, 13421773
        %v1118 = vmul.f32 %v676, 1.25
        %v1119 = vmul.f32 %v677, 1.25
        %v1120 = vmul.f32 %v678, 1.25
        %v1121 = vmul.f32 %v679, 1.25
        %v1122 = vmul.f32 %v680, 1.25
        %v1123 = vmul.f32 %v681, 1.25
        %v1124 = vmul.f32 %v682, 1.25
        %v1125 = vmul.f32 %v683, 1.25
        %v1126 = vmul.f32 %v684, 1.25
        %v1127 = vmul.f32 %v685, 1.25
        %v1128 = vmul.f32 %v686, 1.25
        %v1129 = vmul.f32 %v687, 1.25
        %v1130 = vmul.f32 %v688, 1.25
        %v1131 = vmul.f32 %v689, 1.25
        %v1132 = vmul.f32 %v690, 1.25
        %v1133 = vmul.f32 %v691, 1.25
        %v1134 = vmul.f32 %v692, 1.25
        %v1135 = vmul.f32 %v693, 1.25
        %v1136 = vmul.f32 %v694, 1.25
        %v1137 = vmul.f32 %v695, 1.25
        %v1138 = vmul.f32 %v696, 1.25
        %v1139 = vmul.f32 %v697, 1.25
        %v1140 = vmul.f32 %v698, 1.25
        %v1141 = vmul.f32 %v699, 1.25
        %v1142 = vmul.f32 %v700, 1.25
        %v1143 = vmul.f32 %v701, 1.25
        %v1144 = vmul.f32 %v702, 1.25
        %v1145 = vmul.f32 %v703, 1.25
        %v1146 = vmul.f32 %v704, 1.25
        %v1147 = vmul.f32 %v705, 1.25
        %v1148 = vmul.f32 %v706, 1.25
        %v1149 = vmul.f32 %v707, 1.25
        %v1150 = vsel %vm1086, %v1118, 0.0
        %v1151 = vsel %vm1087, %v1119, 0.0
        %v1152 = vsel %vm1088, %v1120, 0.0
        %v1153 = vsel %vm1089, %v1121, 0.0
        %v1154 = vsel %vm1090, %v1122, 0.0
        %v1155 = vsel %vm1091, %v1123, 0.0
        %v1156 = vsel %vm1092, %v1124, 0.0
        %v1157 = vsel %vm1093, %v1125, 0.0
        %v1158 = vsel %vm1094, %v1126, 0.0
        %v1159 = vsel %vm1095, %v1127, 0.0
        %v1160 = vsel %vm1096, %v1128, 0.0
        %v1161 = vsel %vm1097, %v1129, 0.0
        %v1162 = vsel %vm1098, %v1130, 0.0
        %v1163 = vsel %vm1099, %v1131, 0.0
        %v1164 = vsel %vm1100, %v1132, 0.0
        %v1165 = vsel %vm1101, %v1133, 0.0
        %v1166 = vsel %vm1102, %v1134, 0.0
        %v1167 = vsel %vm1103, %v1135, 0.0
        %v1168 = vsel %vm1104, %v1136, 0.0
        %v1169 = vsel %vm1105, %v1137, 0.0
        %v1170 = vsel %vm1106, %v1138, 0.0
        %v1171 = vsel %vm1107, %v1139, 0.0
        %v1172 = vsel %vm1108, %v1140, 0.0
        %v1173 = vsel %vm1109, %v1141, 0.0
        %v1174 = vsel %vm1110, %v1142, 0.0
        %v1175 = vsel %vm1111, %v1143, 0.0
        %v1176 = vsel %vm1112, %v1144, 0.0
        %v1177 = vsel %vm1113, %v1145, 0.0
        %v1178 = vsel %vm1114, %v1146, 0.0
        %v1179 = vsel %vm1115, %v1147, 0.0
        %v1180 = vsel %vm1116, %v1148, 0.0
        %v1181 = vsel %vm1117, %v1149, 0.0
        %v1182 = vpack.c.bf16 %v1152, %v1150
        %v1183 = vpack.c.bf16 %v1153, %v1151
        %v1184 = vpack.c.bf16 %v1156, %v1154
        %v1185 = vpack.c.bf16 %v1157, %v1155
        %v1186 = vpack.c.bf16 %v1160, %v1158
        %v1187 = vpack.c.bf16 %v1161, %v1159
        %v1188 = vpack.c.bf16 %v1164, %v1162
        %v1189 = vpack.c.bf16 %v1165, %v1163
        %v1190 = vpack.c.bf16 %v1168, %v1166
        %v1191 = vpack.c.bf16 %v1169, %v1167
        %v1192 = vpack.c.bf16 %v1172, %v1170
        %v1193 = vpack.c.bf16 %v1173, %v1171
        %v1194 = vpack.c.bf16 %v1176, %v1174
        %v1195 = vpack.c.bf16 %v1177, %v1175
        %v1196 = vpack.c.bf16 %v1180, %v1178
        %v1197 = vpack.c.bf16 %v1181, %v1179
        %v1198 = vld [vmem:[%s4] sm:$0xf]
        %v1199 = vld [vmem:[%s4 + $0x4] sm:$0xf]
        %v1200 = vld [vmem:[%s4 + $0x8] sm:$0xf]
        %v1201 = vld [vmem:[%s4 + $0xc] sm:$0xf]
        %v1202 = vld [vmem:[%s4 + $0x10] sm:$0xf]
        %v1203 = vld [vmem:[%s4 + $0x14] sm:$0xf]
        %v1204 = vld [vmem:[%s4 + $0x18] sm:$0xf]
        %v1205 = vld [vmem:[%s4 + $0x1c] sm:$0xf]
        %v1206 = vld [vmem:[%s4 + $0x20] sm:$0xf]
        %v1207 = vld [vmem:[%s4 + $0x24] sm:$0xf]
        %v1208 = vld [vmem:[%s4 + $0x28] sm:$0xf]
        %v1209 = vld [vmem:[%s4 + $0x2c] sm:$0xf]
        %v1210 = vld [vmem:[%s4 + $0x30] sm:$0xf]
        %v1211 = vld [vmem:[%s4 + $0x34] sm:$0xf]
        %v1212 = vld [vmem:[%s4 + $0x38] sm:$0xf]
        %v1213 = vld [vmem:[%s4 + $0x3c] sm:$0xf]
        %v1214 = vld [vmem:[%s4 + $0x40] sm:$0xf]
        %v1215 = vld [vmem:[%s4 + $0x44] sm:$0xf]
        %v1216 = vld [vmem:[%s4 + $0x48] sm:$0xf]
        %v1217 = vld [vmem:[%s4 + $0x4c] sm:$0xf]
        %v1218 = vld [vmem:[%s4 + $0x50] sm:$0xf]
        %v1219 = vld [vmem:[%s4 + $0x54] sm:$0xf]
        %v1220 = vld [vmem:[%s4 + $0x58] sm:$0xf]
        %v1221 = vld [vmem:[%s4 + $0x5c] sm:$0xf]
        %v1222 = vld [vmem:[%s4 + $0x60] sm:$0xf]
        %v1223 = vld [vmem:[%s4 + $0x64] sm:$0xf]
        %v1224 = vld [vmem:[%s4 + $0x68] sm:$0xf]
        %v1225 = vld [vmem:[%s4 + $0x6c] sm:$0xf]
        %v1226 = vld [vmem:[%s4 + $0x70] sm:$0xf]
        %v1227 = vld [vmem:[%s4 + $0x74] sm:$0xf]
        %v1228 = vld [vmem:[%s4 + $0x78] sm:$0xf]
        %v1229 = vld [vmem:[%s4 + $0x7c] sm:$0xf]
        %v1230 = vld [vmem:[%s5] sm:$0x1]
        %v1232 = vlaneseq
        %v1233 = vshrl.u32 %v1232, 7
        %v1234 = vsub.s32 0, %v1233
        %v1235 = vrot.slane %v1230, %v1234
        %v1269 = vunpack.c.l.b16 %v1198
        %v1270 = vunpack.c.l.b16 %v1199
        %v1271 = vunpack.c.l.b16 %v1200
        %v1272 = vunpack.c.l.b16 %v1201
        %v1273 = vunpack.c.l.b16 %v1202
        %v1274 = vunpack.c.l.b16 %v1203
        %v1275 = vunpack.c.l.b16 %v1204
        %v1276 = vunpack.c.l.b16 %v1205
        %v1277 = vunpack.c.l.b16 %v1206
        %v1278 = vunpack.c.l.b16 %v1207
        %v1279 = vunpack.c.l.b16 %v1208
        %v1280 = vunpack.c.l.b16 %v1209
        %v1281 = vunpack.c.l.b16 %v1210
        %v1282 = vunpack.c.l.b16 %v1211
        %v1283 = vunpack.c.l.b16 %v1212
        %v1284 = vunpack.c.l.b16 %v1213
        %v1285 = vunpack.c.l.b16 %v1214
        %v1286 = vunpack.c.l.b16 %v1215
        %v1287 = vunpack.c.l.b16 %v1216
        %v1288 = vunpack.c.l.b16 %v1217
        %v1289 = vunpack.c.l.b16 %v1218
        %v1290 = vunpack.c.l.b16 %v1219
        %v1291 = vunpack.c.l.b16 %v1220
        %v1292 = vunpack.c.l.b16 %v1221
        %v1293 = vunpack.c.l.b16 %v1222
        %v1294 = vunpack.c.l.b16 %v1223
        %v1295 = vunpack.c.l.b16 %v1224
        %v1296 = vunpack.c.l.b16 %v1225
        %v1297 = vunpack.c.l.b16 %v1226
        %v1298 = vunpack.c.l.b16 %v1227
        %v1299 = vunpack.c.l.b16 %v1228
        %v1300 = vunpack.c.l.b16 %v1229
        %v1301 = vpack.c.b16 %v1270, %v1269
        %v1302 = vpack.c.b16 %v1272, %v1271
        %v1303 = vpack.c.b16 %v1274, %v1273
        %v1304 = vpack.c.b16 %v1276, %v1275
        %v1305 = vpack.c.b16 %v1278, %v1277
        %v1306 = vpack.c.b16 %v1280, %v1279
        %v1307 = vpack.c.b16 %v1282, %v1281
        %v1308 = vpack.c.b16 %v1284, %v1283
        %v1309 = vpack.c.b16 %v1286, %v1285
        %v1310 = vpack.c.b16 %v1288, %v1287
        %v1311 = vpack.c.b16 %v1290, %v1289
        %v1312 = vpack.c.b16 %v1292, %v1291
        %v1313 = vpack.c.b16 %v1294, %v1293
        %v1314 = vpack.c.b16 %v1296, %v1295
        %v1315 = vpack.c.b16 %v1298, %v1297
        %v1316 = vpack.c.b16 %v1300, %v1299
        %1333 = vmatprep.subr.bf16.mxu0 0
        %1334 = vmatpush1.bf16.msra.mxu0 %v1308
        %1335 = vmatprep.subr.bf16.mxu0 0
        %1336 = vmatpush1.bf16.msra.mxu0 %v1307
        %1337 = vmatprep.subr.bf16.mxu0 0
        %1338 = vmatpush1.bf16.msra.mxu0 %v1306
        %1339 = vmatprep.subr.bf16.mxu0 0
        %1340 = vmatpush1.bf16.msra.mxu0 %v1305
        %1341 = vmatprep.subr.bf16.mxu0 0
        %1342 = vmatpush1.bf16.msra.mxu0 %v1304
        %1343 = vmatprep.subr.bf16.mxu0 0
        %1344 = vmatpush1.bf16.msra.mxu0 %v1303
        %1345 = vmatprep.subr.bf16.mxu0 0
        %1346 = vmatpush1.bf16.msra.mxu0 %v1302
        %1347 = vmatprep.subr.bf16.mxu0 0
        %1348 = vmatpush1.bf16.msra.mxu0 %v1301
        %1349 = vmatprep.subr.bf16.mxu0 0
        %1350 = vmatpush2.bf16.msra.mxu0 %v1316
        %1351 = vmatprep.subr.bf16.mxu0 0
        %1352 = vmatpush2.bf16.msra.mxu0 %v1315
        %1353 = vmatprep.subr.bf16.mxu0 0
        %1354 = vmatpush2.bf16.msra.mxu0 %v1314
        %1355 = vmatprep.subr.bf16.mxu0 0
        %1356 = vmatpush2.bf16.msra.mxu0 %v1313
        %1357 = vmatprep.subr.bf16.mxu0 0
        %1358 = vmatpush2.bf16.msra.mxu0 %v1312
        %1359 = vmatprep.subr.bf16.mxu0 0
        %1360 = vmatpush2.bf16.msra.mxu0 %v1311
        %1361 = vmatprep.subr.bf16.mxu0 0
        %1362 = vmatpush2.bf16.msra.mxu0 %v1310
        %1363 = vmatprep.subr.bf16.mxu0 0
        %1364 = vmatpush2.bf16.msra.mxu0 %v1309
        %1365 = vmatprep.mubr.bf16.mxu0 %v1183
        %1366 = vmatmul.mubr.bf16.gmra.mxu0 %v1182
        %v1367 = vpop.f32.mrf.mxu0
        %v1368 = vadd.f32 %v1235, %v1367
        %v1369 = vpop.f32.mrf.mxu0
        %v1370 = vpop.f32.mrf.mxu0
        %v1371 = vadd.f32 %v1235, %v1370
        %v1372 = vpop.f32.mrf.mxu0
        %1373 = vmatprep.mubr.bf16.mxu0 %v1185
        %1374 = vmatmul.mubr.bf16.gmra.mxu0 %v1184
        %v1375 = vpop.f32.mrf.mxu0
        %v1376 = vadd.f32 %v1235, %v1375
        %v1377 = vpop.f32.mrf.mxu0
        %v1378 = vpop.f32.mrf.mxu0
        %v1379 = vadd.f32 %v1235, %v1378
        %v1380 = vpop.f32.mrf.mxu0
        %1381 = vmatprep.mubr.bf16.mxu0 %v1187
        %1382 = vmatmul.mubr.bf16.gmra.mxu0 %v1186
        %v1383 = vpop.f32.mrf.mxu0
        %v1384 = vadd.f32 %v1235, %v1383
        %v1385 = vpop.f32.mrf.mxu0
        %v1386 = vpop.f32.mrf.mxu0
        %v1387 = vadd.f32 %v1235, %v1386
        %v1388 = vpop.f32.mrf.mxu0
        %1389 = vmatprep.mubr.bf16.mxu0 %v1189
        %1390 = vmatmul.mubr.bf16.gmra.mxu0 %v1188
        %v1391 = vpop.f32.mrf.mxu0
        %v1392 = vadd.f32 %v1235, %v1391
        %v1393 = vpop.f32.mrf.mxu0
        %v1394 = vpop.f32.mrf.mxu0
        %v1395 = vadd.f32 %v1235, %v1394
        %v1396 = vpop.f32.mrf.mxu0
        %1397 = vmatprep.mubr.bf16.mxu0 %v1191
        %1398 = vmatmul.mubr.bf16.gmra.mxu0 %v1190
        %v1399 = vpop.f32.mrf.mxu0
        %v1400 = vadd.f32 %v1235, %v1399
        %v1401 = vpop.f32.mrf.mxu0
        %v1402 = vpop.f32.mrf.mxu0
        %v1403 = vadd.f32 %v1235, %v1402
        %v1404 = vpop.f32.mrf.mxu0
        %1405 = vmatprep.mubr.bf16.mxu0 %v1193
        %1406 = vmatmul.mubr.bf16.gmra.mxu0 %v1192
        %v1407 = vpop.f32.mrf.mxu0
        %v1408 = vadd.f32 %v1235, %v1407
        %v1409 = vpop.f32.mrf.mxu0
        %v1410 = vpop.f32.mrf.mxu0
        %v1411 = vadd.f32 %v1235, %v1410
        %v1412 = vpop.f32.mrf.mxu0
        %1413 = vmatprep.mubr.bf16.mxu0 %v1195
        %1414 = vmatmul.mubr.bf16.gmra.mxu0 %v1194
        %v1415 = vpop.f32.mrf.mxu0
        %v1416 = vadd.f32 %v1235, %v1415
        %v1417 = vpop.f32.mrf.mxu0
        %v1418 = vpop.f32.mrf.mxu0
        %v1419 = vadd.f32 %v1235, %v1418
        %v1420 = vpop.f32.mrf.mxu0
        %1421 = vmatprep.mubr.bf16.mxu0 %v1197
        %1422 = vmatmul.mubr.bf16.gmra.mxu0 %v1196
        %v1423 = vpop.f32.mrf.mxu0
        %v1424 = vadd.f32 %v1235, %v1423
        %v1425 = vpop.f32.mrf.mxu0
        %v1426 = vpop.f32.mrf.mxu0
        %v1427 = vadd.f32 %v1235, %v1426
        %v1428 = vpop.f32.mrf.mxu0
        %1429 = vdwg.mxu0
        %vm1430 = vcmp.ge.f32.partialorder %v1368, 0.0
        %vm1431 = vcmp.ge.f32.partialorder %v1371, 0.0
        %vm1432 = vcmp.ge.f32.partialorder %v1376, 0.0
        %vm1433 = vcmp.ge.f32.partialorder %v1379, 0.0
        %vm1434 = vcmp.ge.f32.partialorder %v1384, 0.0
        %vm1435 = vcmp.ge.f32.partialorder %v1387, 0.0
        %vm1436 = vcmp.ge.f32.partialorder %v1392, 0.0
        %vm1437 = vcmp.ge.f32.partialorder %v1395, 0.0
        %vm1438 = vcmp.ge.f32.partialorder %v1400, 0.0
        %vm1439 = vcmp.ge.f32.partialorder %v1403, 0.0
        %vm1440 = vcmp.ge.f32.partialorder %v1408, 0.0
        %vm1441 = vcmp.ge.f32.partialorder %v1411, 0.0
        %vm1442 = vcmp.ge.f32.partialorder %v1416, 0.0
        %vm1443 = vcmp.ge.f32.partialorder %v1419, 0.0
        %vm1444 = vcmp.ge.f32.partialorder %v1424, 0.0
        %vm1445 = vcmp.ge.f32.partialorder %v1427, 0.0
        %v1446 = vmul.f32 %v1368, 0.01
        %v1447 = vmul.f32 %v1371, 0.01
        %v1448 = vmul.f32 %v1376, 0.01
        %v1449 = vmul.f32 %v1379, 0.01
        %v1450 = vmul.f32 %v1384, 0.01
        %v1451 = vmul.f32 %v1387, 0.01
        %v1452 = vmul.f32 %v1392, 0.01
        %v1453 = vmul.f32 %v1395, 0.01
        %v1454 = vmul.f32 %v1400, 0.01
        %v1455 = vmul.f32 %v1403, 0.01
        %v1456 = vmul.f32 %v1408, 0.01
        %v1457 = vmul.f32 %v1411, 0.01
        %v1458 = vmul.f32 %v1416, 0.01
        %v1459 = vmul.f32 %v1419, 0.01
        %v1460 = vmul.f32 %v1424, 0.01
        %v1461 = vmul.f32 %v1427, 0.01
        %v1462 = vsel %vm1430, %v1368, %v1446
        %v1463 = vsel %vm1431, %v1371, %v1447
        %v1464 = vsel %vm1432, %v1376, %v1448
        %v1465 = vsel %vm1433, %v1379, %v1449
        %v1466 = vsel %vm1434, %v1384, %v1450
        %v1467 = vsel %vm1435, %v1387, %v1451
        %v1468 = vsel %vm1436, %v1392, %v1452
        %v1469 = vsel %vm1437, %v1395, %v1453
        %v1470 = vsel %vm1438, %v1400, %v1454
        %v1471 = vsel %vm1439, %v1403, %v1455
        %v1472 = vsel %vm1440, %v1408, %v1456
        %v1473 = vsel %vm1441, %v1411, %v1457
        %v1474 = vsel %vm1442, %v1416, %v1458
        %v1475 = vsel %vm1443, %v1419, %v1459
        %v1476 = vsel %vm1444, %v1424, %v1460
        %v1477 = vsel %vm1445, %v1427, %v1461
        %s1478 = sxor.u32 %s389, 3327642422
        %s1479 = sxor.u32 %s1478, %s729
        %v1480 = vstv %s1479
        %v1481 = vadd.s32 %v1480, %v731
        %v1482 = vadd.s32 %v1480, %v732
        %v1483 = vadd.s32 %v1480, %v733
        %v1484 = vadd.s32 %v1480, %v734
        %v1485 = vadd.s32 %v1480, %v735
        %v1486 = vadd.s32 %v1480, %v736
        %v1487 = vadd.s32 %v1480, %v737
        %v1488 = vadd.s32 %v1480, %v738
        %v1489 = vadd.s32 %v1480, %v739
        %v1490 = vadd.s32 %v1480, %v740
        %v1491 = vadd.s32 %v1480, %v741
        %v1492 = vadd.s32 %v1480, %v742
        %v1493 = vadd.s32 %v1480, %v743
        %v1494 = vadd.s32 %v1480, %v744
        %v1495 = vadd.s32 %v1480, %v745
        %v1496 = vadd.s32 %v1480, %v746
        %v1497 = vadd.s32 %v1481, %v764
        %v1498 = vadd.s32 %v1482, %v764
        %v1499 = vadd.s32 %v1483, %v764
        %v1500 = vadd.s32 %v1484, %v764
        %v1501 = vadd.s32 %v1485, %v764
        %v1502 = vadd.s32 %v1486, %v764
        %v1503 = vadd.s32 %v1487, %v764
        %v1504 = vadd.s32 %v1488, %v764
        %v1505 = vadd.s32 %v1489, %v764
        %v1506 = vadd.s32 %v1490, %v764
        %v1507 = vadd.s32 %v1491, %v764
        %v1508 = vadd.s32 %v1492, %v764
        %v1509 = vadd.s32 %v1493, %v764
        %v1510 = vadd.s32 %v1494, %v764
        %v1511 = vadd.s32 %v1495, %v764
        %v1512 = vadd.s32 %v1496, %v764
        %v1513 = vshra.s32 %v1497, 16
        %v1514 = vshra.s32 %v1498, 16
        %v1515 = vshra.s32 %v1499, 16
        %v1516 = vshra.s32 %v1500, 16
        %v1517 = vshra.s32 %v1501, 16
        %v1518 = vshra.s32 %v1502, 16
        %v1519 = vshra.s32 %v1503, 16
        %v1520 = vshra.s32 %v1504, 16
        %v1521 = vshra.s32 %v1505, 16
        %v1522 = vshra.s32 %v1506, 16
        %v1523 = vshra.s32 %v1507, 16
        %v1524 = vshra.s32 %v1508, 16
        %v1525 = vshra.s32 %v1509, 16
        %v1526 = vshra.s32 %v1510, 16
        %v1527 = vshra.s32 %v1511, 16
        %v1528 = vshra.s32 %v1512, 16
        %v1529 = vxor.u32 %v1497, %v1513
        %v1530 = vxor.u32 %v1498, %v1514
        %v1531 = vxor.u32 %v1499, %v1515
        %v1532 = vxor.u32 %v1500, %v1516
        %v1533 = vxor.u32 %v1501, %v1517
        %v1534 = vxor.u32 %v1502, %v1518
        %v1535 = vxor.u32 %v1503, %v1519
        %v1536 = vxor.u32 %v1504, %v1520
        %v1537 = vxor.u32 %v1505, %v1521
        %v1538 = vxor.u32 %v1506, %v1522
        %v1539 = vxor.u32 %v1507, %v1523
        %v1540 = vxor.u32 %v1508, %v1524
        %v1541 = vxor.u32 %v1509, %v1525
        %v1542 = vxor.u32 %v1510, %v1526
        %v1543 = vxor.u32 %v1511, %v1527
        %v1544 = vxor.u32 %v1512, %v1528
        %v1545 = vmul.u32 %v1529, 739982445
        %v1546 = vmul.u32 %v1530, 739982445
        %v1547 = vmul.u32 %v1531, 739982445
        %v1548 = vmul.u32 %v1532, 739982445
        %v1549 = vmul.u32 %v1533, 739982445
        %v1550 = vmul.u32 %v1534, 739982445
        %v1551 = vmul.u32 %v1535, 739982445
        %v1552 = vmul.u32 %v1536, 739982445
        %v1553 = vmul.u32 %v1537, 739982445
        %v1554 = vmul.u32 %v1538, 739982445
        %v1555 = vmul.u32 %v1539, 739982445
        %v1556 = vmul.u32 %v1540, 739982445
        %v1557 = vmul.u32 %v1541, 739982445
        %v1558 = vmul.u32 %v1542, 739982445
        %v1559 = vmul.u32 %v1543, 739982445
        %v1560 = vmul.u32 %v1544, 739982445
        %v1561 = vshra.s32 %v1545, 13
        %v1562 = vshra.s32 %v1546, 13
        %v1563 = vshra.s32 %v1547, 13
        %v1564 = vshra.s32 %v1548, 13
        %v1565 = vshra.s32 %v1549, 13
        %v1566 = vshra.s32 %v1550, 13
        %v1567 = vshra.s32 %v1551, 13
        %v1568 = vshra.s32 %v1552, 13
        %v1569 = vshra.s32 %v1553, 13
        %v1570 = vshra.s32 %v1554, 13
        %v1571 = vshra.s32 %v1555, 13
        %v1572 = vshra.s32 %v1556, 13
        %v1573 = vshra.s32 %v1557, 13
        %v1574 = vshra.s32 %v1558, 13
        %v1575 = vshra.s32 %v1559, 13
        %v1576 = vshra.s32 %v1560, 13
        %v1577 = vxor.u32 %v1545, %v1561
        %v1578 = vxor.u32 %v1546, %v1562
        %v1579 = vxor.u32 %v1547, %v1563
        %v1580 = vxor.u32 %v1548, %v1564
        %v1581 = vxor.u32 %v1549, %v1565
        %v1582 = vxor.u32 %v1550, %v1566
        %v1583 = vxor.u32 %v1551, %v1567
        %v1584 = vxor.u32 %v1552, %v1568
        %v1585 = vxor.u32 %v1553, %v1569
        %v1586 = vxor.u32 %v1554, %v1570
        %v1587 = vxor.u32 %v1555, %v1571
        %v1588 = vxor.u32 %v1556, %v1572
        %v1589 = vxor.u32 %v1557, %v1573
        %v1590 = vxor.u32 %v1558, %v1574
        %v1591 = vxor.u32 %v1559, %v1575
        %v1592 = vxor.u32 %v1560, %v1576
        %v1593 = vmul.u32 %v1577, 695872825
        %v1594 = vmul.u32 %v1578, 695872825
        %v1595 = vmul.u32 %v1579, 695872825
        %v1596 = vmul.u32 %v1580, 695872825
        %v1597 = vmul.u32 %v1581, 695872825
        %v1598 = vmul.u32 %v1582, 695872825
        %v1599 = vmul.u32 %v1583, 695872825
        %v1600 = vmul.u32 %v1584, 695872825
        %v1601 = vmul.u32 %v1585, 695872825
        %v1602 = vmul.u32 %v1586, 695872825
        %v1603 = vmul.u32 %v1587, 695872825
        %v1604 = vmul.u32 %v1588, 695872825
        %v1605 = vmul.u32 %v1589, 695872825
        %v1606 = vmul.u32 %v1590, 695872825
        %v1607 = vmul.u32 %v1591, 695872825
        %v1608 = vmul.u32 %v1592, 695872825
        %v1609 = vshra.s32 %v1593, 16
        %v1610 = vshra.s32 %v1594, 16
        %v1611 = vshra.s32 %v1595, 16
        %v1612 = vshra.s32 %v1596, 16
        %v1613 = vshra.s32 %v1597, 16
        %v1614 = vshra.s32 %v1598, 16
        %v1615 = vshra.s32 %v1599, 16
        %v1616 = vshra.s32 %v1600, 16
        %v1617 = vshra.s32 %v1601, 16
        %v1618 = vshra.s32 %v1602, 16
        %v1619 = vshra.s32 %v1603, 16
        %v1620 = vshra.s32 %v1604, 16
        %v1621 = vshra.s32 %v1605, 16
        %v1622 = vshra.s32 %v1606, 16
        %v1623 = vshra.s32 %v1607, 16
        %v1624 = vshra.s32 %v1608, 16
        %v1625 = vxor.u32 %v1593, %v1609
        %v1626 = vxor.u32 %v1594, %v1610
        %v1627 = vxor.u32 %v1595, %v1611
        %v1628 = vxor.u32 %v1596, %v1612
        %v1629 = vxor.u32 %v1597, %v1613
        %v1630 = vxor.u32 %v1598, %v1614
        %v1631 = vxor.u32 %v1599, %v1615
        %v1632 = vxor.u32 %v1600, %v1616
        %v1633 = vxor.u32 %v1601, %v1617
        %v1634 = vxor.u32 %v1602, %v1618
        %v1635 = vxor.u32 %v1603, %v1619
        %v1636 = vxor.u32 %v1604, %v1620
        %v1637 = vxor.u32 %v1605, %v1621
        %v1638 = vxor.u32 %v1606, %v1622
        %v1639 = vxor.u32 %v1607, %v1623
        %v1640 = vxor.u32 %v1608, %v1624
        %v1641 = vand.u32 %v1625, 16777215
        %v1642 = vand.u32 %v1626, 16777215
        %v1643 = vand.u32 %v1627, 16777215
        %v1644 = vand.u32 %v1628, 16777215
        %v1645 = vand.u32 %v1629, 16777215
        %v1646 = vand.u32 %v1630, 16777215
        %v1647 = vand.u32 %v1631, 16777215
        %v1648 = vand.u32 %v1632, 16777215
        %v1649 = vand.u32 %v1633, 16777215
        %v1650 = vand.u32 %v1634, 16777215
        %v1651 = vand.u32 %v1635, 16777215
        %v1652 = vand.u32 %v1636, 16777215
        %v1653 = vand.u32 %v1637, 16777215
        %v1654 = vand.u32 %v1638, 16777215
        %v1655 = vand.u32 %v1639, 16777215
        %v1656 = vand.u32 %v1640, 16777215
        %vm1657 = vcmp.lt.s32.totalorder %v1641, 13421773
        %vm1658 = vcmp.lt.s32.totalorder %v1642, 13421773
        %vm1659 = vcmp.lt.s32.totalorder %v1643, 13421773
        %vm1660 = vcmp.lt.s32.totalorder %v1644, 13421773
        %vm1661 = vcmp.lt.s32.totalorder %v1645, 13421773
        %vm1662 = vcmp.lt.s32.totalorder %v1646, 13421773
        %vm1663 = vcmp.lt.s32.totalorder %v1647, 13421773
        %vm1664 = vcmp.lt.s32.totalorder %v1648, 13421773
        %vm1665 = vcmp.lt.s32.totalorder %v1649, 13421773
        %vm1666 = vcmp.lt.s32.totalorder %v1650, 13421773
        %vm1667 = vcmp.lt.s32.totalorder %v1651, 13421773
        %vm1668 = vcmp.lt.s32.totalorder %v1652, 13421773
        %vm1669 = vcmp.lt.s32.totalorder %v1653, 13421773
        %vm1670 = vcmp.lt.s32.totalorder %v1654, 13421773
        %vm1671 = vcmp.lt.s32.totalorder %v1655, 13421773
        %vm1672 = vcmp.lt.s32.totalorder %v1656, 13421773
        %v1673 = vmul.f32 %v1462, 1.25
        %v1674 = vmul.f32 %v1463, 1.25
        %v1675 = vmul.f32 %v1464, 1.25
        %v1676 = vmul.f32 %v1465, 1.25
        %v1677 = vmul.f32 %v1466, 1.25
        %v1678 = vmul.f32 %v1467, 1.25
        %v1679 = vmul.f32 %v1468, 1.25
        %v1680 = vmul.f32 %v1469, 1.25
        %v1681 = vmul.f32 %v1470, 1.25
        %v1682 = vmul.f32 %v1471, 1.25
        %v1683 = vmul.f32 %v1472, 1.25
        %v1684 = vmul.f32 %v1473, 1.25
        %v1685 = vmul.f32 %v1474, 1.25
        %v1686 = vmul.f32 %v1475, 1.25
        %v1687 = vmul.f32 %v1476, 1.25
        %v1688 = vmul.f32 %v1477, 1.25
        %v1689 = vsel %vm1657, %v1673, 0.0
        %v1690 = vsel %vm1658, %v1674, 0.0
        %v1691 = vsel %vm1659, %v1675, 0.0
        %v1692 = vsel %vm1660, %v1676, 0.0
        %v1693 = vsel %vm1661, %v1677, 0.0
        %v1694 = vsel %vm1662, %v1678, 0.0
        %v1695 = vsel %vm1663, %v1679, 0.0
        %v1696 = vsel %vm1664, %v1680, 0.0
        %v1697 = vsel %vm1665, %v1681, 0.0
        %v1698 = vsel %vm1666, %v1682, 0.0
        %v1699 = vsel %vm1667, %v1683, 0.0
        %v1700 = vsel %vm1668, %v1684, 0.0
        %v1701 = vsel %vm1669, %v1685, 0.0
        %v1702 = vsel %vm1670, %v1686, 0.0
        %v1703 = vsel %vm1671, %v1687, 0.0
        %v1704 = vsel %vm1672, %v1688, 0.0
        %v1705 = vpack.c.bf16 %v1690, %v1689
        %v1706 = vpack.c.bf16 %v1692, %v1691
        %v1707 = vpack.c.bf16 %v1694, %v1693
        %v1708 = vpack.c.bf16 %v1696, %v1695
        %v1709 = vpack.c.bf16 %v1698, %v1697
        %v1710 = vpack.c.bf16 %v1700, %v1699
        %v1711 = vpack.c.bf16 %v1702, %v1701
        %v1712 = vpack.c.bf16 %v1704, %v1703
        %v1713 = vld [vmem:[%s6] sm:$0xf]
        %v1714 = vld [vmem:[%s6 + $0x4] sm:$0xf]
        %v1715 = vld [vmem:[%s6 + $0x8] sm:$0xf]
        %v1716 = vld [vmem:[%s6 + $0xc] sm:$0xf]
        %v1717 = vld [vmem:[%s6 + $0x10] sm:$0xf]
        %v1718 = vld [vmem:[%s6 + $0x14] sm:$0xf]
        %v1719 = vld [vmem:[%s6 + $0x18] sm:$0xf]
        %v1720 = vld [vmem:[%s6 + $0x1c] sm:$0xf]
        %v1721 = vld [vmem:[%s6 + $0x20] sm:$0xf]
        %v1722 = vld [vmem:[%s6 + $0x24] sm:$0xf]
        %v1723 = vld [vmem:[%s6 + $0x28] sm:$0xf]
        %v1724 = vld [vmem:[%s6 + $0x2c] sm:$0xf]
        %v1725 = vld [vmem:[%s6 + $0x30] sm:$0xf]
        %v1726 = vld [vmem:[%s6 + $0x34] sm:$0xf]
        %v1727 = vld [vmem:[%s6 + $0x38] sm:$0xf]
        %v1728 = vld [vmem:[%s6 + $0x3c] sm:$0xf]
        %v1729 = vld [vmem:[%s7] sm:$0x1]
        %v1731 = vlaneseq
        %v1732 = vshrl.u32 %v1731, 7
        %v1733 = vsub.s32 0, %v1732
        %v1734 = vrot.slane %v1729, %v1733
        %v1752 = vunpack.c.l.b16 %v1713
        %v1753 = vunpack.c.l.b16 %v1714
        %v1754 = vunpack.c.l.b16 %v1715
        %v1755 = vunpack.c.l.b16 %v1716
        %v1756 = vunpack.c.l.b16 %v1717
        %v1757 = vunpack.c.l.b16 %v1718
        %v1758 = vunpack.c.l.b16 %v1719
        %v1759 = vunpack.c.l.b16 %v1720
        %v1760 = vunpack.c.l.b16 %v1721
        %v1761 = vunpack.c.l.b16 %v1722
        %v1762 = vunpack.c.l.b16 %v1723
        %v1763 = vunpack.c.l.b16 %v1724
        %v1764 = vunpack.c.l.b16 %v1725
        %v1765 = vunpack.c.l.b16 %v1726
        %v1766 = vunpack.c.l.b16 %v1727
        %v1767 = vunpack.c.l.b16 %v1728
        %v1768 = vpack.c.b16 %v1753, %v1752
        %v1769 = vpack.c.b16 %v1755, %v1754
        %v1770 = vpack.c.b16 %v1757, %v1756
        %v1771 = vpack.c.b16 %v1759, %v1758
        %v1772 = vpack.c.b16 %v1761, %v1760
        %v1773 = vpack.c.b16 %v1763, %v1762
        %v1774 = vpack.c.b16 %v1765, %v1764
        %v1775 = vpack.c.b16 %v1767, %v1766
        %1784 = vmatprep.subr.bf16.mxu0 0
        %1785 = vmatpush1.bf16.msra.mxu0 %v1775
        %1786 = vmatprep.subr.bf16.mxu0 0
        %1787 = vmatpush1.bf16.msra.mxu0 %v1774
        %1788 = vmatprep.subr.bf16.mxu0 0
        %1789 = vmatpush1.bf16.msra.mxu0 %v1773
        %1790 = vmatprep.subr.bf16.mxu0 0
        %1791 = vmatpush1.bf16.msra.mxu0 %v1772
        %1792 = vmatprep.subr.bf16.mxu0 0
        %1793 = vmatpush1.bf16.msra.mxu0 %v1771
        %1794 = vmatprep.subr.bf16.mxu0 0
        %1795 = vmatpush1.bf16.msra.mxu0 %v1770
        %1796 = vmatprep.subr.bf16.mxu0 0
        %1797 = vmatpush1.bf16.msra.mxu0 %v1769
        %1798 = vmatprep.subr.bf16.mxu0 0
        %1799 = vmatpush1.bf16.msra.mxu0 %v1768
        %1800 = vmatprep.subr.bf16.mxu0 0
        %1801 = vmatpush2.bf16.msra.mxu0 0
        %1802 = vmatprep.subr.bf16.mxu0 0
        %1803 = vmatpush2.bf16.msra.mxu0 0
        %1804 = vmatprep.subr.bf16.mxu0 0
        %1805 = vmatpush2.bf16.msra.mxu0 0
        %1806 = vmatprep.subr.bf16.mxu0 0
        %1807 = vmatpush2.bf16.msra.mxu0 0
        %1808 = vmatprep.subr.bf16.mxu0 0
        %1809 = vmatpush2.bf16.msra.mxu0 0
        %1810 = vmatprep.subr.bf16.mxu0 0
        %1811 = vmatpush2.bf16.msra.mxu0 0
        %1812 = vmatprep.subr.bf16.mxu0 0
        %1813 = vmatpush2.bf16.msra.mxu0 0
        %1814 = vmatprep.subr.bf16.mxu0 0
        %1815 = vmatpush2.bf16.msra.mxu0 0
        %1816 = vmatprep.mubr.bf16.mxu0 0
        %1817 = vmatmul.mubr.bf16.gmra.mxu0 %v1705
        %v1818 = vpop.f32.mrf.mxu0
        %v1819 = vadd.f32 %v1734, %v1818
        %v1820 = vpop.f32.mrf.mxu0
        %v1821 = vpop.f32.mrf.mxu0
        %v1822 = vadd.f32 %v1734, %v1821
        %v1823 = vpop.f32.mrf.mxu0
        %1824 = vmatprep.mubr.bf16.mxu0 0
        %1825 = vmatmul.mubr.bf16.gmra.mxu0 %v1706
        %v1826 = vpop.f32.mrf.mxu0
        %v1827 = vadd.f32 %v1734, %v1826
        %v1828 = vpop.f32.mrf.mxu0
        %v1829 = vpop.f32.mrf.mxu0
        %v1830 = vadd.f32 %v1734, %v1829
        %v1831 = vpop.f32.mrf.mxu0
        %1832 = vmatprep.mubr.bf16.mxu0 0
        %1833 = vmatmul.mubr.bf16.gmra.mxu0 %v1707
        %v1834 = vpop.f32.mrf.mxu0
        %v1835 = vadd.f32 %v1734, %v1834
        %v1836 = vpop.f32.mrf.mxu0
        %v1837 = vpop.f32.mrf.mxu0
        %v1838 = vadd.f32 %v1734, %v1837
        %v1839 = vpop.f32.mrf.mxu0
        %1840 = vmatprep.mubr.bf16.mxu0 0
        %1841 = vmatmul.mubr.bf16.gmra.mxu0 %v1708
        %v1842 = vpop.f32.mrf.mxu0
        %v1843 = vadd.f32 %v1734, %v1842
        %v1844 = vpop.f32.mrf.mxu0
        %v1845 = vpop.f32.mrf.mxu0
        %v1846 = vadd.f32 %v1734, %v1845
        %v1847 = vpop.f32.mrf.mxu0
        %1848 = vmatprep.mubr.bf16.mxu0 0
        %1849 = vmatmul.mubr.bf16.gmra.mxu0 %v1709
        %v1850 = vpop.f32.mrf.mxu0
        %v1851 = vadd.f32 %v1734, %v1850
        %v1852 = vpop.f32.mrf.mxu0
        %v1853 = vpop.f32.mrf.mxu0
        %v1854 = vadd.f32 %v1734, %v1853
        %v1855 = vpop.f32.mrf.mxu0
        %1856 = vmatprep.mubr.bf16.mxu0 0
        %1857 = vmatmul.mubr.bf16.gmra.mxu0 %v1710
        %v1858 = vpop.f32.mrf.mxu0
        %v1859 = vadd.f32 %v1734, %v1858
        %v1860 = vpop.f32.mrf.mxu0
        %v1861 = vpop.f32.mrf.mxu0
        %v1862 = vadd.f32 %v1734, %v1861
        %v1863 = vpop.f32.mrf.mxu0
        %1864 = vmatprep.mubr.bf16.mxu0 0
        %1865 = vmatmul.mubr.bf16.gmra.mxu0 %v1711
        %v1866 = vpop.f32.mrf.mxu0
        %v1867 = vadd.f32 %v1734, %v1866
        %v1868 = vpop.f32.mrf.mxu0
        %v1869 = vpop.f32.mrf.mxu0
        %v1870 = vadd.f32 %v1734, %v1869
        %v1871 = vpop.f32.mrf.mxu0
        %1872 = vmatprep.mubr.bf16.mxu0 0
        %1873 = vmatmul.mubr.bf16.gmra.mxu0 %v1712
        %v1874 = vpop.f32.mrf.mxu0
        %v1875 = vadd.f32 %v1734, %v1874
        %v1876 = vpop.f32.mrf.mxu0
        %v1877 = vpop.f32.mrf.mxu0
        %v1878 = vadd.f32 %v1734, %v1877
        %v1879 = vpop.f32.mrf.mxu0
        %1880 = vdwg.mxu0
        %vm1881 = vcmp.ge.f32.partialorder %v1819, 0.0
        %vm1882 = vcmp.ge.f32.partialorder %v1822, 0.0
        %vm1883 = vcmp.ge.f32.partialorder %v1827, 0.0
        %vm1884 = vcmp.ge.f32.partialorder %v1830, 0.0
        %vm1885 = vcmp.ge.f32.partialorder %v1835, 0.0
        %vm1886 = vcmp.ge.f32.partialorder %v1838, 0.0
        %vm1887 = vcmp.ge.f32.partialorder %v1843, 0.0
        %vm1888 = vcmp.ge.f32.partialorder %v1846, 0.0
        %vm1889 = vcmp.ge.f32.partialorder %v1851, 0.0
        %vm1890 = vcmp.ge.f32.partialorder %v1854, 0.0
        %vm1891 = vcmp.ge.f32.partialorder %v1859, 0.0
        %vm1892 = vcmp.ge.f32.partialorder %v1862, 0.0
        %vm1893 = vcmp.ge.f32.partialorder %v1867, 0.0
        %vm1894 = vcmp.ge.f32.partialorder %v1870, 0.0
        %vm1895 = vcmp.ge.f32.partialorder %v1875, 0.0
        %vm1896 = vcmp.ge.f32.partialorder %v1878, 0.0
        %v1897 = vmul.f32 %v1819, 0.01
        %v1898 = vmul.f32 %v1822, 0.01
        %v1899 = vmul.f32 %v1827, 0.01
        %v1900 = vmul.f32 %v1830, 0.01
        %v1901 = vmul.f32 %v1835, 0.01
        %v1902 = vmul.f32 %v1838, 0.01
        %v1903 = vmul.f32 %v1843, 0.01
        %v1904 = vmul.f32 %v1846, 0.01
        %v1905 = vmul.f32 %v1851, 0.01
        %v1906 = vmul.f32 %v1854, 0.01
        %v1907 = vmul.f32 %v1859, 0.01
        %v1908 = vmul.f32 %v1862, 0.01
        %v1909 = vmul.f32 %v1867, 0.01
        %v1910 = vmul.f32 %v1870, 0.01
        %v1911 = vmul.f32 %v1875, 0.01
        %v1912 = vmul.f32 %v1878, 0.01
        %v1913 = vsel %vm1881, %v1819, %v1897
        %v1914 = vsel %vm1882, %v1822, %v1898
        %v1915 = vsel %vm1883, %v1827, %v1899
        %v1916 = vsel %vm1884, %v1830, %v1900
        %v1917 = vsel %vm1885, %v1835, %v1901
        %v1918 = vsel %vm1886, %v1838, %v1902
        %v1919 = vsel %vm1887, %v1843, %v1903
        %v1920 = vsel %vm1888, %v1846, %v1904
        %v1921 = vsel %vm1889, %v1851, %v1905
        %v1922 = vsel %vm1890, %v1854, %v1906
        %v1923 = vsel %vm1891, %v1859, %v1907
        %v1924 = vsel %vm1892, %v1862, %v1908
        %v1925 = vsel %vm1893, %v1867, %v1909
        %v1926 = vsel %vm1894, %v1870, %v1910
        %v1927 = vsel %vm1895, %v1875, %v1911
        %v1928 = vsel %vm1896, %v1878, %v1912
        %s1929 = sxor.u32 %s389, 696496337
        %s1930 = sxor.u32 %s1929, %s729
        %v1931 = vstv %s1930
        %v1932 = vadd.s32 %v1931, %v731
        %v1933 = vadd.s32 %v1931, %v732
        %v1934 = vadd.s32 %v1931, %v733
        %v1935 = vadd.s32 %v1931, %v734
        %v1936 = vadd.s32 %v1931, %v735
        %v1937 = vadd.s32 %v1931, %v736
        %v1938 = vadd.s32 %v1931, %v737
        %v1939 = vadd.s32 %v1931, %v738
        %v1940 = vadd.s32 %v1931, %v739
        %v1941 = vadd.s32 %v1931, %v740
        %v1942 = vadd.s32 %v1931, %v741
        %v1943 = vadd.s32 %v1931, %v742
        %v1944 = vadd.s32 %v1931, %v743
        %v1945 = vadd.s32 %v1931, %v744
        %v1946 = vadd.s32 %v1931, %v745
        %v1947 = vadd.s32 %v1931, %v746
        %v1948 = vadd.s32 %v1932, %v764
        %v1949 = vadd.s32 %v1933, %v764
        %v1950 = vadd.s32 %v1934, %v764
        %v1951 = vadd.s32 %v1935, %v764
        %v1952 = vadd.s32 %v1936, %v764
        %v1953 = vadd.s32 %v1937, %v764
        %v1954 = vadd.s32 %v1938, %v764
        %v1955 = vadd.s32 %v1939, %v764
        %v1956 = vadd.s32 %v1940, %v764
        %v1957 = vadd.s32 %v1941, %v764
        %v1958 = vadd.s32 %v1942, %v764
        %v1959 = vadd.s32 %v1943, %v764
        %v1960 = vadd.s32 %v1944, %v764
        %v1961 = vadd.s32 %v1945, %v764
        %v1962 = vadd.s32 %v1946, %v764
        %v1963 = vadd.s32 %v1947, %v764
        %v1964 = vshra.s32 %v1948, 16
        %v1965 = vshra.s32 %v1949, 16
        %v1966 = vshra.s32 %v1950, 16
        %v1967 = vshra.s32 %v1951, 16
        %v1968 = vshra.s32 %v1952, 16
        %v1969 = vshra.s32 %v1953, 16
        %v1970 = vshra.s32 %v1954, 16
        %v1971 = vshra.s32 %v1955, 16
        %v1972 = vshra.s32 %v1956, 16
        %v1973 = vshra.s32 %v1957, 16
        %v1974 = vshra.s32 %v1958, 16
        %v1975 = vshra.s32 %v1959, 16
        %v1976 = vshra.s32 %v1960, 16
        %v1977 = vshra.s32 %v1961, 16
        %v1978 = vshra.s32 %v1962, 16
        %v1979 = vshra.s32 %v1963, 16
        %v1980 = vxor.u32 %v1948, %v1964
        %v1981 = vxor.u32 %v1949, %v1965
        %v1982 = vxor.u32 %v1950, %v1966
        %v1983 = vxor.u32 %v1951, %v1967
        %v1984 = vxor.u32 %v1952, %v1968
        %v1985 = vxor.u32 %v1953, %v1969
        %v1986 = vxor.u32 %v1954, %v1970
        %v1987 = vxor.u32 %v1955, %v1971
        %v1988 = vxor.u32 %v1956, %v1972
        %v1989 = vxor.u32 %v1957, %v1973
        %v1990 = vxor.u32 %v1958, %v1974
        %v1991 = vxor.u32 %v1959, %v1975
        %v1992 = vxor.u32 %v1960, %v1976
        %v1993 = vxor.u32 %v1961, %v1977
        %v1994 = vxor.u32 %v1962, %v1978
        %v1995 = vxor.u32 %v1963, %v1979
        %v1996 = vmul.u32 %v1980, 739982445
        %v1997 = vmul.u32 %v1981, 739982445
        %v1998 = vmul.u32 %v1982, 739982445
        %v1999 = vmul.u32 %v1983, 739982445
        %v2000 = vmul.u32 %v1984, 739982445
        %v2001 = vmul.u32 %v1985, 739982445
        %v2002 = vmul.u32 %v1986, 739982445
        %v2003 = vmul.u32 %v1987, 739982445
        %v2004 = vmul.u32 %v1988, 739982445
        %v2005 = vmul.u32 %v1989, 739982445
        %v2006 = vmul.u32 %v1990, 739982445
        %v2007 = vmul.u32 %v1991, 739982445
        %v2008 = vmul.u32 %v1992, 739982445
        %v2009 = vmul.u32 %v1993, 739982445
        %v2010 = vmul.u32 %v1994, 739982445
        %v2011 = vmul.u32 %v1995, 739982445
        %v2012 = vshra.s32 %v1996, 13
        %v2013 = vshra.s32 %v1997, 13
        %v2014 = vshra.s32 %v1998, 13
        %v2015 = vshra.s32 %v1999, 13
        %v2016 = vshra.s32 %v2000, 13
        %v2017 = vshra.s32 %v2001, 13
        %v2018 = vshra.s32 %v2002, 13
        %v2019 = vshra.s32 %v2003, 13
        %v2020 = vshra.s32 %v2004, 13
        %v2021 = vshra.s32 %v2005, 13
        %v2022 = vshra.s32 %v2006, 13
        %v2023 = vshra.s32 %v2007, 13
        %v2024 = vshra.s32 %v2008, 13
        %v2025 = vshra.s32 %v2009, 13
        %v2026 = vshra.s32 %v2010, 13
        %v2027 = vshra.s32 %v2011, 13
        %v2028 = vxor.u32 %v1996, %v2012
        %v2029 = vxor.u32 %v1997, %v2013
        %v2030 = vxor.u32 %v1998, %v2014
        %v2031 = vxor.u32 %v1999, %v2015
        %v2032 = vxor.u32 %v2000, %v2016
        %v2033 = vxor.u32 %v2001, %v2017
        %v2034 = vxor.u32 %v2002, %v2018
        %v2035 = vxor.u32 %v2003, %v2019
        %v2036 = vxor.u32 %v2004, %v2020
        %v2037 = vxor.u32 %v2005, %v2021
        %v2038 = vxor.u32 %v2006, %v2022
        %v2039 = vxor.u32 %v2007, %v2023
        %v2040 = vxor.u32 %v2008, %v2024
        %v2041 = vxor.u32 %v2009, %v2025
        %v2042 = vxor.u32 %v2010, %v2026
        %v2043 = vxor.u32 %v2011, %v2027
        %v2044 = vmul.u32 %v2028, 695872825
        %v2045 = vmul.u32 %v2029, 695872825
        %v2046 = vmul.u32 %v2030, 695872825
        %v2047 = vmul.u32 %v2031, 695872825
        %v2048 = vmul.u32 %v2032, 695872825
        %v2049 = vmul.u32 %v2033, 695872825
        %v2050 = vmul.u32 %v2034, 695872825
        %v2051 = vmul.u32 %v2035, 695872825
        %v2052 = vmul.u32 %v2036, 695872825
        %v2053 = vmul.u32 %v2037, 695872825
        %v2054 = vmul.u32 %v2038, 695872825
        %v2055 = vmul.u32 %v2039, 695872825
        %v2056 = vmul.u32 %v2040, 695872825
        %v2057 = vmul.u32 %v2041, 695872825
        %v2058 = vmul.u32 %v2042, 695872825
        %v2059 = vmul.u32 %v2043, 695872825
        %v2060 = vshra.s32 %v2044, 16
        %v2061 = vshra.s32 %v2045, 16
        %v2062 = vshra.s32 %v2046, 16
        %v2063 = vshra.s32 %v2047, 16
        %v2064 = vshra.s32 %v2048, 16
        %v2065 = vshra.s32 %v2049, 16
        %v2066 = vshra.s32 %v2050, 16
        %v2067 = vshra.s32 %v2051, 16
        %v2068 = vshra.s32 %v2052, 16
        %v2069 = vshra.s32 %v2053, 16
        %v2070 = vshra.s32 %v2054, 16
        %v2071 = vshra.s32 %v2055, 16
        %v2072 = vshra.s32 %v2056, 16
        %v2073 = vshra.s32 %v2057, 16
        %v2074 = vshra.s32 %v2058, 16
        %v2075 = vshra.s32 %v2059, 16
        %v2076 = vxor.u32 %v2044, %v2060
        %v2077 = vxor.u32 %v2045, %v2061
        %v2078 = vxor.u32 %v2046, %v2062
        %v2079 = vxor.u32 %v2047, %v2063
        %v2080 = vxor.u32 %v2048, %v2064
        %v2081 = vxor.u32 %v2049, %v2065
        %v2082 = vxor.u32 %v2050, %v2066
        %v2083 = vxor.u32 %v2051, %v2067
        %v2084 = vxor.u32 %v2052, %v2068
        %v2085 = vxor.u32 %v2053, %v2069
        %v2086 = vxor.u32 %v2054, %v2070
        %v2087 = vxor.u32 %v2055, %v2071
        %v2088 = vxor.u32 %v2056, %v2072
        %v2089 = vxor.u32 %v2057, %v2073
        %v2090 = vxor.u32 %v2058, %v2074
        %v2091 = vxor.u32 %v2059, %v2075
        %v2092 = vand.u32 %v2076, 16777215
        %v2093 = vand.u32 %v2077, 16777215
        %v2094 = vand.u32 %v2078, 16777215
        %v2095 = vand.u32 %v2079, 16777215
        %v2096 = vand.u32 %v2080, 16777215
        %v2097 = vand.u32 %v2081, 16777215
        %v2098 = vand.u32 %v2082, 16777215
        %v2099 = vand.u32 %v2083, 16777215
        %v2100 = vand.u32 %v2084, 16777215
        %v2101 = vand.u32 %v2085, 16777215
        %v2102 = vand.u32 %v2086, 16777215
        %v2103 = vand.u32 %v2087, 16777215
        %v2104 = vand.u32 %v2088, 16777215
        %v2105 = vand.u32 %v2089, 16777215
        %v2106 = vand.u32 %v2090, 16777215
        %v2107 = vand.u32 %v2091, 16777215
        %vm2108 = vcmp.lt.s32.totalorder %v2092, 13421773
        %vm2109 = vcmp.lt.s32.totalorder %v2093, 13421773
        %vm2110 = vcmp.lt.s32.totalorder %v2094, 13421773
        %vm2111 = vcmp.lt.s32.totalorder %v2095, 13421773
        %vm2112 = vcmp.lt.s32.totalorder %v2096, 13421773
        %vm2113 = vcmp.lt.s32.totalorder %v2097, 13421773
        %vm2114 = vcmp.lt.s32.totalorder %v2098, 13421773
        %vm2115 = vcmp.lt.s32.totalorder %v2099, 13421773
        %vm2116 = vcmp.lt.s32.totalorder %v2100, 13421773
        %vm2117 = vcmp.lt.s32.totalorder %v2101, 13421773
        %vm2118 = vcmp.lt.s32.totalorder %v2102, 13421773
        %vm2119 = vcmp.lt.s32.totalorder %v2103, 13421773
        %vm2120 = vcmp.lt.s32.totalorder %v2104, 13421773
        %vm2121 = vcmp.lt.s32.totalorder %v2105, 13421773
        %vm2122 = vcmp.lt.s32.totalorder %v2106, 13421773
        %vm2123 = vcmp.lt.s32.totalorder %v2107, 13421773
        %v2124 = vmul.f32 %v1913, 1.25
        %v2125 = vmul.f32 %v1914, 1.25
        %v2126 = vmul.f32 %v1915, 1.25
        %v2127 = vmul.f32 %v1916, 1.25
        %v2128 = vmul.f32 %v1917, 1.25
        %v2129 = vmul.f32 %v1918, 1.25
        %v2130 = vmul.f32 %v1919, 1.25
        %v2131 = vmul.f32 %v1920, 1.25
        %v2132 = vmul.f32 %v1921, 1.25
        %v2133 = vmul.f32 %v1922, 1.25
        %v2134 = vmul.f32 %v1923, 1.25
        %v2135 = vmul.f32 %v1924, 1.25
        %v2136 = vmul.f32 %v1925, 1.25
        %v2137 = vmul.f32 %v1926, 1.25
        %v2138 = vmul.f32 %v1927, 1.25
        %v2139 = vmul.f32 %v1928, 1.25
        %v2140 = vsel %vm2108, %v2124, 0.0
        %v2141 = vsel %vm2109, %v2125, 0.0
        %v2142 = vsel %vm2110, %v2126, 0.0
        %v2143 = vsel %vm2111, %v2127, 0.0
        %v2144 = vsel %vm2112, %v2128, 0.0
        %v2145 = vsel %vm2113, %v2129, 0.0
        %v2146 = vsel %vm2114, %v2130, 0.0
        %v2147 = vsel %vm2115, %v2131, 0.0
        %v2148 = vsel %vm2116, %v2132, 0.0
        %v2149 = vsel %vm2117, %v2133, 0.0
        %v2150 = vsel %vm2118, %v2134, 0.0
        %v2151 = vsel %vm2119, %v2135, 0.0
        %v2152 = vsel %vm2120, %v2136, 0.0
        %v2153 = vsel %vm2121, %v2137, 0.0
        %v2154 = vsel %vm2122, %v2138, 0.0
        %v2155 = vsel %vm2123, %v2139, 0.0
        %v2156 = vpack.c.bf16 %v2141, %v2140
        %v2157 = vpack.c.bf16 %v2143, %v2142
        %v2158 = vpack.c.bf16 %v2145, %v2144
        %v2159 = vpack.c.bf16 %v2147, %v2146
        %v2160 = vpack.c.bf16 %v2149, %v2148
        %v2161 = vpack.c.bf16 %v2151, %v2150
        %v2162 = vpack.c.bf16 %v2153, %v2152
        %v2163 = vpack.c.bf16 %v2155, %v2154
        %v2164 = vld [vmem:[%s8] sm:$0xf]
        %v2165 = vld [vmem:[%s8 + $0x4] sm:$0xf]
        %v2166 = vld [vmem:[%s8 + $0x8] sm:$0xf]
        %v2167 = vld [vmem:[%s8 + $0xc] sm:$0xf]
        %v2168 = vld [vmem:[%s8 + $0x10] sm:$0xf]
        %v2169 = vld [vmem:[%s8 + $0x14] sm:$0xf]
        %v2170 = vld [vmem:[%s8 + $0x18] sm:$0xf]
        %v2171 = vld [vmem:[%s8 + $0x1c] sm:$0xf]
        %v2172 = vld [vmem:[%s8 + $0x20] sm:$0xf]
        %v2173 = vld [vmem:[%s8 + $0x24] sm:$0xf]
        %v2174 = vld [vmem:[%s8 + $0x28] sm:$0xf]
        %v2175 = vld [vmem:[%s8 + $0x2c] sm:$0xf]
        %v2176 = vld [vmem:[%s8 + $0x30] sm:$0xf]
        %v2177 = vld [vmem:[%s8 + $0x34] sm:$0xf]
        %v2178 = vld [vmem:[%s8 + $0x38] sm:$0xf]
        %v2179 = vld [vmem:[%s8 + $0x3c] sm:$0xf]
        %v2180 = vld [vmem:[%s9] sm:$0x1]
        %v2182 = vlaneseq
        %v2183 = vshrl.u32 %v2182, 7
        %v2184 = vsub.s32 0, %v2183
        %v2185 = vrot.slane %v2180, %v2184
        %v2203 = vunpack.c.l.b16 %v2164
        %v2204 = vunpack.c.l.b16 %v2165
        %v2205 = vunpack.c.l.b16 %v2166
        %v2206 = vunpack.c.l.b16 %v2167
        %v2207 = vunpack.c.l.b16 %v2168
        %v2208 = vunpack.c.l.b16 %v2169
        %v2209 = vunpack.c.l.b16 %v2170
        %v2210 = vunpack.c.l.b16 %v2171
        %v2211 = vunpack.c.l.b16 %v2172
        %v2212 = vunpack.c.l.b16 %v2173
        %v2213 = vunpack.c.l.b16 %v2174
        %v2214 = vunpack.c.l.b16 %v2175
        %v2215 = vunpack.c.l.b16 %v2176
        %v2216 = vunpack.c.l.b16 %v2177
        %v2217 = vunpack.c.l.b16 %v2178
        %v2218 = vunpack.c.l.b16 %v2179
        %v2219 = vpack.c.b16 %v2204, %v2203
        %v2220 = vpack.c.b16 %v2206, %v2205
        %v2221 = vpack.c.b16 %v2208, %v2207
        %v2222 = vpack.c.b16 %v2210, %v2209
        %v2223 = vpack.c.b16 %v2212, %v2211
        %v2224 = vpack.c.b16 %v2214, %v2213
        %v2225 = vpack.c.b16 %v2216, %v2215
        %v2226 = vpack.c.b16 %v2218, %v2217
        %2235 = vmatprep.subr.bf16.mxu0 0
        %2236 = vmatpush1.bf16.msra.mxu0 %v2226
        %2237 = vmatprep.subr.bf16.mxu0 0
        %2238 = vmatpush1.bf16.msra.mxu0 %v2225
        %2239 = vmatprep.subr.bf16.mxu0 0
        %2240 = vmatpush1.bf16.msra.mxu0 %v2224
        %2241 = vmatprep.subr.bf16.mxu0 0
        %2242 = vmatpush1.bf16.msra.mxu0 %v2223
        %2243 = vmatprep.subr.bf16.mxu0 0
        %2244 = vmatpush1.bf16.msra.mxu0 %v2222
        %2245 = vmatprep.subr.bf16.mxu0 0
        %2246 = vmatpush1.bf16.msra.mxu0 %v2221
        %2247 = vmatprep.subr.bf16.mxu0 0
        %2248 = vmatpush1.bf16.msra.mxu0 %v2220
        %2249 = vmatprep.subr.bf16.mxu0 0
        %2250 = vmatpush1.bf16.msra.mxu0 %v2219
        %2251 = vmatprep.subr.bf16.mxu0 0
        %2252 = vmatpush2.bf16.msra.mxu0 0
        %2253 = vmatprep.subr.bf16.mxu0 0
        %2254 = vmatpush2.bf16.msra.mxu0 0
        %2255 = vmatprep.subr.bf16.mxu0 0
        %2256 = vmatpush2.bf16.msra.mxu0 0
        %2257 = vmatprep.subr.bf16.mxu0 0
        %2258 = vmatpush2.bf16.msra.mxu0 0
        %2259 = vmatprep.subr.bf16.mxu0 0
        %2260 = vmatpush2.bf16.msra.mxu0 0
        %2261 = vmatprep.subr.bf16.mxu0 0
        %2262 = vmatpush2.bf16.msra.mxu0 0
        %2263 = vmatprep.subr.bf16.mxu0 0
        %2264 = vmatpush2.bf16.msra.mxu0 0
        %2265 = vmatprep.subr.bf16.mxu0 0
        %2266 = vmatpush2.bf16.msra.mxu0 0
        %2267 = vmatprep.mubr.bf16.mxu0 0
        %2268 = vmatmul.mubr.bf16.gmra.mxu0 %v2156
        %v2269 = vpop.f32.mrf.mxu0
        %v2270 = vadd.f32 %v2185, %v2269
        %v2271 = vpop.f32.mrf.mxu0
        %v2272 = vpop.f32.mrf.mxu0
        %v2273 = vadd.f32 %v2185, %v2272
        %v2274 = vpop.f32.mrf.mxu0
        %2275 = vmatprep.mubr.bf16.mxu0 0
        %2276 = vmatmul.mubr.bf16.gmra.mxu0 %v2157
        %v2277 = vpop.f32.mrf.mxu0
        %v2278 = vadd.f32 %v2185, %v2277
        %v2279 = vpop.f32.mrf.mxu0
        %v2280 = vpop.f32.mrf.mxu0
        %v2281 = vadd.f32 %v2185, %v2280
        %v2282 = vpop.f32.mrf.mxu0
        %2283 = vmatprep.mubr.bf16.mxu0 0
        %2284 = vmatmul.mubr.bf16.gmra.mxu0 %v2158
        %v2285 = vpop.f32.mrf.mxu0
        %v2286 = vadd.f32 %v2185, %v2285
        %v2287 = vpop.f32.mrf.mxu0
        %v2288 = vpop.f32.mrf.mxu0
        %v2289 = vadd.f32 %v2185, %v2288
        %v2290 = vpop.f32.mrf.mxu0
        %2291 = vmatprep.mubr.bf16.mxu0 0
        %2292 = vmatmul.mubr.bf16.gmra.mxu0 %v2159
        %v2293 = vpop.f32.mrf.mxu0
        %v2294 = vadd.f32 %v2185, %v2293
        %v2295 = vpop.f32.mrf.mxu0
        %v2296 = vpop.f32.mrf.mxu0
        %v2297 = vadd.f32 %v2185, %v2296
        %v2298 = vpop.f32.mrf.mxu0
        %2299 = vmatprep.mubr.bf16.mxu0 0
        %2300 = vmatmul.mubr.bf16.gmra.mxu0 %v2160
        %v2301 = vpop.f32.mrf.mxu0
        %v2302 = vadd.f32 %v2185, %v2301
        %v2303 = vpop.f32.mrf.mxu0
        %v2304 = vpop.f32.mrf.mxu0
        %v2305 = vadd.f32 %v2185, %v2304
        %v2306 = vpop.f32.mrf.mxu0
        %2307 = vmatprep.mubr.bf16.mxu0 0
        %2308 = vmatmul.mubr.bf16.gmra.mxu0 %v2161
        %v2309 = vpop.f32.mrf.mxu0
        %v2310 = vadd.f32 %v2185, %v2309
        %v2311 = vpop.f32.mrf.mxu0
        %v2312 = vpop.f32.mrf.mxu0
        %v2313 = vadd.f32 %v2185, %v2312
        %v2314 = vpop.f32.mrf.mxu0
        %2315 = vmatprep.mubr.bf16.mxu0 0
        %2316 = vmatmul.mubr.bf16.gmra.mxu0 %v2162
        %v2317 = vpop.f32.mrf.mxu0
        %v2318 = vadd.f32 %v2185, %v2317
        %v2319 = vpop.f32.mrf.mxu0
        %v2320 = vpop.f32.mrf.mxu0
        %v2321 = vadd.f32 %v2185, %v2320
        %v2322 = vpop.f32.mrf.mxu0
        %2323 = vmatprep.mubr.bf16.mxu0 0
        %2324 = vmatmul.mubr.bf16.gmra.mxu0 %v2163
        %v2325 = vpop.f32.mrf.mxu0
        %v2326 = vadd.f32 %v2185, %v2325
        %v2327 = vpop.f32.mrf.mxu0
        %v2328 = vpop.f32.mrf.mxu0
        %v2329 = vadd.f32 %v2185, %v2328
        %v2330 = vpop.f32.mrf.mxu0
        %2331 = vdwg.mxu0
        %vm2332 = vcmp.ge.f32.partialorder %v2270, 0.0
        %vm2333 = vcmp.ge.f32.partialorder %v2273, 0.0
        %vm2334 = vcmp.ge.f32.partialorder %v2278, 0.0
        %vm2335 = vcmp.ge.f32.partialorder %v2281, 0.0
        %vm2336 = vcmp.ge.f32.partialorder %v2286, 0.0
        %vm2337 = vcmp.ge.f32.partialorder %v2289, 0.0
        %vm2338 = vcmp.ge.f32.partialorder %v2294, 0.0
        %vm2339 = vcmp.ge.f32.partialorder %v2297, 0.0
        %vm2340 = vcmp.ge.f32.partialorder %v2302, 0.0
        %vm2341 = vcmp.ge.f32.partialorder %v2305, 0.0
        %vm2342 = vcmp.ge.f32.partialorder %v2310, 0.0
        %vm2343 = vcmp.ge.f32.partialorder %v2313, 0.0
        %vm2344 = vcmp.ge.f32.partialorder %v2318, 0.0
        %vm2345 = vcmp.ge.f32.partialorder %v2321, 0.0
        %vm2346 = vcmp.ge.f32.partialorder %v2326, 0.0
        %vm2347 = vcmp.ge.f32.partialorder %v2329, 0.0
        %v2348 = vmul.f32 %v2270, 0.01
        %v2349 = vmul.f32 %v2273, 0.01
        %v2350 = vmul.f32 %v2278, 0.01
        %v2351 = vmul.f32 %v2281, 0.01
        %v2352 = vmul.f32 %v2286, 0.01
        %v2353 = vmul.f32 %v2289, 0.01
        %v2354 = vmul.f32 %v2294, 0.01
        %v2355 = vmul.f32 %v2297, 0.01
        %v2356 = vmul.f32 %v2302, 0.01
        %v2357 = vmul.f32 %v2305, 0.01
        %v2358 = vmul.f32 %v2310, 0.01
        %v2359 = vmul.f32 %v2313, 0.01
        %v2360 = vmul.f32 %v2318, 0.01
        %v2361 = vmul.f32 %v2321, 0.01
        %v2362 = vmul.f32 %v2326, 0.01
        %v2363 = vmul.f32 %v2329, 0.01
        %v2364 = vsel %vm2332, %v2270, %v2348
        %v2365 = vsel %vm2333, %v2273, %v2349
        %v2366 = vsel %vm2334, %v2278, %v2350
        %v2367 = vsel %vm2335, %v2281, %v2351
        %v2368 = vsel %vm2336, %v2286, %v2352
        %v2369 = vsel %vm2337, %v2289, %v2353
        %v2370 = vsel %vm2338, %v2294, %v2354
        %v2371 = vsel %vm2339, %v2297, %v2355
        %v2372 = vsel %vm2340, %v2302, %v2356
        %v2373 = vsel %vm2341, %v2305, %v2357
        %v2374 = vsel %vm2342, %v2310, %v2358
        %v2375 = vsel %vm2343, %v2313, %v2359
        %v2376 = vsel %vm2344, %v2318, %v2360
        %v2377 = vsel %vm2345, %v2321, %v2361
        %v2378 = vsel %vm2346, %v2326, %v2362
        %v2379 = vsel %vm2347, %v2329, %v2363
        %s2380 = sxor.u32 %s389, 2360317548
        %s2381 = sxor.u32 %s2380, %s729
        %v2382 = vstv %s2381
        %v2383 = vadd.s32 %v2382, %v731
        %v2384 = vadd.s32 %v2382, %v732
        %v2385 = vadd.s32 %v2382, %v733
        %v2386 = vadd.s32 %v2382, %v734
        %v2387 = vadd.s32 %v2382, %v735
        %v2388 = vadd.s32 %v2382, %v736
        %v2389 = vadd.s32 %v2382, %v737
        %v2390 = vadd.s32 %v2382, %v738
        %v2391 = vadd.s32 %v2382, %v739
        %v2392 = vadd.s32 %v2382, %v740
        %v2393 = vadd.s32 %v2382, %v741
        %v2394 = vadd.s32 %v2382, %v742
        %v2395 = vadd.s32 %v2382, %v743
        %v2396 = vadd.s32 %v2382, %v744
        %v2397 = vadd.s32 %v2382, %v745
        %v2398 = vadd.s32 %v2382, %v746
        %v2399 = vadd.s32 %v2383, %v764
        %v2400 = vadd.s32 %v2384, %v764
        %v2401 = vadd.s32 %v2385, %v764
        %v2402 = vadd.s32 %v2386, %v764
        %v2403 = vadd.s32 %v2387, %v764
        %v2404 = vadd.s32 %v2388, %v764
        %v2405 = vadd.s32 %v2389, %v764
        %v2406 = vadd.s32 %v2390, %v764
        %v2407 = vadd.s32 %v2391, %v764
        %v2408 = vadd.s32 %v2392, %v764
        %v2409 = vadd.s32 %v2393, %v764
        %v2410 = vadd.s32 %v2394, %v764
        %v2411 = vadd.s32 %v2395, %v764
        %v2412 = vadd.s32 %v2396, %v764
        %v2413 = vadd.s32 %v2397, %v764
        %v2414 = vadd.s32 %v2398, %v764
        %v2415 = vshra.s32 %v2399, 16
        %v2416 = vshra.s32 %v2400, 16
        %v2417 = vshra.s32 %v2401, 16
        %v2418 = vshra.s32 %v2402, 16
        %v2419 = vshra.s32 %v2403, 16
        %v2420 = vshra.s32 %v2404, 16
        %v2421 = vshra.s32 %v2405, 16
        %v2422 = vshra.s32 %v2406, 16
        %v2423 = vshra.s32 %v2407, 16
        %v2424 = vshra.s32 %v2408, 16
        %v2425 = vshra.s32 %v2409, 16
        %v2426 = vshra.s32 %v2410, 16
        %v2427 = vshra.s32 %v2411, 16
        %v2428 = vshra.s32 %v2412, 16
        %v2429 = vshra.s32 %v2413, 16
        %v2430 = vshra.s32 %v2414, 16
        %v2431 = vxor.u32 %v2399, %v2415
        %v2432 = vxor.u32 %v2400, %v2416
        %v2433 = vxor.u32 %v2401, %v2417
        %v2434 = vxor.u32 %v2402, %v2418
        %v2435 = vxor.u32 %v2403, %v2419
        %v2436 = vxor.u32 %v2404, %v2420
        %v2437 = vxor.u32 %v2405, %v2421
        %v2438 = vxor.u32 %v2406, %v2422
        %v2439 = vxor.u32 %v2407, %v2423
        %v2440 = vxor.u32 %v2408, %v2424
        %v2441 = vxor.u32 %v2409, %v2425
        %v2442 = vxor.u32 %v2410, %v2426
        %v2443 = vxor.u32 %v2411, %v2427
        %v2444 = vxor.u32 %v2412, %v2428
        %v2445 = vxor.u32 %v2413, %v2429
        %v2446 = vxor.u32 %v2414, %v2430
        %v2447 = vmul.u32 %v2431, 739982445
        %v2448 = vmul.u32 %v2432, 739982445
        %v2449 = vmul.u32 %v2433, 739982445
        %v2450 = vmul.u32 %v2434, 739982445
        %v2451 = vmul.u32 %v2435, 739982445
        %v2452 = vmul.u32 %v2436, 739982445
        %v2453 = vmul.u32 %v2437, 739982445
        %v2454 = vmul.u32 %v2438, 739982445
        %v2455 = vmul.u32 %v2439, 739982445
        %v2456 = vmul.u32 %v2440, 739982445
        %v2457 = vmul.u32 %v2441, 739982445
        %v2458 = vmul.u32 %v2442, 739982445
        %v2459 = vmul.u32 %v2443, 739982445
        %v2460 = vmul.u32 %v2444, 739982445
        %v2461 = vmul.u32 %v2445, 739982445
        %v2462 = vmul.u32 %v2446, 739982445
        %v2463 = vshra.s32 %v2447, 13
        %v2464 = vshra.s32 %v2448, 13
        %v2465 = vshra.s32 %v2449, 13
        %v2466 = vshra.s32 %v2450, 13
        %v2467 = vshra.s32 %v2451, 13
        %v2468 = vshra.s32 %v2452, 13
        %v2469 = vshra.s32 %v2453, 13
        %v2470 = vshra.s32 %v2454, 13
        %v2471 = vshra.s32 %v2455, 13
        %v2472 = vshra.s32 %v2456, 13
        %v2473 = vshra.s32 %v2457, 13
        %v2474 = vshra.s32 %v2458, 13
        %v2475 = vshra.s32 %v2459, 13
        %v2476 = vshra.s32 %v2460, 13
        %v2477 = vshra.s32 %v2461, 13
        %v2478 = vshra.s32 %v2462, 13
        %v2479 = vxor.u32 %v2447, %v2463
        %v2480 = vxor.u32 %v2448, %v2464
        %v2481 = vxor.u32 %v2449, %v2465
        %v2482 = vxor.u32 %v2450, %v2466
        %v2483 = vxor.u32 %v2451, %v2467
        %v2484 = vxor.u32 %v2452, %v2468
        %v2485 = vxor.u32 %v2453, %v2469
        %v2486 = vxor.u32 %v2454, %v2470
        %v2487 = vxor.u32 %v2455, %v2471
        %v2488 = vxor.u32 %v2456, %v2472
        %v2489 = vxor.u32 %v2457, %v2473
        %v2490 = vxor.u32 %v2458, %v2474
        %v2491 = vxor.u32 %v2459, %v2475
        %v2492 = vxor.u32 %v2460, %v2476
        %v2493 = vxor.u32 %v2461, %v2477
        %v2494 = vxor.u32 %v2462, %v2478
        %v2495 = vmul.u32 %v2479, 695872825
        %v2496 = vmul.u32 %v2480, 695872825
        %v2497 = vmul.u32 %v2481, 695872825
        %v2498 = vmul.u32 %v2482, 695872825
        %v2499 = vmul.u32 %v2483, 695872825
        %v2500 = vmul.u32 %v2484, 695872825
        %v2501 = vmul.u32 %v2485, 695872825
        %v2502 = vmul.u32 %v2486, 695872825
        %v2503 = vmul.u32 %v2487, 695872825
        %v2504 = vmul.u32 %v2488, 695872825
        %v2505 = vmul.u32 %v2489, 695872825
        %v2506 = vmul.u32 %v2490, 695872825
        %v2507 = vmul.u32 %v2491, 695872825
        %v2508 = vmul.u32 %v2492, 695872825
        %v2509 = vmul.u32 %v2493, 695872825
        %v2510 = vmul.u32 %v2494, 695872825
        %v2511 = vshra.s32 %v2495, 16
        %v2512 = vshra.s32 %v2496, 16
        %v2513 = vshra.s32 %v2497, 16
        %v2514 = vshra.s32 %v2498, 16
        %v2515 = vshra.s32 %v2499, 16
        %v2516 = vshra.s32 %v2500, 16
        %v2517 = vshra.s32 %v2501, 16
        %v2518 = vshra.s32 %v2502, 16
        %v2519 = vshra.s32 %v2503, 16
        %v2520 = vshra.s32 %v2504, 16
        %v2521 = vshra.s32 %v2505, 16
        %v2522 = vshra.s32 %v2506, 16
        %v2523 = vshra.s32 %v2507, 16
        %v2524 = vshra.s32 %v2508, 16
        %v2525 = vshra.s32 %v2509, 16
        %v2526 = vshra.s32 %v2510, 16
        %v2527 = vxor.u32 %v2495, %v2511
        %v2528 = vxor.u32 %v2496, %v2512
        %v2529 = vxor.u32 %v2497, %v2513
        %v2530 = vxor.u32 %v2498, %v2514
        %v2531 = vxor.u32 %v2499, %v2515
        %v2532 = vxor.u32 %v2500, %v2516
        %v2533 = vxor.u32 %v2501, %v2517
        %v2534 = vxor.u32 %v2502, %v2518
        %v2535 = vxor.u32 %v2503, %v2519
        %v2536 = vxor.u32 %v2504, %v2520
        %v2537 = vxor.u32 %v2505, %v2521
        %v2538 = vxor.u32 %v2506, %v2522
        %v2539 = vxor.u32 %v2507, %v2523
        %v2540 = vxor.u32 %v2508, %v2524
        %v2541 = vxor.u32 %v2509, %v2525
        %v2542 = vxor.u32 %v2510, %v2526
        %v2543 = vand.u32 %v2527, 16777215
        %v2544 = vand.u32 %v2528, 16777215
        %v2545 = vand.u32 %v2529, 16777215
        %v2546 = vand.u32 %v2530, 16777215
        %v2547 = vand.u32 %v2531, 16777215
        %v2548 = vand.u32 %v2532, 16777215
        %v2549 = vand.u32 %v2533, 16777215
        %v2550 = vand.u32 %v2534, 16777215
        %v2551 = vand.u32 %v2535, 16777215
        %v2552 = vand.u32 %v2536, 16777215
        %v2553 = vand.u32 %v2537, 16777215
        %v2554 = vand.u32 %v2538, 16777215
        %v2555 = vand.u32 %v2539, 16777215
        %v2556 = vand.u32 %v2540, 16777215
        %v2557 = vand.u32 %v2541, 16777215
        %v2558 = vand.u32 %v2542, 16777215
        %vm2559 = vcmp.lt.s32.totalorder %v2543, 13421773
        %vm2560 = vcmp.lt.s32.totalorder %v2544, 13421773
        %vm2561 = vcmp.lt.s32.totalorder %v2545, 13421773
        %vm2562 = vcmp.lt.s32.totalorder %v2546, 13421773
        %vm2563 = vcmp.lt.s32.totalorder %v2547, 13421773
        %vm2564 = vcmp.lt.s32.totalorder %v2548, 13421773
        %vm2565 = vcmp.lt.s32.totalorder %v2549, 13421773
        %vm2566 = vcmp.lt.s32.totalorder %v2550, 13421773
        %vm2567 = vcmp.lt.s32.totalorder %v2551, 13421773
        %vm2568 = vcmp.lt.s32.totalorder %v2552, 13421773
        %vm2569 = vcmp.lt.s32.totalorder %v2553, 13421773
        %vm2570 = vcmp.lt.s32.totalorder %v2554, 13421773
        %vm2571 = vcmp.lt.s32.totalorder %v2555, 13421773
        %vm2572 = vcmp.lt.s32.totalorder %v2556, 13421773
        %vm2573 = vcmp.lt.s32.totalorder %v2557, 13421773
        %vm2574 = vcmp.lt.s32.totalorder %v2558, 13421773
        %v2575 = vmul.f32 %v2364, 1.25
        %v2576 = vmul.f32 %v2365, 1.25
        %v2577 = vmul.f32 %v2366, 1.25
        %v2578 = vmul.f32 %v2367, 1.25
        %v2579 = vmul.f32 %v2368, 1.25
        %v2580 = vmul.f32 %v2369, 1.25
        %v2581 = vmul.f32 %v2370, 1.25
        %v2582 = vmul.f32 %v2371, 1.25
        %v2583 = vmul.f32 %v2372, 1.25
        %v2584 = vmul.f32 %v2373, 1.25
        %v2585 = vmul.f32 %v2374, 1.25
        %v2586 = vmul.f32 %v2375, 1.25
        %v2587 = vmul.f32 %v2376, 1.25
        %v2588 = vmul.f32 %v2377, 1.25
        %v2589 = vmul.f32 %v2378, 1.25
        %v2590 = vmul.f32 %v2379, 1.25
        %v2591 = vsel %vm2559, %v2575, 0.0
        %v2592 = vsel %vm2560, %v2576, 0.0
        %v2593 = vsel %vm2561, %v2577, 0.0
        %v2594 = vsel %vm2562, %v2578, 0.0
        %v2595 = vsel %vm2563, %v2579, 0.0
        %v2596 = vsel %vm2564, %v2580, 0.0
        %v2597 = vsel %vm2565, %v2581, 0.0
        %v2598 = vsel %vm2566, %v2582, 0.0
        %v2599 = vsel %vm2567, %v2583, 0.0
        %v2600 = vsel %vm2568, %v2584, 0.0
        %v2601 = vsel %vm2569, %v2585, 0.0
        %v2602 = vsel %vm2570, %v2586, 0.0
        %v2603 = vsel %vm2571, %v2587, 0.0
        %v2604 = vsel %vm2572, %v2588, 0.0
        %v2605 = vsel %vm2573, %v2589, 0.0
        %v2606 = vsel %vm2574, %v2590, 0.0
        %v2607 = vpack.c.bf16 %v2592, %v2591
        %v2608 = vpack.c.bf16 %v2594, %v2593
        %v2609 = vpack.c.bf16 %v2596, %v2595
        %v2610 = vpack.c.bf16 %v2598, %v2597
        %v2611 = vpack.c.bf16 %v2600, %v2599
        %v2612 = vpack.c.bf16 %v2602, %v2601
        %v2613 = vpack.c.bf16 %v2604, %v2603
        %v2614 = vpack.c.bf16 %v2606, %v2605
        %v2615 = vld [vmem:[%s10] sm:$0xf]
        %v2616 = vld [vmem:[%s10 + $0x4] sm:$0xf]
        %v2617 = vld [vmem:[%s10 + $0x8] sm:$0xf]
        %v2618 = vld [vmem:[%s10 + $0xc] sm:$0xf]
        %v2619 = vld [vmem:[%s10 + $0x10] sm:$0xf]
        %v2620 = vld [vmem:[%s10 + $0x14] sm:$0xf]
        %v2621 = vld [vmem:[%s10 + $0x18] sm:$0xf]
        %v2622 = vld [vmem:[%s10 + $0x1c] sm:$0xf]
        %v2623 = vld [vmem:[%s10 + $0x20] sm:$0xf]
        %v2624 = vld [vmem:[%s10 + $0x24] sm:$0xf]
        %v2625 = vld [vmem:[%s10 + $0x28] sm:$0xf]
        %v2626 = vld [vmem:[%s10 + $0x2c] sm:$0xf]
        %v2627 = vld [vmem:[%s10 + $0x30] sm:$0xf]
        %v2628 = vld [vmem:[%s10 + $0x34] sm:$0xf]
        %v2629 = vld [vmem:[%s10 + $0x38] sm:$0xf]
        %v2630 = vld [vmem:[%s10 + $0x3c] sm:$0xf]
        %v2631 = vld [vmem:[%s11] sm:$0x1]
        %v2633 = vlaneseq
        %v2634 = vshrl.u32 %v2633, 7
        %v2635 = vsub.s32 0, %v2634
        %v2636 = vrot.slane %v2631, %v2635
        %v2654 = vunpack.c.l.b16 %v2615
        %v2655 = vunpack.c.l.b16 %v2616
        %v2656 = vunpack.c.l.b16 %v2617
        %v2657 = vunpack.c.l.b16 %v2618
        %v2658 = vunpack.c.l.b16 %v2619
        %v2659 = vunpack.c.l.b16 %v2620
        %v2660 = vunpack.c.l.b16 %v2621
        %v2661 = vunpack.c.l.b16 %v2622
        %v2662 = vunpack.c.l.b16 %v2623
        %v2663 = vunpack.c.l.b16 %v2624
        %v2664 = vunpack.c.l.b16 %v2625
        %v2665 = vunpack.c.l.b16 %v2626
        %v2666 = vunpack.c.l.b16 %v2627
        %v2667 = vunpack.c.l.b16 %v2628
        %v2668 = vunpack.c.l.b16 %v2629
        %v2669 = vunpack.c.l.b16 %v2630
        %v2670 = vpack.c.b16 %v2655, %v2654
        %v2671 = vpack.c.b16 %v2657, %v2656
        %v2672 = vpack.c.b16 %v2659, %v2658
        %v2673 = vpack.c.b16 %v2661, %v2660
        %v2674 = vpack.c.b16 %v2663, %v2662
        %v2675 = vpack.c.b16 %v2665, %v2664
        %v2676 = vpack.c.b16 %v2667, %v2666
        %v2677 = vpack.c.b16 %v2669, %v2668
        %2686 = vmatprep.subr.bf16.mxu0 0
        %2687 = vmatpush1.bf16.msra.mxu0 %v2677
        %2688 = vmatprep.subr.bf16.mxu0 0
        %2689 = vmatpush1.bf16.msra.mxu0 %v2676
        %2690 = vmatprep.subr.bf16.mxu0 0
        %2691 = vmatpush1.bf16.msra.mxu0 %v2675
        %2692 = vmatprep.subr.bf16.mxu0 0
        %2693 = vmatpush1.bf16.msra.mxu0 %v2674
        %2694 = vmatprep.subr.bf16.mxu0 0
        %2695 = vmatpush1.bf16.msra.mxu0 %v2673
        %2696 = vmatprep.subr.bf16.mxu0 0
        %2697 = vmatpush1.bf16.msra.mxu0 %v2672
        %2698 = vmatprep.subr.bf16.mxu0 0
        %2699 = vmatpush1.bf16.msra.mxu0 %v2671
        %2700 = vmatprep.subr.bf16.mxu0 0
        %2701 = vmatpush1.bf16.msra.mxu0 %v2670
        %2702 = vmatprep.subr.bf16.mxu0 0
        %2703 = vmatpush2.bf16.msra.mxu0 0
        %2704 = vmatprep.subr.bf16.mxu0 0
        %2705 = vmatpush2.bf16.msra.mxu0 0
        %2706 = vmatprep.subr.bf16.mxu0 0
        %2707 = vmatpush2.bf16.msra.mxu0 0
        %2708 = vmatprep.subr.bf16.mxu0 0
        %2709 = vmatpush2.bf16.msra.mxu0 0
        %2710 = vmatprep.subr.bf16.mxu0 0
        %2711 = vmatpush2.bf16.msra.mxu0 0
        %2712 = vmatprep.subr.bf16.mxu0 0
        %2713 = vmatpush2.bf16.msra.mxu0 0
        %2714 = vmatprep.subr.bf16.mxu0 0
        %2715 = vmatpush2.bf16.msra.mxu0 0
        %2716 = vmatprep.subr.bf16.mxu0 0
        %2717 = vmatpush2.bf16.msra.mxu0 0
        %2718 = vmatprep.mubr.bf16.mxu0 0
        %2719 = vmatmul.mubr.bf16.gmra.mxu0 %v2607
        %v2720 = vpop.f32.mrf.mxu0
        %v2721 = vadd.f32 %v2636, %v2720
        %v2722 = vpop.f32.mrf.mxu0
        %v2723 = vpop.f32.mrf.mxu0
        %v2724 = vadd.f32 %v2636, %v2723
        %v2725 = vpop.f32.mrf.mxu0
        %2726 = vmatprep.mubr.bf16.mxu0 0
        %2727 = vmatmul.mubr.bf16.gmra.mxu0 %v2608
        %v2728 = vpop.f32.mrf.mxu0
        %v2729 = vadd.f32 %v2636, %v2728
        %v2730 = vpop.f32.mrf.mxu0
        %v2731 = vpop.f32.mrf.mxu0
        %v2732 = vadd.f32 %v2636, %v2731
        %v2733 = vpop.f32.mrf.mxu0
        %2734 = vmatprep.mubr.bf16.mxu0 0
        %2735 = vmatmul.mubr.bf16.gmra.mxu0 %v2609
        %v2736 = vpop.f32.mrf.mxu0
        %v2737 = vadd.f32 %v2636, %v2736
        %v2738 = vpop.f32.mrf.mxu0
        %v2739 = vpop.f32.mrf.mxu0
        %v2740 = vadd.f32 %v2636, %v2739
        %v2741 = vpop.f32.mrf.mxu0
        %2742 = vmatprep.mubr.bf16.mxu0 0
        %2743 = vmatmul.mubr.bf16.gmra.mxu0 %v2610
        %v2744 = vpop.f32.mrf.mxu0
        %v2745 = vadd.f32 %v2636, %v2744
        %v2746 = vpop.f32.mrf.mxu0
        %v2747 = vpop.f32.mrf.mxu0
        %v2748 = vadd.f32 %v2636, %v2747
        %v2749 = vpop.f32.mrf.mxu0
        %2750 = vmatprep.mubr.bf16.mxu0 0
        %2751 = vmatmul.mubr.bf16.gmra.mxu0 %v2611
        %v2752 = vpop.f32.mrf.mxu0
        %v2753 = vadd.f32 %v2636, %v2752
        %v2754 = vpop.f32.mrf.mxu0
        %v2755 = vpop.f32.mrf.mxu0
        %v2756 = vadd.f32 %v2636, %v2755
        %v2757 = vpop.f32.mrf.mxu0
        %2758 = vmatprep.mubr.bf16.mxu0 0
        %2759 = vmatmul.mubr.bf16.gmra.mxu0 %v2612
        %v2760 = vpop.f32.mrf.mxu0
        %v2761 = vadd.f32 %v2636, %v2760
        %v2762 = vpop.f32.mrf.mxu0
        %v2763 = vpop.f32.mrf.mxu0
        %v2764 = vadd.f32 %v2636, %v2763
        %v2765 = vpop.f32.mrf.mxu0
        %2766 = vmatprep.mubr.bf16.mxu0 0
        %2767 = vmatmul.mubr.bf16.gmra.mxu0 %v2613
        %v2768 = vpop.f32.mrf.mxu0
        %v2769 = vadd.f32 %v2636, %v2768
        %v2770 = vpop.f32.mrf.mxu0
        %v2771 = vpop.f32.mrf.mxu0
        %v2772 = vadd.f32 %v2636, %v2771
        %v2773 = vpop.f32.mrf.mxu0
        %2774 = vmatprep.mubr.bf16.mxu0 0
        %2775 = vmatmul.mubr.bf16.gmra.mxu0 %v2614
        %v2776 = vpop.f32.mrf.mxu0
        %v2777 = vadd.f32 %v2636, %v2776
        %v2778 = vpop.f32.mrf.mxu0
        %v2779 = vpop.f32.mrf.mxu0
        %v2780 = vadd.f32 %v2636, %v2779
        %v2781 = vpop.f32.mrf.mxu0
        %2782 = vdwg.mxu0
        %2783 = vxpose.xlu0.b32.start [1/16] %v2721, 128
        %2784 = vxpose.xlu0.b32.cont [2/16] %v2724, 128
        %2785 = vxpose.xlu0.b32.cont [3/16] %v2729, 128
        %2786 = vxpose.xlu0.b32.cont [4/16] %v2732, 128
        %2787 = vxpose.xlu0.b32.cont [5/16] %v2737, 128
        %2788 = vxpose.xlu0.b32.cont [6/16] %v2740, 128
        %2789 = vxpose.xlu0.b32.cont [7/16] %v2745, 128
        %2790 = vxpose.xlu0.b32.cont [8/16] %v2748, 128
        %2791 = vxpose.xlu0.b32.cont [9/16] %v2753, 128
        %2792 = vxpose.xlu0.b32.cont [10/16] %v2756, 128
        %2793 = vxpose.xlu0.b32.cont [11/16] %v2761, 128
        %2794 = vxpose.xlu0.b32.cont [12/16] %v2764, 128
        %2795 = vxpose.xlu0.b32.cont [13/16] %v2769, 128
        %2796 = vxpose.xlu0.b32.cont [14/16] %v2772, 128
        %2797 = vxpose.xlu0.b32.cont [15/16] %v2777, 128
        %2798 = vxpose.xlu0.b32.end [16/16] %v2780, 128
        %v2799 = vpop.trf.xlu0
        %v2800 = vpop.trf.xlu0
        %v2801 = vpop.trf.xlu0
        %v2802 = vpop.trf.xlu0
        %v2803 = vpop.trf.xlu0
        %v2804 = vpop.trf.xlu0
        %v2805 = vpop.trf.xlu0
        %v2806 = vpop.trf.xlu0
        %v2807 = vpop.trf.xlu0
        %v2808 = vpop.trf.xlu0
        %v2809 = vpop.trf.xlu0
        %v2810 = vpop.trf.xlu0
        %v2811 = vpop.trf.xlu0
        %v2812 = vpop.trf.xlu0
        %v2813 = vpop.trf.xlu0
        %v2814 = vpop.trf.xlu0
        %v2815 = vand.u32 2147483647, %v2799
        %v2816 = vsub.f32 0.0, %v2815
        %v2817 = vmul.f32 %v2816, 1.442695
        %v2818 = vpow.pop %v2817
        %vm2819 = vcmp.ge.f32.partialorder %v2799, 0.0
        %v2820 = vadd.f32 %v2818, 1.0
        %v2821 = vrcp.pop %v2820
        %v2822 = vmul.f32 1.0, %v2821
        %v2823 = vmul.f32 %v2818, %v2821
        %v2824 = vsel %vm2819, %v2822, %v2823
        %2825 = vst [vmem:[%s381] sm:$0x1] %v2824
        %s2826 = sand.u32 %s271, 1
        %s2827 = scalar_lea.sflag [#allocation5], %s2826
        %s2828 = sand.u32 %s271, 1
        %s2829 = scalar_lea.vmem [#allocation4], %s2828
        // Predicated region
        $region65: #{tpu_custom_call.1} parent=63 // pred_check
          %p2830 = pneg %p281
        $region66: #{tpu_custom_call.1} parent=63 // pred_check_branch
          %2832 = sbr.rel (%p2830) target = $region68
        $region67: #{tpu_custom_call.1} parent=63 // pred_region
          %s2834 = ssub.s32 16, 16
          %2835 = vsyncadd %s2827, %s2834
          %s2836 = smul.addr %s27, 16
          %s2837 = scalar_lea.hbm %s12, %s2836
          %s2839 = sshll.u32 %s2829, 4
          %s2840 = int_to_ptr.vmem [resolvable:$true] %s2839
          %2842 = dma.vmem_to_hbm [thread:$0]  %s2840, 16, %s2837, %s2827
        $region68: #{tpu_custom_call.1} parent=63 // pred_fallthru
          _
      $region64: #{tpu_custom_call.1} parent=5 // pred_fallthru
        _
      %p2843 = scmp.le.s32.totalorder 2, %s22
      // Predicated region
      $region69: #{tpu_custom_call.1} parent=5 // pred_check
        %p2844 = pneg %p2843
      $region70: #{tpu_custom_call.1} parent=5 // pred_check_branch
        %2846 = sbr.rel (%p2844) target = $region72
      $region71: #{tpu_custom_call.1} parent=5 // pred_region
        %s2847 = ssub.s32 %s22, 2
        // Predicated region
        $region73: #{tpu_custom_call.1} parent=71 // pred_check
          %p2848 = pneg %p287
        $region74: #{tpu_custom_call.1} parent=71 // pred_check_branch
          %2850 = sbr.rel (%p2848) target = $region76
        $region75: #{tpu_custom_call.1} parent=71 // pred_region
          %s2851 = sand.u32 %s272, 1
          %s2852 = scalar_lea.sflag [#allocation5], %s2851
          %s2853 = sand.u32 %s272, 1
          %s2854 = scalar_lea.vmem [#allocation4], %s2853
          %2855 = dma.done %s2852, 16
        $region76: #{tpu_custom_call.1} parent=71 // pred_fallthru
          _
      $region72: #{tpu_custom_call.1} parent=5 // pred_fallthru
        _
    $region6: #{tpu_custom_call.1} parent=1 // loop_footer
      %s26 = sadd.s32 1, %s22
    $region7: #{tpu_custom_call.1} parent=1 // loop_footer_branch
      %21 = sbr.rel target = $region3
    $region8: #{tpu_custom_call.1} parent=1 // loop_exit
      _
    %2856 = vsyncpa [#allocation5], 1
    %s2857 = scalar_lea.sflag [#allocation5], 1
    %2858 = vsyncpa %s2857, 1

</llo_original>
